<compile_context>
chip_gen: v5e
topology: v5e:2x2
jax: 0.10.0
libtpu: 0.0.40
codegen_flags: <defaults>
</compile_context>

<pallas_src>
import functools
import math

import jax
import jax.numpy as jnp
from jax.experimental import pallas as pl
from jax.experimental.pallas import tpu as pltpu


# ----------------------------------------------------------------------------
# Fused whole-network kernel (one grid step == one batch element)
# ----------------------------------------------------------------------------
def _gwnet_kernel(x_ref, atb_ref,
                  start_w_ref, start_b_ref,
                  fg_w_ref, fg_b_ref,
                  gs_w_ref, gs_b_ref,
                  skipL_w_ref, skipL_b_ref,
                  bn_sc_ref, bn_sh_ref,
                  end1_w_ref, end1_b_ref,
                  end2_w_ref, end2_b_ref,
                  out_ref,
                  *, dilations, V, D, R, out_rows):
    """Rows are (time, node) flattened for one batch element; lanes = channels.

    Only rows whose absolute time index is inside the valid receptive-field
    window carry meaningful data; invalid rows hold finite junk that never
    mixes into valid rows (temporal taps only look back, node mixing stays
    within one time step) and only the final `out_rows` rows are written out.
    """
    f32 = jnp.float32
    bf16 = jnp.bfloat16
    M = x_ref.shape[0]
    T = M // V
    L = len(dilations)
    tail = M - out_rows

    def mm(a, b):
        return jnp.dot(a, b, preferred_element_type=f32)

    # start_conv: 1x1 conv over channels (bf16 MXU matmul, f32 accumulate).
    x = mm(x_ref[...], start_w_ref[...]) + start_b_ref[...]          # (M, R) f32

    atb = atb_ref[...]                                               # (T, V, V) bf16

    skip = None
    for i, d in enumerate(dilations):
        residual = x
        x_b = x.astype(bf16)

        # Fused gated TCN: one (M, R)@(R, 4D) matmul yields both taps of both
        # the filter and the gate conv: columns [f_tap0 | g_tap0 | f_tap1 |
        # g_tap1].  Tap-0 applies at absolute time (tau - d): shift its
        # columns down by d*V rows with a single roll (jnp.roll semantics:
        # result[r] = y[r - shift]); wrapped-in rows are never-read junk.
        y = mm(x_b, fg_w_ref[i])                                     # (M, 4D) f32
        shift = d * V
        y0 = pltpu.roll(y[:, :2 * D], shift, axis=0)
        pre = y0 + y[:, 2 * D:] + fg_b_ref[i]                        # (M, 2D) f32
        xg = jnp.tanh(pre[:, :D]) * jax.nn.sigmoid(pre[:, D:])       # (M, D) f32
        xg_b = xg.astype(bf16)

        if i == L - 1:
            # Last layer: only the skip conv on the final time window is used
            # (matches skip = s + skip[..., -s.size(3):] in the reference).
            s = mm(xg_b[tail:, :], skipL_w_ref[...]) + skipL_b_ref[...]
            skip = s if skip is None else skip + s
            break

        # GraphConvNet hops: per-time-step (V, V) contractions against the
        # shared adjacency transpose (batched matmul, no (M, M) block-diag
        # mixer); hop2 reuses hop1.  The 3-hop 1x1 conv and the skip conv
        # share input xg -> fused into a single (M, 3D)@(3D, R+S) matmul.
        xg3 = xg_b.reshape(T, V, D)
        hop1 = jnp.einsum('tuv,tvd->tud', atb, xg3,
                          preferred_element_type=f32).astype(bf16)
        hop2 = jnp.einsum('tuv,tvd->tud', atb, hop1,
                          preferred_element_type=f32).astype(bf16)
        cat = jnp.concatenate(
            [xg_b, hop1.reshape(M, D), hop2.reshape(M, D)], axis=1)  # (M, 3D)
        gs = mm(cat, gs_w_ref[i]) + gs_b_ref[i]                      # (M, R+S) f32
        s = gs[tail:, R:]                                            # skip slice
        skip = s if skip is None else skip + s
        # Residual add + eval-mode BatchNorm (folded scale/shift) epilogue.
        x = (gs[:, :R] + residual) * bn_sc_ref[i] + bn_sh_ref[i]

    # Output head on the final time window: relu -> 1x1 -> relu -> 1x1.
    h = jnp.maximum(skip, 0.0).astype(bf16)
    h = jnp.maximum(mm(h, end1_w_ref[...]) + end1_b_ref[...], 0.0).astype(bf16)
    h = mm(h, end2_w_ref[...]) + end2_b_ref[...]
    out_ref[...] = h.astype(out_ref.dtype)


# ----------------------------------------------------------------------------
# Forward wrapper (layout prep + single batch-parallel pallas_call)
# ----------------------------------------------------------------------------
def gwnet_forward(params, x_btvc, cfg):
    B, T, V, Cin = x_btvc.shape
    rf = cfg["receptive_field"]
    blocks, layers, stride = cfg["blocks"], cfg["layers"], cfg["stride"]
    P_out = cfg["output_len"]
    R = cfg["residual_channels"]
    D = cfg["dilation_channels"]

    dilations = []
    for _ in range(blocks):
        d = 1
        for _ in range(layers):
            dilations.append(d)
            d *= stride

    f32, bf16 = jnp.float32, jnp.bfloat16

    # Activations: per-batch rows = (time, node), lanes = channels; left-pad
    # time to the receptive field (matches F.pad in the reference).
    x = x_btvc.astype(f32)
    if T < rf:
        x = jnp.pad(x, ((0, 0), (rf - T, 0), (0, 0), (0, 0)))
    T_buf = max(T, rf)
    cin_p = max(8, -(-Cin // 8) * 8)
    if Cin < cin_p:
        x = jnp.pad(x, ((0, 0), (0, 0), (0, 0), (0, cin_p - Cin)))
    M_b = T_buf * V
    x_rows = x.reshape(B, M_b, cin_p).astype(bf16)

    T_final = T_buf - (rf - 1)
    out_rows = T_final * V
    P_pad = -(-P_out // 128) * 128        # lane-dense final store

    # Adaptive adjacency softmax(relu(n1 @ n2)) is tiny -> plain JAX; pass its
    # transpose broadcast per time step for the in-kernel batched contraction.
    adp = jax.nn.softmax(
        jnp.maximum(params["nodevec1"] @ params["nodevec2"], 0.0), axis=1)
    atb = jnp.broadcast_to(adp.T[None], (T_buf, V, V)).astype(bf16)

    # Weights: bf16 for MXU operands, f32 biases / BN terms.
    start_w = params["start_w"]
    if Cin < cin_p:
        start_w = jnp.pad(start_w, ((0, cin_p - Cin), (0, 0)))
    start_w = start_w.astype(bf16)
    fg_w = params["fg_w"].astype(bf16)
    gs_w = params["gs_w"].astype(bf16)
    skipL_w = params["skipL_w"].astype(bf16)
    end1_w = params["end1_w"].astype(bf16)
    end2_w = jnp.pad(params["end2_w"], ((0, 0), (0, P_pad - P_out))).astype(bf16)
    end2_b = jnp.pad(params["end2_b"], ((0, 0), (0, P_pad - P_out)))

    kernel = functools.partial(
        _gwnet_kernel, dilations=tuple(dilations),
        V=V, D=D, R=R, out_rows=out_rows)

    def full(shape):
        return pl.BlockSpec(shape, lambda b: (0,) * len(shape))

    y = pl.pallas_call(
        kernel,
        out_shape=jax.ShapeDtypeStruct((B, out_rows, P_pad), f32),
        grid=(B,),
        in_specs=[
            pl.BlockSpec((None, M_b, cin_p), lambda b: (b, 0, 0)),
            full(atb.shape),
            full(start_w.shape), full(params["start_b"].shape),
            full(fg_w.shape), full(params["fg_b"].shape),
            full(gs_w.shape), full(params["gs_b"].shape),
            full(skipL_w.shape), full(params["skipL_b"].shape),
            full(params["bn_scale"].shape), full(params["bn_shift"].shape),
            full(end1_w.shape), full(params["end1_b"].shape),
            full(end2_w.shape), full(end2_b.shape),
        ],
        out_specs=pl.BlockSpec((None, out_rows, P_pad), lambda b: (b, 0, 0)),
        compiler_params=pltpu.CompilerParams(
            dimension_semantics=("parallel",),
            vmem_limit_bytes=32 * 1024 * 1024),
    )(x_rows, atb,
      start_w, params["start_b"],
      fg_w, params["fg_b"],
      gs_w, params["gs_b"],
      skipL_w, params["skipL_b"],
      params["bn_scale"], params["bn_shift"],
      end1_w, params["end1_b"],
      end2_w, end2_b)

    # rows are (time, node) per batch -> (B, output_len, V[, T_final]).
    y = y.reshape(B, T_final, V, P_pad)[..., :P_out]
    y = jnp.transpose(y, (0, 3, 2, 1))
    if T_final == 1:
        y = y[..., 0]                                    # squeeze(dim=-1)
    return y


# ----------------------------------------------------------------------------
# Parameter init (deterministic, synthetic; PyTorch weight layouts pre-fused)
# ----------------------------------------------------------------------------
def init_params(key, cfg):
    ks = iter(jax.random.split(key, 64))

    def nrm(shape, fan_in):
        return jax.random.normal(next(ks), shape, jnp.float32) / math.sqrt(fan_in)

    def small(shape):
        return 0.01 * jax.random.normal(next(ks), shape, jnp.float32)

    Cin = cfg["in_dim"]
    R = cfg["residual_channels"]
    D = cfg["dilation_channels"]
    S = cfg["skip_channels"]
    E = cfg["end_channels"]
    V = cfg["num_flows"]
    apt = cfg["apt_size"]
    L = cfg["blocks"] * cfg["layers"]
    order, supports_len = 2, 1            # adaptive adjacency only
    gc_in = (order * supports_len + 1) * D

    p = {}
    p["nodevec1"] = jax.random.normal(next(ks), (V, apt), jnp.float32)
    p["nodevec2"] = jax.random.normal(next(ks), (apt, V), jnp.float32)

    # start_conv: Conv2d(Cin, R, 1x1) -> stored transposed (Cin, R).
    p["start_w"] = nrm((Cin, R), Cin)
    p["start_b"] = small((1, R))

    fg_ws, fg_bs, gs_ws, gs_bs, bscs, bshs = ([] for _ in range(6))
    for li in range(L):
        wf = nrm((D, R, 1, 2), R * 2)          # Conv2d(R, D, (1,2)) weight
        fb = small((1, D))
        wg = nrm((D, R, 2), R * 2)             # Conv1d(R, D, 2) weight
        gb = small((1, D))
        # Fused filter+gate: columns [f_tap0 | g_tap0 | f_tap1 | g_tap1].
        fg_ws.append(jnp.concatenate(
            [wf[:, :, 0, 0].T, wg[:, :, 0].T, wf[:, :, 0, 1].T, wg[:, :, 1].T],
            axis=1))
        fg_bs.append(jnp.concatenate([fb, gb], axis=1))

        ws = nrm((S, D, 1), D)                 # skip Conv1d(D, S, 1)
        sb = small((1, S))
        if li == L - 1:
            p["skipL_w"] = ws[:, :, 0].T
            p["skipL_b"] = sb
        else:
            wc = nrm((R, gc_in, 1, 1), gc_in)  # GraphConvNet final_conv
            cb = small((1, R))
            # Fused gconv+skip weight: (3D, R+S); skip only reads the xg rows.
            right = jnp.concatenate(
                [ws[:, :, 0].T, jnp.zeros((2 * D, S), jnp.float32)], axis=0)
            gs_ws.append(jnp.concatenate([wc[:, :, 0, 0].T, right], axis=1))
            gs_bs.append(jnp.concatenate([cb, sb], axis=1))
            # BatchNorm2d(R) eval mode, default init -> folded scale/shift.
            bscs.append(jnp.full((1, R), 1.0 / math.sqrt(1.0 + 1e-5), jnp.float32))
            bshs.append(jnp.zeros((1, R), jnp.float32))

    p["fg_w"] = jnp.stack(fg_ws)          # (L, R, 4D)
    p["fg_b"] = jnp.stack(fg_bs)          # (L, 1, 2D)
    p["gs_w"] = jnp.stack(gs_ws)          # (L-1, 3D, R+S)
    p["gs_b"] = jnp.stack(gs_bs)          # (L-1, 1, R+S)
    p["bn_scale"] = jnp.stack(bscs)       # (L-1, 1, R)
    p["bn_shift"] = jnp.stack(bshs)       # (L-1, 1, R)

    w1 = nrm((E, S, 1, 1), S)              # end_conv_1
    p["end1_w"] = w1[:, :, 0, 0].T
    p["end1_b"] = small((1, E))
    w2 = nrm((cfg["output_len"], E, 1, 1), E)  # end_conv_2
    p["end2_w"] = w2[:, :, 0, 0].T
    p["end2_b"] = small((1, cfg["output_len"]))
    return p


def receptive_field(blocks, layers, kernel_size, stride):
    rf = 1
    for _ in range(blocks):
        add = kernel_size - 1
        for _ in range(layers):
            rf += add
            add *= stride
    return rf


if __name__ == "__main__":
    cfg = dict(
        num_flows=16,          # V (graph nodes / monitored flows)
        in_dim=2,              # input features
        residual_channels=32,
        dilation_channels=32,
        skip_channels=64,
        end_channels=128,
        output_len=4,
        blocks=2,
        layers=2,
        kernel_size=2,
        stride=2,
        apt_size=8,
    )
    cfg["receptive_field"] = receptive_field(
        cfg["blocks"], cfg["layers"], cfg["kernel_size"], cfg["stride"])  # = 7

    key = jax.random.PRNGKey(0)
    kp, kx = jax.random.split(key)
    params = init_params(kp, cfg)

    B, T, V, Cin = 2, cfg["receptive_field"], cfg["num_flows"], cfg["in_dim"]
    x = jax.random.normal(kx, (B, T, V, Cin), jnp.float32)

    fwd = jax.jit(functools.partial(gwnet_forward, cfg=cfg))
    out = jax.block_until_ready(fwd(params, x))
    assert out.shape == (B, cfg["output_len"], V), out.shape
    assert bool(jnp.all(jnp.isfinite(out)))
    print("KERNEL_OK")
</pallas_src>

<mosaic_0001>
module attributes {stable_mosaic.version = 11 : i64} {
  func.func @_gwnet_kernel(%arg0: i32, %arg1: memref<1x112x8xbf16, #tpu.memory_space<vmem>>, %arg2: memref<7x16x16xbf16, #tpu.memory_space<vmem>>, %arg3: memref<8x32xbf16, #tpu.memory_space<vmem>>, %arg4: memref<1x32xf32, #tpu.memory_space<vmem>>, %arg5: memref<4x32x128xbf16, #tpu.memory_space<vmem>>, %arg6: memref<4x1x64xf32, #tpu.memory_space<vmem>>, %arg7: memref<3x96x96xbf16, #tpu.memory_space<vmem>>, %arg8: memref<3x1x96xf32, #tpu.memory_space<vmem>>, %arg9: memref<32x64xbf16, #tpu.memory_space<vmem>>, %arg10: memref<1x64xf32, #tpu.memory_space<vmem>>, %arg11: memref<3x1x32xf32, #tpu.memory_space<vmem>>, %arg12: memref<3x1x32xf32, #tpu.memory_space<vmem>>, %arg13: memref<64x128xbf16, #tpu.memory_space<vmem>>, %arg14: memref<1x128xf32, #tpu.memory_space<vmem>>, %arg15: memref<128x128xbf16, #tpu.memory_space<vmem>>, %arg16: memref<1x128xf32, #tpu.memory_space<vmem>>, %arg17: memref<1x16x128xf32, #tpu.memory_space<vmem>>) attributes {dimension_semantics = [#tpu.dimension_semantics<parallel>], iteration_bounds = array<i64: 2>, scalar_prefetch = 0 : i64, scratch_operands = 0 : i64, tpu.core_type = #tpu.core_type<tc>, window_params = [{transform_indices = @transform_0, window_bounds = array<i64: 1, 112, 8>}, {pipeline_mode = #tpu.pipeline_mode<synchronous>, transform_indices = @transform_1, window_bounds = array<i64: 7, 16, 16>}, {pipeline_mode = #tpu.pipeline_mode<synchronous>, transform_indices = @transform_2, window_bounds = array<i64: 8, 32>}, {pipeline_mode = #tpu.pipeline_mode<synchronous>, transform_indices = @transform_3, window_bounds = array<i64: 1, 32>}, {pipeline_mode = #tpu.pipeline_mode<synchronous>, transform_indices = @transform_4, window_bounds = array<i64: 4, 32, 128>}, {pipeline_mode = #tpu.pipeline_mode<synchronous>, transform_indices = @transform_5, window_bounds = array<i64: 4, 1, 64>}, {pipeline_mode = #tpu.pipeline_mode<synchronous>, transform_indices = @transform_6, window_bounds = array<i64: 3, 96, 96>}, {pipeline_mode = #tpu.pipeline_mode<synchronous>, transform_indices = @transform_7, window_bounds = array<i64: 3, 1, 96>}, {pipeline_mode = #tpu.pipeline_mode<synchronous>, transform_indices = @transform_8, window_bounds = array<i64: 32, 64>}, {pipeline_mode = #tpu.pipeline_mode<synchronous>, transform_indices = @transform_9, window_bounds = array<i64: 1, 64>}, {pipeline_mode = #tpu.pipeline_mode<synchronous>, transform_indices = @transform_10, window_bounds = array<i64: 3, 1, 32>}, {pipeline_mode = #tpu.pipeline_mode<synchronous>, transform_indices = @transform_11, window_bounds = array<i64: 3, 1, 32>}, {pipeline_mode = #tpu.pipeline_mode<synchronous>, transform_indices = @transform_12, window_bounds = array<i64: 64, 128>}, {pipeline_mode = #tpu.pipeline_mode<synchronous>, transform_indices = @transform_13, window_bounds = array<i64: 1, 128>}, {pipeline_mode = #tpu.pipeline_mode<synchronous>, transform_indices = @transform_14, window_bounds = array<i64: 128, 128>}, {pipeline_mode = #tpu.pipeline_mode<synchronous>, transform_indices = @transform_15, window_bounds = array<i64: 1, 128>}, {transform_indices = @transform_16, window_bounds = array<i64: 1, 16, 128>}]} {
    %c0 = arith.constant 0 : index
    %c0_0 = arith.constant 0 : index
    %c0_1 = arith.constant 0 : index
    %0 = vector.load %arg1[%c0, %c0_0, %c0_1] : memref<1x112x8xbf16, #tpu.memory_space<vmem>>, vector<1x112x8xbf16>
    %1 = vector.shape_cast %0 : vector<1x112x8xbf16> to vector<112x8xbf16>
    %c0_2 = arith.constant 0 : index
    %c0_3 = arith.constant 0 : index
    %2 = vector.load %arg3[%c0_2, %c0_3] : memref<8x32xbf16, #tpu.memory_space<vmem>>, vector<8x32xbf16>
    %cst = arith.constant dense<0.000000e+00> : vector<112x32xf32>
    %3 = tpu.matmul %1, %2, %cst {dimension_numbers = #tpu.dot_dimension_numbers<[1], [0], [0], [1], [0, 0, 1, 1], [], []>} : vector<112x8xbf16>, vector<8x32xbf16>, vector<112x32xf32> -> vector<112x32xf32>
    %c0_4 = arith.constant 0 : index
    %c0_5 = arith.constant 0 : index
    %4 = vector.load %arg4[%c0_4, %c0_5] : memref<1x32xf32, #tpu.memory_space<vmem>>, vector<1x32xf32>
    %5 = vector.broadcast %4 : vector<1x32xf32> to vector<112x32xf32>
    %6 = arith.addf %3, %5 : vector<112x32xf32>
    %c0_6 = arith.constant 0 : index
    %c0_7 = arith.constant 0 : index
    %c0_8 = arith.constant 0 : index
    %7 = vector.load %arg2[%c0_6, %c0_7, %c0_8] : memref<7x16x16xbf16, #tpu.memory_space<vmem>>, vector<7x16x16xbf16>
    %8 = arith.truncf %6 : vector<112x32xf32> to vector<112x32xbf16>
    %c0_9 = arith.constant 0 : index
    %c0_10 = arith.constant 0 : index
    %c0_11 = arith.constant 0 : index
    %9 = vector.load %arg5[%c0_9, %c0_10, %c0_11] : memref<4x32x128xbf16, #tpu.memory_space<vmem>>, vector<1x32x128xbf16>
    %10 = vector.shape_cast %9 : vector<1x32x128xbf16> to vector<32x128xbf16>
    %cst_12 = arith.constant dense<0.000000e+00> : vector<112x128xf32>
    %11 = tpu.matmul %8, %10, %cst_12 {dimension_numbers = #tpu.dot_dimension_numbers<[1], [0], [0], [1], [0, 0, 1, 1], [], []>} : vector<112x32xbf16>, vector<32x128xbf16>, vector<112x128xf32> -> vector<112x128xf32>
    %12 = vector.extract_strided_slice %11 {offsets = [0, 0], sizes = [112, 64], strides = [1, 1]} : vector<112x128xf32> to vector<112x64xf32>
    %c16_i32 = arith.constant 16 : i32
    %13 = tpu.dynamic_rotate %12 by %c16_i32 dim 0 : vector<112x64xf32>, i32 -> vector<112x64xf32>
    %14 = vector.extract_strided_slice %11 {offsets = [0, 64], sizes = [112, 64], strides = [1, 1]} : vector<112x128xf32> to vector<112x64xf32>
    %15 = arith.addf %13, %14 : vector<112x64xf32>
    %c0_13 = arith.constant 0 : index
    %c0_14 = arith.constant 0 : index
    %c0_15 = arith.constant 0 : index
    %16 = vector.load %arg6[%c0_13, %c0_14, %c0_15] : memref<4x1x64xf32, #tpu.memory_space<vmem>>, vector<1x1x64xf32>
    %17 = vector.shape_cast %16 : vector<1x1x64xf32> to vector<1x64xf32>
    %18 = vector.broadcast %17 : vector<1x64xf32> to vector<112x64xf32>
    %19 = arith.addf %15, %18 : vector<112x64xf32>
    %20 = vector.extract_strided_slice %19 {offsets = [0, 0], sizes = [112, 32], strides = [1, 1]} : vector<112x64xf32> to vector<112x32xf32>
    %21 = math.tanh %20 : vector<112x32xf32>
    %22 = vector.extract_strided_slice %19 {offsets = [0, 32], sizes = [112, 32], strides = [1, 1]} : vector<112x64xf32> to vector<112x32xf32>
    %23 = arith.negf %22 : vector<112x32xf32>
    %24 = math.exp %23 : vector<112x32xf32>
    %cst_16 = arith.constant 1.000000e+00 : f32
    %25 = vector.broadcast %cst_16 : f32 to vector<112x32xf32>
    %26 = arith.addf %25, %24 : vector<112x32xf32>
    %27 = arith.divf %25, %26 : vector<112x32xf32>
    %28 = arith.mulf %21, %27 : vector<112x32xf32>
    %29 = arith.truncf %28 : vector<112x32xf32> to vector<112x32xbf16>
    %30 = vector.shape_cast %29 : vector<112x32xbf16> to vector<7x16x32xbf16>
    "tpu.trace_start"() <{level = 10 : i32, message = "tuv,tvd->tud"}> : () -> ()
    %cst_17 = arith.constant dense<0.000000e+00> : vector<7x16x32xf32>
    %31 = tpu.matmul %7, %30, %cst_17 {dimension_numbers = #tpu.dot_dimension_numbers<[2], [1], [1], [2], [0, 0, 0, 1, 1, 2], [0], [0]>} : vector<7x16x16xbf16>, vector<7x16x32xbf16>, vector<7x16x32xf32> -> vector<7x16x32xf32>
    "tpu.trace_stop"() : () -> ()
    %32 = arith.truncf %31 : vector<7x16x32xf32> to vector<7x16x32xbf16>
    "tpu.trace_start"() <{level = 10 : i32, message = "tuv,tvd->tud"}> : () -> ()
    %cst_18 = arith.constant dense<0.000000e+00> : vector<7x16x32xf32>
    %33 = tpu.matmul %7, %32, %cst_18 {dimension_numbers = #tpu.dot_dimension_numbers<[2], [1], [1], [2], [0, 0, 0, 1, 1, 2], [0], [0]>} : vector<7x16x16xbf16>, vector<7x16x32xbf16>, vector<7x16x32xf32> -> vector<7x16x32xf32>
    "tpu.trace_stop"() : () -> ()
    %34 = arith.truncf %33 : vector<7x16x32xf32> to vector<7x16x32xbf16>
    %35 = vector.shape_cast %32 : vector<7x16x32xbf16> to vector<112x32xbf16>
    %36 = vector.shape_cast %34 : vector<7x16x32xbf16> to vector<112x32xbf16>
    %37 = tpu.concatenate %29, %35, %36 in 1 : vector<112x32xbf16>, vector<112x32xbf16>, vector<112x32xbf16> -> vector<112x96xbf16>
    %c0_19 = arith.constant 0 : index
    %c0_20 = arith.constant 0 : index
    %c0_21 = arith.constant 0 : index
    %38 = vector.load %arg7[%c0_19, %c0_20, %c0_21] : memref<3x96x96xbf16, #tpu.memory_space<vmem>>, vector<1x96x96xbf16>
    %39 = vector.shape_cast %38 : vector<1x96x96xbf16> to vector<96x96xbf16>
    %cst_22 = arith.constant dense<0.000000e+00> : vector<112x96xf32>
    %40 = tpu.matmul %37, %39, %cst_22 {dimension_numbers = #tpu.dot_dimension_numbers<[1], [0], [0], [1], [0, 0, 1, 1], [], []>} : vector<112x96xbf16>, vector<96x96xbf16>, vector<112x96xf32> -> vector<112x96xf32>
    %c0_23 = arith.constant 0 : index
    %c0_24 = arith.constant 0 : index
    %c0_25 = arith.constant 0 : index
    %41 = vector.load %arg8[%c0_23, %c0_24, %c0_25] : memref<3x1x96xf32, #tpu.memory_space<vmem>>, vector<1x1x96xf32>
    %42 = vector.shape_cast %41 : vector<1x1x96xf32> to vector<1x96xf32>
    %43 = vector.broadcast %42 : vector<1x96xf32> to vector<112x96xf32>
    %44 = arith.addf %40, %43 : vector<112x96xf32>
    %45 = vector.extract_strided_slice %44 {offsets = [96, 32], sizes = [16, 64], strides = [1, 1]} : vector<112x96xf32> to vector<16x64xf32>
    %46 = vector.extract_strided_slice %44 {offsets = [0, 0], sizes = [112, 32], strides = [1, 1]} : vector<112x96xf32> to vector<112x32xf32>
    %47 = arith.addf %46, %6 : vector<112x32xf32>
    %c0_26 = arith.constant 0 : index
    %c0_27 = arith.constant 0 : index
    %c0_28 = arith.constant 0 : index
    %48 = vector.load %arg11[%c0_26, %c0_27, %c0_28] : memref<3x1x32xf32, #tpu.memory_space<vmem>>, vector<1x1x32xf32>
    %49 = vector.shape_cast %48 : vector<1x1x32xf32> to vector<1x32xf32>
    %50 = vector.broadcast %49 : vector<1x32xf32> to vector<112x32xf32>
    %51 = arith.mulf %47, %50 : vector<112x32xf32>
    %c0_29 = arith.constant 0 : index
    %c0_30 = arith.constant 0 : index
    %c0_31 = arith.constant 0 : index
    %52 = vector.load %arg12[%c0_29, %c0_30, %c0_31] : memref<3x1x32xf32, #tpu.memory_space<vmem>>, vector<1x1x32xf32>
    %53 = vector.shape_cast %52 : vector<1x1x32xf32> to vector<1x32xf32>
    %54 = vector.broadcast %53 : vector<1x32xf32> to vector<112x32xf32>
    %55 = arith.addf %51, %54 : vector<112x32xf32>
    %56 = arith.truncf %55 : vector<112x32xf32> to vector<112x32xbf16>
    %c1 = arith.constant 1 : index
    %c0_32 = arith.constant 0 : index
    %c0_33 = arith.constant 0 : index
    %57 = vector.load %arg5[%c1, %c0_32, %c0_33] : memref<4x32x128xbf16, #tpu.memory_space<vmem>>, vector<1x32x128xbf16>
    %58 = vector.shape_cast %57 : vector<1x32x128xbf16> to vector<32x128xbf16>
    %cst_34 = arith.constant dense<0.000000e+00> : vector<112x128xf32>
    %59 = tpu.matmul %56, %58, %cst_34 {dimension_numbers = #tpu.dot_dimension_numbers<[1], [0], [0], [1], [0, 0, 1, 1], [], []>} : vector<112x32xbf16>, vector<32x128xbf16>, vector<112x128xf32> -> vector<112x128xf32>
    %60 = vector.extract_strided_slice %59 {offsets = [0, 0], sizes = [112, 64], strides = [1, 1]} : vector<112x128xf32> to vector<112x64xf32>
    %c32_i32 = arith.constant 32 : i32
    %61 = tpu.dynamic_rotate %60 by %c32_i32 dim 0 : vector<112x64xf32>, i32 -> vector<112x64xf32>
    %62 = vector.extract_strided_slice %59 {offsets = [0, 64], sizes = [112, 64], strides = [1, 1]} : vector<112x128xf32> to vector<112x64xf32>
    %63 = arith.addf %61, %62 : vector<112x64xf32>
    %c1_35 = arith.constant 1 : index
    %c0_36 = arith.constant 0 : index
    %c0_37 = arith.constant 0 : index
    %64 = vector.load %arg6[%c1_35, %c0_36, %c0_37] : memref<4x1x64xf32, #tpu.memory_space<vmem>>, vector<1x1x64xf32>
    %65 = vector.shape_cast %64 : vector<1x1x64xf32> to vector<1x64xf32>
    %66 = vector.broadcast %65 : vector<1x64xf32> to vector<112x64xf32>
    %67 = arith.addf %63, %66 : vector<112x64xf32>
    %68 = vector.extract_strided_slice %67 {offsets = [0, 0], sizes = [112, 32], strides = [1, 1]} : vector<112x64xf32> to vector<112x32xf32>
    %69 = math.tanh %68 : vector<112x32xf32>
    %70 = vector.extract_strided_slice %67 {offsets = [0, 32], sizes = [112, 32], strides = [1, 1]} : vector<112x64xf32> to vector<112x32xf32>
    %71 = arith.negf %70 : vector<112x32xf32>
    %72 = math.exp %71 : vector<112x32xf32>
    %cst_38 = arith.constant 1.000000e+00 : f32
    %73 = vector.broadcast %cst_38 : f32 to vector<112x32xf32>
    %74 = arith.addf %73, %72 : vector<112x32xf32>
    %75 = arith.divf %73, %74 : vector<112x32xf32>
    %76 = arith.mulf %69, %75 : vector<112x32xf32>
    %77 = arith.truncf %76 : vector<112x32xf32> to vector<112x32xbf16>
    %78 = vector.shape_cast %77 : vector<112x32xbf16> to vector<7x16x32xbf16>
    "tpu.trace_start"() <{level = 10 : i32, message = "tuv,tvd->tud"}> : () -> ()
    %cst_39 = arith.constant dense<0.000000e+00> : vector<7x16x32xf32>
    %79 = tpu.matmul %7, %78, %cst_39 {dimension_numbers = #tpu.dot_dimension_numbers<[2], [1], [1], [2], [0, 0, 0, 1, 1, 2], [0], [0]>} : vector<7x16x16xbf16>, vector<7x16x32xbf16>, vector<7x16x32xf32> -> vector<7x16x32xf32>
    "tpu.trace_stop"() : () -> ()
    %80 = arith.truncf %79 : vector<7x16x32xf32> to vector<7x16x32xbf16>
    "tpu.trace_start"() <{level = 10 : i32, message = "tuv,tvd->tud"}> : () -> ()
    %cst_40 = arith.constant dense<0.000000e+00> : vector<7x16x32xf32>
    %81 = tpu.matmul %7, %80, %cst_40 {dimension_numbers = #tpu.dot_dimension_numbers<[2], [1], [1], [2], [0, 0, 0, 1, 1, 2], [0], [0]>} : vector<7x16x16xbf16>, vector<7x16x32xbf16>, vector<7x16x32xf32> -> vector<7x16x32xf32>
    "tpu.trace_stop"() : () -> ()
    %82 = arith.truncf %81 : vector<7x16x32xf32> to vector<7x16x32xbf16>
    %83 = vector.shape_cast %80 : vector<7x16x32xbf16> to vector<112x32xbf16>
    %84 = vector.shape_cast %82 : vector<7x16x32xbf16> to vector<112x32xbf16>
    %85 = tpu.concatenate %77, %83, %84 in 1 : vector<112x32xbf16>, vector<112x32xbf16>, vector<112x32xbf16> -> vector<112x96xbf16>
    %c1_41 = arith.constant 1 : index
    %c0_42 = arith.constant 0 : index
    %c0_43 = arith.constant 0 : index
    %86 = vector.load %arg7[%c1_41, %c0_42, %c0_43] : memref<3x96x96xbf16, #tpu.memory_space<vmem>>, vector<1x96x96xbf16>
    %87 = vector.shape_cast %86 : vector<1x96x96xbf16> to vector<96x96xbf16>
    %cst_44 = arith.constant dense<0.000000e+00> : vector<112x96xf32>
    %88 = tpu.matmul %85, %87, %cst_44 {dimension_numbers = #tpu.dot_dimension_numbers<[1], [0], [0], [1], [0, 0, 1, 1], [], []>} : vector<112x96xbf16>, vector<96x96xbf16>, vector<112x96xf32> -> vector<112x96xf32>
    %c1_45 = arith.constant 1 : index
    %c0_46 = arith.constant 0 : index
    %c0_47 = arith.constant 0 : index
    %89 = vector.load %arg8[%c1_45, %c0_46, %c0_47] : memref<3x1x96xf32, #tpu.memory_space<vmem>>, vector<1x1x96xf32>
    %90 = vector.shape_cast %89 : vector<1x1x96xf32> to vector<1x96xf32>
    %91 = vector.broadcast %90 : vector<1x96xf32> to vector<112x96xf32>
    %92 = arith.addf %88, %91 : vector<112x96xf32>
    %93 = vector.extract_strided_slice %92 {offsets = [96, 32], sizes = [16, 64], strides = [1, 1]} : vector<112x96xf32> to vector<16x64xf32>
    %94 = arith.addf %45, %93 : vector<16x64xf32>
    %95 = vector.extract_strided_slice %92 {offsets = [0, 0], sizes = [112, 32], strides = [1, 1]} : vector<112x96xf32> to vector<112x32xf32>
    %96 = arith.addf %95, %55 : vector<112x32xf32>
    %c1_48 = arith.constant 1 : index
    %c0_49 = arith.constant 0 : index
    %c0_50 = arith.constant 0 : index
    %97 = vector.load %arg11[%c1_48, %c0_49, %c0_50] : memref<3x1x32xf32, #tpu.memory_space<vmem>>, vector<1x1x32xf32>
    %98 = vector.shape_cast %97 : vector<1x1x32xf32> to vector<1x32xf32>
    %99 = vector.broadcast %98 : vector<1x32xf32> to vector<112x32xf32>
    %100 = arith.mulf %96, %99 : vector<112x32xf32>
    %c1_51 = arith.constant 1 : index
    %c0_52 = arith.constant 0 : index
    %c0_53 = arith.constant 0 : index
    %101 = vector.load %arg12[%c1_51, %c0_52, %c0_53] : memref<3x1x32xf32, #tpu.memory_space<vmem>>, vector<1x1x32xf32>
    %102 = vector.shape_cast %101 : vector<1x1x32xf32> to vector<1x32xf32>
    %103 = vector.broadcast %102 : vector<1x32xf32> to vector<112x32xf32>
    %104 = arith.addf %100, %103 : vector<112x32xf32>
    %105 = arith.truncf %104 : vector<112x32xf32> to vector<112x32xbf16>
    %c2 = arith.constant 2 : index
    %c0_54 = arith.constant 0 : index
    %c0_55 = arith.constant 0 : index
    %106 = vector.load %arg5[%c2, %c0_54, %c0_55] : memref<4x32x128xbf16, #tpu.memory_space<vmem>>, vector<1x32x128xbf16>
    %107 = vector.shape_cast %106 : vector<1x32x128xbf16> to vector<32x128xbf16>
    %cst_56 = arith.constant dense<0.000000e+00> : vector<112x128xf32>
    %108 = tpu.matmul %105, %107, %cst_56 {dimension_numbers = #tpu.dot_dimension_numbers<[1], [0], [0], [1], [0, 0, 1, 1], [], []>} : vector<112x32xbf16>, vector<32x128xbf16>, vector<112x128xf32> -> vector<112x128xf32>
    %109 = vector.extract_strided_slice %108 {offsets = [0, 0], sizes = [112, 64], strides = [1, 1]} : vector<112x128xf32> to vector<112x64xf32>
    %c16_i32_57 = arith.constant 16 : i32
    %110 = tpu.dynamic_rotate %109 by %c16_i32_57 dim 0 : vector<112x64xf32>, i32 -> vector<112x64xf32>
    %111 = vector.extract_strided_slice %108 {offsets = [0, 64], sizes = [112, 64], strides = [1, 1]} : vector<112x128xf32> to vector<112x64xf32>
    %112 = arith.addf %110, %111 : vector<112x64xf32>
    %c2_58 = arith.constant 2 : index
    %c0_59 = arith.constant 0 : index
    %c0_60 = arith.constant 0 : index
    %113 = vector.load %arg6[%c2_58, %c0_59, %c0_60] : memref<4x1x64xf32, #tpu.memory_space<vmem>>, vector<1x1x64xf32>
    %114 = vector.shape_cast %113 : vector<1x1x64xf32> to vector<1x64xf32>
    %115 = vector.broadcast %114 : vector<1x64xf32> to vector<112x64xf32>
    %116 = arith.addf %112, %115 : vector<112x64xf32>
    %117 = vector.extract_strided_slice %116 {offsets = [0, 0], sizes = [112, 32], strides = [1, 1]} : vector<112x64xf32> to vector<112x32xf32>
    %118 = math.tanh %117 : vector<112x32xf32>
    %119 = vector.extract_strided_slice %116 {offsets = [0, 32], sizes = [112, 32], strides = [1, 1]} : vector<112x64xf32> to vector<112x32xf32>
    %120 = arith.negf %119 : vector<112x32xf32>
    %121 = math.exp %120 : vector<112x32xf32>
    %cst_61 = arith.constant 1.000000e+00 : f32
    %122 = vector.broadcast %cst_61 : f32 to vector<112x32xf32>
    %123 = arith.addf %122, %121 : vector<112x32xf32>
    %124 = arith.divf %122, %123 : vector<112x32xf32>
    %125 = arith.mulf %118, %124 : vector<112x32xf32>
    %126 = arith.truncf %125 : vector<112x32xf32> to vector<112x32xbf16>
    %127 = vector.shape_cast %126 : vector<112x32xbf16> to vector<7x16x32xbf16>
    "tpu.trace_start"() <{level = 10 : i32, message = "tuv,tvd->tud"}> : () -> ()
    %cst_62 = arith.constant dense<0.000000e+00> : vector<7x16x32xf32>
    %128 = tpu.matmul %7, %127, %cst_62 {dimension_numbers = #tpu.dot_dimension_numbers<[2], [1], [1], [2], [0, 0, 0, 1, 1, 2], [0], [0]>} : vector<7x16x16xbf16>, vector<7x16x32xbf16>, vector<7x16x32xf32> -> vector<7x16x32xf32>
    "tpu.trace_stop"() : () -> ()
    %129 = arith.truncf %128 : vector<7x16x32xf32> to vector<7x16x32xbf16>
    "tpu.trace_start"() <{level = 10 : i32, message = "tuv,tvd->tud"}> : () -> ()
    %cst_63 = arith.constant dense<0.000000e+00> : vector<7x16x32xf32>
    %130 = tpu.matmul %7, %129, %cst_63 {dimension_numbers = #tpu.dot_dimension_numbers<[2], [1], [1], [2], [0, 0, 0, 1, 1, 2], [0], [0]>} : vector<7x16x16xbf16>, vector<7x16x32xbf16>, vector<7x16x32xf32> -> vector<7x16x32xf32>
    "tpu.trace_stop"() : () -> ()
    %131 = arith.truncf %130 : vector<7x16x32xf32> to vector<7x16x32xbf16>
    %132 = vector.shape_cast %129 : vector<7x16x32xbf16> to vector<112x32xbf16>
    %133 = vector.shape_cast %131 : vector<7x16x32xbf16> to vector<112x32xbf16>
    %134 = tpu.concatenate %126, %132, %133 in 1 : vector<112x32xbf16>, vector<112x32xbf16>, vector<112x32xbf16> -> vector<112x96xbf16>
    %c2_64 = arith.constant 2 : index
    %c0_65 = arith.constant 0 : index
    %c0_66 = arith.constant 0 : index
    %135 = vector.load %arg7[%c2_64, %c0_65, %c0_66] : memref<3x96x96xbf16, #tpu.memory_space<vmem>>, vector<1x96x96xbf16>
    %136 = vector.shape_cast %135 : vector<1x96x96xbf16> to vector<96x96xbf16>
    %cst_67 = arith.constant dense<0.000000e+00> : vector<112x96xf32>
    %137 = tpu.matmul %134, %136, %cst_67 {dimension_numbers = #tpu.dot_dimension_numbers<[1], [0], [0], [1], [0, 0, 1, 1], [], []>} : vector<112x96xbf16>, vector<96x96xbf16>, vector<112x96xf32> -> vector<112x96xf32>
    %c2_68 = arith.constant 2 : index
    %c0_69 = arith.constant 0 : index
    %c0_70 = arith.constant 0 : index
    %138 = vector.load %arg8[%c2_68, %c0_69, %c0_70] : memref<3x1x96xf32, #tpu.memory_space<vmem>>, vector<1x1x96xf32>
    %139 = vector.shape_cast %138 : vector<1x1x96xf32> to vector<1x96xf32>
    %140 = vector.broadcast %139 : vector<1x96xf32> to vector<112x96xf32>
    %141 = arith.addf %137, %140 : vector<112x96xf32>
    %142 = vector.extract_strided_slice %141 {offsets = [96, 32], sizes = [16, 64], strides = [1, 1]} : vector<112x96xf32> to vector<16x64xf32>
    %143 = arith.addf %94, %142 : vector<16x64xf32>
    %144 = vector.extract_strided_slice %141 {offsets = [0, 0], sizes = [112, 32], strides = [1, 1]} : vector<112x96xf32> to vector<112x32xf32>
    %145 = arith.addf %144, %104 : vector<112x32xf32>
    %c2_71 = arith.constant 2 : index
    %c0_72 = arith.constant 0 : index
    %c0_73 = arith.constant 0 : index
    %146 = vector.load %arg11[%c2_71, %c0_72, %c0_73] : memref<3x1x32xf32, #tpu.memory_space<vmem>>, vector<1x1x32xf32>
    %147 = vector.shape_cast %146 : vector<1x1x32xf32> to vector<1x32xf32>
    %148 = vector.broadcast %147 : vector<1x32xf32> to vector<112x32xf32>
    %149 = arith.mulf %145, %148 : vector<112x32xf32>
    %c2_74 = arith.constant 2 : index
    %c0_75 = arith.constant 0 : index
    %c0_76 = arith.constant 0 : index
    %150 = vector.load %arg12[%c2_74, %c0_75, %c0_76] : memref<3x1x32xf32, #tpu.memory_space<vmem>>, vector<1x1x32xf32>
    %151 = vector.shape_cast %150 : vector<1x1x32xf32> to vector<1x32xf32>
    %152 = vector.broadcast %151 : vector<1x32xf32> to vector<112x32xf32>
    %153 = arith.addf %149, %152 : vector<112x32xf32>
    %154 = arith.truncf %153 : vector<112x32xf32> to vector<112x32xbf16>
    %c3 = arith.constant 3 : index
    %c0_77 = arith.constant 0 : index
    %c0_78 = arith.constant 0 : index
    %155 = vector.load %arg5[%c3, %c0_77, %c0_78] : memref<4x32x128xbf16, #tpu.memory_space<vmem>>, vector<1x32x128xbf16>
    %156 = vector.shape_cast %155 : vector<1x32x128xbf16> to vector<32x128xbf16>
    %cst_79 = arith.constant dense<0.000000e+00> : vector<112x128xf32>
    %157 = tpu.matmul %154, %156, %cst_79 {dimension_numbers = #tpu.dot_dimension_numbers<[1], [0], [0], [1], [0, 0, 1, 1], [], []>} : vector<112x32xbf16>, vector<32x128xbf16>, vector<112x128xf32> -> vector<112x128xf32>
    %158 = vector.extract_strided_slice %157 {offsets = [0, 0], sizes = [112, 64], strides = [1, 1]} : vector<112x128xf32> to vector<112x64xf32>
    %c32_i32_80 = arith.constant 32 : i32
    %159 = tpu.dynamic_rotate %158 by %c32_i32_80 dim 0 : vector<112x64xf32>, i32 -> vector<112x64xf32>
    %160 = vector.extract_strided_slice %157 {offsets = [0, 64], sizes = [112, 64], strides = [1, 1]} : vector<112x128xf32> to vector<112x64xf32>
    %161 = arith.addf %159, %160 : vector<112x64xf32>
    %c3_81 = arith.constant 3 : index
    %c0_82 = arith.constant 0 : index
    %c0_83 = arith.constant 0 : index
    %162 = vector.load %arg6[%c3_81, %c0_82, %c0_83] : memref<4x1x64xf32, #tpu.memory_space<vmem>>, vector<1x1x64xf32>
    %163 = vector.shape_cast %162 : vector<1x1x64xf32> to vector<1x64xf32>
    %164 = vector.broadcast %163 : vector<1x64xf32> to vector<112x64xf32>
    %165 = arith.addf %161, %164 : vector<112x64xf32>
    %166 = vector.extract_strided_slice %165 {offsets = [0, 0], sizes = [112, 32], strides = [1, 1]} : vector<112x64xf32> to vector<112x32xf32>
    %167 = math.tanh %166 : vector<112x32xf32>
    %168 = vector.extract_strided_slice %165 {offsets = [0, 32], sizes = [112, 32], strides = [1, 1]} : vector<112x64xf32> to vector<112x32xf32>
    %169 = arith.negf %168 : vector<112x32xf32>
    %170 = math.exp %169 : vector<112x32xf32>
    %cst_84 = arith.constant 1.000000e+00 : f32
    %171 = vector.broadcast %cst_84 : f32 to vector<112x32xf32>
    %172 = arith.addf %171, %170 : vector<112x32xf32>
    %173 = arith.divf %171, %172 : vector<112x32xf32>
    %174 = arith.mulf %167, %173 : vector<112x32xf32>
    %175 = arith.truncf %174 : vector<112x32xf32> to vector<112x32xbf16>
    %176 = vector.extract_strided_slice %175 {offsets = [96, 0], sizes = [16, 32], strides = [1, 1]} : vector<112x32xbf16> to vector<16x32xbf16>
    %c0_85 = arith.constant 0 : index
    %c0_86 = arith.constant 0 : index
    %177 = vector.load %arg9[%c0_85, %c0_86] : memref<32x64xbf16, #tpu.memory_space<vmem>>, vector<32x64xbf16>
    %cst_87 = arith.constant dense<0.000000e+00> : vector<16x64xf32>
    %178 = tpu.matmul %176, %177, %cst_87 {dimension_numbers = #tpu.dot_dimension_numbers<[1], [0], [0], [1], [0, 0, 1, 1], [], []>} : vector<16x32xbf16>, vector<32x64xbf16>, vector<16x64xf32> -> vector<16x64xf32>
    %c0_88 = arith.constant 0 : index
    %c0_89 = arith.constant 0 : index
    %179 = vector.load %arg10[%c0_88, %c0_89] : memref<1x64xf32, #tpu.memory_space<vmem>>, vector<1x64xf32>
    %180 = vector.broadcast %179 : vector<1x64xf32> to vector<16x64xf32>
    %181 = arith.addf %178, %180 : vector<16x64xf32>
    %182 = arith.addf %143, %181 : vector<16x64xf32>
    %cst_90 = arith.constant 0.000000e+00 : f32
    %183 = vector.broadcast %cst_90 : f32 to vector<16x64xf32>
    %184 = arith.maximumf %182, %183 : vector<16x64xf32>
    %185 = arith.truncf %184 : vector<16x64xf32> to vector<16x64xbf16>
    %c0_91 = arith.constant 0 : index
    %c0_92 = arith.constant 0 : index
    %186 = vector.load %arg13[%c0_91, %c0_92] : memref<64x128xbf16, #tpu.memory_space<vmem>>, vector<64x128xbf16>
    %cst_93 = arith.constant dense<0.000000e+00> : vector<16x128xf32>
    %187 = tpu.matmul %185, %186, %cst_93 {dimension_numbers = #tpu.dot_dimension_numbers<[1], [0], [0], [1], [0, 0, 1, 1], [], []>} : vector<16x64xbf16>, vector<64x128xbf16>, vector<16x128xf32> -> vector<16x128xf32>
    %c0_94 = arith.constant 0 : index
    %c0_95 = arith.constant 0 : index
    %188 = vector.load %arg14[%c0_94, %c0_95] : memref<1x128xf32, #tpu.memory_space<vmem>>, vector<1x128xf32>
    %189 = vector.broadcast %188 : vector<1x128xf32> to vector<16x128xf32>
    %190 = arith.addf %187, %189 : vector<16x128xf32>
    %cst_96 = arith.constant 0.000000e+00 : f32
    %191 = vector.broadcast %cst_96 : f32 to vector<16x128xf32>
    %192 = arith.maximumf %190, %191 : vector<16x128xf32>
    %193 = arith.truncf %192 : vector<16x128xf32> to vector<16x128xbf16>
    %c0_97 = arith.constant 0 : index
    %c0_98 = arith.constant 0 : index
    %194 = vector.load %arg15[%c0_97, %c0_98] : memref<128x128xbf16, #tpu.memory_space<vmem>>, vector<128x128xbf16>
    %cst_99 = arith.constant dense<0.000000e+00> : vector<16x128xf32>
    %195 = tpu.matmul %193, %194, %cst_99 {dimension_numbers = #tpu.dot_dimension_numbers<[1], [0], [0], [1], [0, 0, 1, 1], [], []>} : vector<16x128xbf16>, vector<128x128xbf16>, vector<16x128xf32> -> vector<16x128xf32>
    %c0_100 = arith.constant 0 : index
    %c0_101 = arith.constant 0 : index
    %196 = vector.load %arg16[%c0_100, %c0_101] : memref<1x128xf32, #tpu.memory_space<vmem>>, vector<1x128xf32>
    %197 = vector.broadcast %196 : vector<1x128xf32> to vector<16x128xf32>
    %198 = arith.addf %195, %197 : vector<16x128xf32>
    %c0_102 = arith.constant 0 : index
    %c0_103 = arith.constant 0 : index
    %c0_104 = arith.constant 0 : index
    %199 = vector.load %arg17[%c0_102, %c0_103, %c0_104] : memref<1x16x128xf32, #tpu.memory_space<vmem>>, vector<1x16x128xf32>
    %200 = vector.shape_cast %199 : vector<1x16x128xf32> to vector<16x128xf32>
    %201 = vector.shape_cast %198 : vector<16x128xf32> to vector<1x16x128xf32>
    tpu.vector_store %arg17[%c0_102, %c0_103, %c0_104], %201 {strides = array<i32>} : memref<1x16x128xf32, #tpu.memory_space<vmem>>, vector<1x16x128xf32>,
    return
  }
  func.func @transform_0(%arg0: i32) -> (i32, i32, i32) {
    %c0_i32 = arith.constant 0 : i32
    %c0_i32_0 = arith.constant 0 : i32
    %c0_i32_1 = arith.constant 0 : i32
    return %arg0, %c0_i32, %c0_i32_0 : i32, i32, i32
  }
  func.func @transform_1(%arg0: i32) -> (i32, i32, i32) {
    %c0_i32 = arith.constant 0 : i32
    %c0_i32_0 = arith.constant 0 : i32
    %c0_i32_1 = arith.constant 0 : i32
    %c0_i32_2 = arith.constant 0 : i32
    return %c0_i32, %c0_i32_0, %c0_i32_1 : i32, i32, i32
  }
  func.func @transform_2(%arg0: i32) -> (i32, i32) {
    %c0_i32 = arith.constant 0 : i32
    %c0_i32_0 = arith.constant 0 : i32
    %c0_i32_1 = arith.constant 0 : i32
    return %c0_i32, %c0_i32_0 : i32, i32
  }
  func.func @transform_3(%arg0: i32) -> (i32, i32) {
    %c0_i32 = arith.constant 0 : i32
    %c0_i32_0 = arith.constant 0 : i32
    %c0_i32_1 = arith.constant 0 : i32
    return %c0_i32, %c0_i32_0 : i32, i32
  }
  func.func @transform_4(%arg0: i32) -> (i32, i32, i32) {
    %c0_i32 = arith.constant 0 : i32
    %c0_i32_0 = arith.constant 0 : i32
    %c0_i32_1 = arith.constant 0 : i32
    %c0_i32_2 = arith.constant 0 : i32
    return %c0_i32, %c0_i32_0, %c0_i32_1 : i32, i32, i32
  }
  func.func @transform_5(%arg0: i32) -> (i32, i32, i32) {
    %c0_i32 = arith.constant 0 : i32
    %c0_i32_0 = arith.constant 0 : i32
    %c0_i32_1 = arith.constant 0 : i32
    %c0_i32_2 = arith.constant 0 : i32
    return %c0_i32, %c0_i32_0, %c0_i32_1 : i32, i32, i32
  }
  func.func @transform_6(%arg0: i32) -> (i32, i32, i32) {
    %c0_i32 = arith.constant 0 : i32
    %c0_i32_0 = arith.constant 0 : i32
    %c0_i32_1 = arith.constant 0 : i32
    %c0_i32_2 = arith.constant 0 : i32
    return %c0_i32, %c0_i32_0, %c0_i32_1 : i32, i32, i32
  }
  func.func @transform_7(%arg0: i32) -> (i32, i32, i32) {
    %c0_i32 = arith.constant 0 : i32
    %c0_i32_0 = arith.constant 0 : i32
    %c0_i32_1 = arith.constant 0 : i32
    %c0_i32_2 = arith.constant 0 : i32
    return %c0_i32, %c0_i32_0, %c0_i32_1 : i32, i32, i32
  }
  func.func @transform_8(%arg0: i32) -> (i32, i32) {
    %c0_i32 = arith.constant 0 : i32
    %c0_i32_0 = arith.constant 0 : i32
    %c0_i32_1 = arith.constant 0 : i32
    return %c0_i32, %c0_i32_0 : i32, i32
  }
  func.func @transform_9(%arg0: i32) -> (i32, i32) {
    %c0_i32 = arith.constant 0 : i32
    %c0_i32_0 = arith.constant 0 : i32
    %c0_i32_1 = arith.constant 0 : i32
    return %c0_i32, %c0_i32_0 : i32, i32
  }
  func.func @transform_10(%arg0: i32) -> (i32, i32, i32) {
    %c0_i32 = arith.constant 0 : i32
    %c0_i32_0 = arith.constant 0 : i32
    %c0_i32_1 = arith.constant 0 : i32
    %c0_i32_2 = arith.constant 0 : i32
    return %c0_i32, %c0_i32_0, %c0_i32_1 : i32, i32, i32
  }
  func.func @transform_11(%arg0: i32) -> (i32, i32, i32) {
    %c0_i32 = arith.constant 0 : i32
    %c0_i32_0 = arith.constant 0 : i32
    %c0_i32_1 = arith.constant 0 : i32
    %c0_i32_2 = arith.constant 0 : i32
    return %c0_i32, %c0_i32_0, %c0_i32_1 : i32, i32, i32
  }
  func.func @transform_12(%arg0: i32) -> (i32, i32) {
    %c0_i32 = arith.constant 0 : i32
    %c0_i32_0 = arith.constant 0 : i32
    %c0_i32_1 = arith.constant 0 : i32
    return %c0_i32, %c0_i32_0 : i32, i32
  }
  func.func @transform_13(%arg0: i32) -> (i32, i32) {
    %c0_i32 = arith.constant 0 : i32
    %c0_i32_0 = arith.constant 0 : i32
    %c0_i32_1 = arith.constant 0 : i32
    return %c0_i32, %c0_i32_0 : i32, i32
  }
  func.func @transform_14(%arg0: i32) -> (i32, i32) {
    %c0_i32 = arith.constant 0 : i32
    %c0_i32_0 = arith.constant 0 : i32
    %c0_i32_1 = arith.constant 0 : i32
    return %c0_i32, %c0_i32_0 : i32, i32
  }
  func.func @transform_15(%arg0: i32) -> (i32, i32) {
    %c0_i32 = arith.constant 0 : i32
    %c0_i32_0 = arith.constant 0 : i32
    %c0_i32_1 = arith.constant 0 : i32
    return %c0_i32, %c0_i32_0 : i32, i32
  }
  func.func @transform_16(%arg0: i32) -> (i32, i32, i32) {
    %c0_i32 = arith.constant 0 : i32
    %c0_i32_0 = arith.constant 0 : i32
    %c0_i32_1 = arith.constant 0 : i32
    return %arg0, %c0_i32, %c0_i32_0 : i32, i32, i32
  }
}

</mosaic_0001>

<llo_original>
// kernel: gwnet_forward.1
$region0: #{gwnet_forward.1}
  #allocation0 [shape = 'u32[]', space=smem, size = 0x4, offset = 0x4, fixed_abs, tag = 'smem constant byte address 0x4 - core index']
  #allocation1 [shape = 'u32[72,128]{1,0:T(1,128)}', space=vmem, size = 0x9000, scoped, tag = 'internal scratch']
  %s0 = inlined_call_operand.vmem [shape: bf16[2,112,8], index: 0, kind: input, shape index: {}]
  %s1 = inlined_call_operand.vmem [shape: bf16[7,16,16], index: 1, kind: input, shape index: {}]
  %s2 = inlined_call_operand.vmem [shape: bf16[8,32], index: 2, kind: input, shape index: {}]
  %s3 = inlined_call_operand.vmem [shape: f32[1,32], index: 3, kind: input, shape index: {}]
  %s4 = inlined_call_operand.vmem [shape: bf16[4,32,128], index: 4, kind: input, shape index: {}]
  %s5 = inlined_call_operand.vmem [shape: f32[4,1,64], index: 5, kind: input, shape index: {}]
  %s6 = inlined_call_operand.vmem [shape: bf16[3,96,96], index: 6, kind: input, shape index: {}]
  %s7 = inlined_call_operand.vmem [shape: f32[3,1,96], index: 7, kind: input, shape index: {}]
  %s8 = inlined_call_operand.vmem [shape: bf16[32,64], index: 8, kind: input, shape index: {}]
  %s9 = inlined_call_operand.vmem [shape: f32[1,64], index: 9, kind: input, shape index: {}]
  %s10 = inlined_call_operand.vmem [shape: f32[3,1,32], index: 10, kind: input, shape index: {}]
  %s11 = inlined_call_operand.vmem [shape: f32[3,1,32], index: 11, kind: input, shape index: {}]
  %s12 = inlined_call_operand.vmem [shape: bf16[64,128], index: 12, kind: input, shape index: {}]
  %s13 = inlined_call_operand.vmem [shape: f32[1,128], index: 13, kind: input, shape index: {}]
  %s14 = inlined_call_operand.vmem [shape: bf16[128,128], index: 14, kind: input, shape index: {}]
  %s15 = inlined_call_operand.vmem [shape: f32[1,128], index: 15, kind: input, shape index: {}]
  %s16 = inlined_call_operand.vmem [shape: f32[2,16,128], index: 16, kind: output, shape index: {}]
  %s17 = sld [smem:[#allocation0]]
  $region97: #{gwnet_forward.1} parent=0
    _
  %s19 = ssub.s32 1, %s17
  %s20 = scalar_select 0, %s19, %s17
  loop: start=0, step=1, limit=4
  $region2: #{gwnet_forward.1} parent=0 // loop_pre_header
    _
  $region3: #{gwnet_forward.1} parent=0 // loop_header
    %s22 = sphi 0, %s26
    %p23 = scmp.ge.s32.totalorder %s22, 4
    %s32 = sphi 0, %s34
    %s35 = sphi 0, %s32
    %s36 = sphi 0, %s35
    %s52 = sphi 0, %s36
    %s56 = sphi 0, %s56
    %s58 = sphi 0, %s56
    %s59 = sphi 0, %s58
    %s73 = sphi 0, %s59
    %s77 = sphi 0, %s77
    %s79 = sphi 0, %s77
    %s80 = sphi 0, %s79
    %s94 = sphi 0, %s80
    %s98 = sphi 0, %s98
    %s100 = sphi 0, %s98
    %s101 = sphi 0, %s100
    %s115 = sphi 0, %s101
    %s119 = sphi 0, %s119
    %s121 = sphi 0, %s119
    %s122 = sphi 0, %s121
    %s136 = sphi 0, %s122
    %s140 = sphi 0, %s140
    %s142 = sphi 0, %s140
    %s143 = sphi 0, %s142
    %s157 = sphi 0, %s143
    %s161 = sphi 0, %s161
    %s163 = sphi 0, %s161
    %s164 = sphi 0, %s163
    %s178 = sphi 0, %s164
    %s182 = sphi 0, %s182
    %s184 = sphi 0, %s182
    %s185 = sphi 0, %s184
    %s199 = sphi 0, %s185
    %s203 = sphi 0, %s203
    %s205 = sphi 0, %s203
    %s206 = sphi 0, %s205
    %s220 = sphi 0, %s206
    %s224 = sphi 0, %s224
    %s226 = sphi 0, %s224
    %s227 = sphi 0, %s226
    %s241 = sphi 0, %s227
    %s245 = sphi 0, %s245
    %s247 = sphi 0, %s245
    %s248 = sphi 0, %s247
    %s262 = sphi 0, %s248
    %s266 = sphi 0, %s266
    %s268 = sphi 0, %s266
    %s269 = sphi 0, %s268
    %s283 = sphi 0, %s269
    %s287 = sphi 0, %s287
    %s289 = sphi 0, %s287
    %s290 = sphi 0, %s289
    %s304 = sphi 0, %s290
    %s308 = sphi 0, %s308
    %s310 = sphi 0, %s308
    %s311 = sphi 0, %s310
    %s325 = sphi 0, %s311
    %s329 = sphi 0, %s329
    %s331 = sphi 0, %s329
    %s332 = sphi 0, %s331
    %s346 = sphi 0, %s332
    %s350 = sphi 0, %s350
    %s352 = sphi 0, %s350
    %s353 = sphi 0, %s352
    %s367 = sphi 0, %s353
    %s373 = sphi 0, %s375
    %s376 = sphi 0, %s373
    %s377 = sphi 0, %s376
    %s393 = sphi 0, %s377
  $region4: #{gwnet_forward.1} parent=0 // loop_header_branch
    %25 = sbr.rel (%p23) target = $region8
  $region5: #{gwnet_forward.1} parent=0 // loop_body
    %s27 = ssub.s32 %s22, 1
    %s28 = ssub.s32 %s22, 2
    %s29 = sadd.s32 %s22, 1
    %s30 = ssub.s32 %s22, %s29
    %p31 = scmp.eq.s32.totalorder %s30, 0
    %s33 = sadd.s32 %s32, 1
    %s34 = scalar_select %p31, %s32, %s33
    %p37 = pneg %p31
    %p38 = scmp.eq.s32.totalorder %s22, 1
    %p39 = por %p37, %p38
    %p40 = scmp.ne.s32.totalorder %s32, %s35
    %p41 = scmp.eq.s32.totalorder %s22, 0
    %p42 = por %p40, %p41
    %p43 = scmp.ne.s32.totalorder %s32, %s35
    %p44 = scmp.eq.s32.totalorder %s27, 1
    %p45 = por %p43, %p44
    %p46 = scmp.ne.s32.totalorder %s35, %s36
    %p47 = scmp.eq.s32.totalorder %s27, 0
    %p48 = por %p46, %p47
    %p49 = scmp.ne.s32.totalorder %s35, %s36
    %p50 = scmp.eq.s32.totalorder %s28, 1
    %p51 = por %p49, %p50
    %p53 = scmp.ne.s32.totalorder %s36, %s52
    %p54 = scmp.eq.s32.totalorder %s28, 0
    %p55 = por %p53, %p54
    %s57 = sadd.s32 %s56, 1
    %p60 = scmp.eq.s32.totalorder %s22, 1
    %p61 = scmp.ne.s32.totalorder %s56, %s58
    %p62 = scmp.eq.s32.totalorder %s22, 0
    %p63 = por %p61, %p62
    %p64 = scmp.ne.s32.totalorder %s56, %s58
    %p65 = scmp.eq.s32.totalorder %s27, 1
    %p66 = por %p64, %p65
    %p67 = scmp.ne.s32.totalorder %s58, %s59
    %p68 = scmp.eq.s32.totalorder %s27, 0
    %p69 = por %p67, %p68
    %p70 = scmp.ne.s32.totalorder %s58, %s59
    %p71 = scmp.eq.s32.totalorder %s28, 1
    %p72 = por %p70, %p71
    %p74 = scmp.ne.s32.totalorder %s59, %s73
    %p75 = scmp.eq.s32.totalorder %s28, 0
    %p76 = por %p74, %p75
    %s78 = sadd.s32 %s77, 1
    %p81 = scmp.eq.s32.totalorder %s22, 1
    %p82 = scmp.ne.s32.totalorder %s77, %s79
    %p83 = scmp.eq.s32.totalorder %s22, 0
    %p84 = por %p82, %p83
    %p85 = scmp.ne.s32.totalorder %s77, %s79
    %p86 = scmp.eq.s32.totalorder %s27, 1
    %p87 = por %p85, %p86
    %p88 = scmp.ne.s32.totalorder %s79, %s80
    %p89 = scmp.eq.s32.totalorder %s27, 0
    %p90 = por %p88, %p89
    %p91 = scmp.ne.s32.totalorder %s79, %s80
    %p92 = scmp.eq.s32.totalorder %s28, 1
    %p93 = por %p91, %p92
    %p95 = scmp.ne.s32.totalorder %s80, %s94
    %p96 = scmp.eq.s32.totalorder %s28, 0
    %p97 = por %p95, %p96
    %s99 = sadd.s32 %s98, 1
    %p102 = scmp.eq.s32.totalorder %s22, 1
    %p103 = scmp.ne.s32.totalorder %s98, %s100
    %p104 = scmp.eq.s32.totalorder %s22, 0
    %p105 = por %p103, %p104
    %p106 = scmp.ne.s32.totalorder %s98, %s100
    %p107 = scmp.eq.s32.totalorder %s27, 1
    %p108 = por %p106, %p107
    %p109 = scmp.ne.s32.totalorder %s100, %s101
    %p110 = scmp.eq.s32.totalorder %s27, 0
    %p111 = por %p109, %p110
    %p112 = scmp.ne.s32.totalorder %s100, %s101
    %p113 = scmp.eq.s32.totalorder %s28, 1
    %p114 = por %p112, %p113
    %p116 = scmp.ne.s32.totalorder %s101, %s115
    %p117 = scmp.eq.s32.totalorder %s28, 0
    %p118 = por %p116, %p117
    %s120 = sadd.s32 %s119, 1
    %p123 = scmp.eq.s32.totalorder %s22, 1
    %p124 = scmp.ne.s32.totalorder %s119, %s121
    %p125 = scmp.eq.s32.totalorder %s22, 0
    %p126 = por %p124, %p125
    %p127 = scmp.ne.s32.totalorder %s119, %s121
    %p128 = scmp.eq.s32.totalorder %s27, 1
    %p129 = por %p127, %p128
    %p130 = scmp.ne.s32.totalorder %s121, %s122
    %p131 = scmp.eq.s32.totalorder %s27, 0
    %p132 = por %p130, %p131
    %p133 = scmp.ne.s32.totalorder %s121, %s122
    %p134 = scmp.eq.s32.totalorder %s28, 1
    %p135 = por %p133, %p134
    %p137 = scmp.ne.s32.totalorder %s122, %s136
    %p138 = scmp.eq.s32.totalorder %s28, 0
    %p139 = por %p137, %p138
    %s141 = sadd.s32 %s140, 1
    %p144 = scmp.eq.s32.totalorder %s22, 1
    %p145 = scmp.ne.s32.totalorder %s140, %s142
    %p146 = scmp.eq.s32.totalorder %s22, 0
    %p147 = por %p145, %p146
    %p148 = scmp.ne.s32.totalorder %s140, %s142
    %p149 = scmp.eq.s32.totalorder %s27, 1
    %p150 = por %p148, %p149
    %p151 = scmp.ne.s32.totalorder %s142, %s143
    %p152 = scmp.eq.s32.totalorder %s27, 0
    %p153 = por %p151, %p152
    %p154 = scmp.ne.s32.totalorder %s142, %s143
    %p155 = scmp.eq.s32.totalorder %s28, 1
    %p156 = por %p154, %p155
    %p158 = scmp.ne.s32.totalorder %s143, %s157
    %p159 = scmp.eq.s32.totalorder %s28, 0
    %p160 = por %p158, %p159
    %s162 = sadd.s32 %s161, 1
    %p165 = scmp.eq.s32.totalorder %s22, 1
    %p166 = scmp.ne.s32.totalorder %s161, %s163
    %p167 = scmp.eq.s32.totalorder %s22, 0
    %p168 = por %p166, %p167
    %p169 = scmp.ne.s32.totalorder %s161, %s163
    %p170 = scmp.eq.s32.totalorder %s27, 1
    %p171 = por %p169, %p170
    %p172 = scmp.ne.s32.totalorder %s163, %s164
    %p173 = scmp.eq.s32.totalorder %s27, 0
    %p174 = por %p172, %p173
    %p175 = scmp.ne.s32.totalorder %s163, %s164
    %p176 = scmp.eq.s32.totalorder %s28, 1
    %p177 = por %p175, %p176
    %p179 = scmp.ne.s32.totalorder %s164, %s178
    %p180 = scmp.eq.s32.totalorder %s28, 0
    %p181 = por %p179, %p180
    %s183 = sadd.s32 %s182, 1
    %p186 = scmp.eq.s32.totalorder %s22, 1
    %p187 = scmp.ne.s32.totalorder %s182, %s184
    %p188 = scmp.eq.s32.totalorder %s22, 0
    %p189 = por %p187, %p188
    %p190 = scmp.ne.s32.totalorder %s182, %s184
    %p191 = scmp.eq.s32.totalorder %s27, 1
    %p192 = por %p190, %p191
    %p193 = scmp.ne.s32.totalorder %s184, %s185
    %p194 = scmp.eq.s32.totalorder %s27, 0
    %p195 = por %p193, %p194
    %p196 = scmp.ne.s32.totalorder %s184, %s185
    %p197 = scmp.eq.s32.totalorder %s28, 1
    %p198 = por %p196, %p197
    %p200 = scmp.ne.s32.totalorder %s185, %s199
    %p201 = scmp.eq.s32.totalorder %s28, 0
    %p202 = por %p200, %p201
    %s204 = sadd.s32 %s203, 1
    %p207 = scmp.eq.s32.totalorder %s22, 1
    %p208 = scmp.ne.s32.totalorder %s203, %s205
    %p209 = scmp.eq.s32.totalorder %s22, 0
    %p210 = por %p208, %p209
    %p211 = scmp.ne.s32.totalorder %s203, %s205
    %p212 = scmp.eq.s32.totalorder %s27, 1
    %p213 = por %p211, %p212
    %p214 = scmp.ne.s32.totalorder %s205, %s206
    %p215 = scmp.eq.s32.totalorder %s27, 0
    %p216 = por %p214, %p215
    %p217 = scmp.ne.s32.totalorder %s205, %s206
    %p218 = scmp.eq.s32.totalorder %s28, 1
    %p219 = por %p217, %p218
    %p221 = scmp.ne.s32.totalorder %s206, %s220
    %p222 = scmp.eq.s32.totalorder %s28, 0
    %p223 = por %p221, %p222
    %s225 = sadd.s32 %s224, 1
    %p228 = scmp.eq.s32.totalorder %s22, 1
    %p229 = scmp.ne.s32.totalorder %s224, %s226
    %p230 = scmp.eq.s32.totalorder %s22, 0
    %p231 = por %p229, %p230
    %p232 = scmp.ne.s32.totalorder %s224, %s226
    %p233 = scmp.eq.s32.totalorder %s27, 1
    %p234 = por %p232, %p233
    %p235 = scmp.ne.s32.totalorder %s226, %s227
    %p236 = scmp.eq.s32.totalorder %s27, 0
    %p237 = por %p235, %p236
    %p238 = scmp.ne.s32.totalorder %s226, %s227
    %p239 = scmp.eq.s32.totalorder %s28, 1
    %p240 = por %p238, %p239
    %p242 = scmp.ne.s32.totalorder %s227, %s241
    %p243 = scmp.eq.s32.totalorder %s28, 0
    %p244 = por %p242, %p243
    %s246 = sadd.s32 %s245, 1
    %p249 = scmp.eq.s32.totalorder %s22, 1
    %p250 = scmp.ne.s32.totalorder %s245, %s247
    %p251 = scmp.eq.s32.totalorder %s22, 0
    %p252 = por %p250, %p251
    %p253 = scmp.ne.s32.totalorder %s245, %s247
    %p254 = scmp.eq.s32.totalorder %s27, 1
    %p255 = por %p253, %p254
    %p256 = scmp.ne.s32.totalorder %s247, %s248
    %p257 = scmp.eq.s32.totalorder %s27, 0
    %p258 = por %p256, %p257
    %p259 = scmp.ne.s32.totalorder %s247, %s248
    %p260 = scmp.eq.s32.totalorder %s28, 1
    %p261 = por %p259, %p260
    %p263 = scmp.ne.s32.totalorder %s248, %s262
    %p264 = scmp.eq.s32.totalorder %s28, 0
    %p265 = por %p263, %p264
    %s267 = sadd.s32 %s266, 1
    %p270 = scmp.eq.s32.totalorder %s22, 1
    %p271 = scmp.ne.s32.totalorder %s266, %s268
    %p272 = scmp.eq.s32.totalorder %s22, 0
    %p273 = por %p271, %p272
    %p274 = scmp.ne.s32.totalorder %s266, %s268
    %p275 = scmp.eq.s32.totalorder %s27, 1
    %p276 = por %p274, %p275
    %p277 = scmp.ne.s32.totalorder %s268, %s269
    %p278 = scmp.eq.s32.totalorder %s27, 0
    %p279 = por %p277, %p278
    %p280 = scmp.ne.s32.totalorder %s268, %s269
    %p281 = scmp.eq.s32.totalorder %s28, 1
    %p282 = por %p280, %p281
    %p284 = scmp.ne.s32.totalorder %s269, %s283
    %p285 = scmp.eq.s32.totalorder %s28, 0
    %p286 = por %p284, %p285
    %s288 = sadd.s32 %s287, 1
    %p291 = scmp.eq.s32.totalorder %s22, 1
    %p292 = scmp.ne.s32.totalorder %s287, %s289
    %p293 = scmp.eq.s32.totalorder %s22, 0
    %p294 = por %p292, %p293
    %p295 = scmp.ne.s32.totalorder %s287, %s289
    %p296 = scmp.eq.s32.totalorder %s27, 1
    %p297 = por %p295, %p296
    %p298 = scmp.ne.s32.totalorder %s289, %s290
    %p299 = scmp.eq.s32.totalorder %s27, 0
    %p300 = por %p298, %p299
    %p301 = scmp.ne.s32.totalorder %s289, %s290
    %p302 = scmp.eq.s32.totalorder %s28, 1
    %p303 = por %p301, %p302
    %p305 = scmp.ne.s32.totalorder %s290, %s304
    %p306 = scmp.eq.s32.totalorder %s28, 0
    %p307 = por %p305, %p306
    %s309 = sadd.s32 %s308, 1
    %p312 = scmp.eq.s32.totalorder %s22, 1
    %p313 = scmp.ne.s32.totalorder %s308, %s310
    %p314 = scmp.eq.s32.totalorder %s22, 0
    %p315 = por %p313, %p314
    %p316 = scmp.ne.s32.totalorder %s308, %s310
    %p317 = scmp.eq.s32.totalorder %s27, 1
    %p318 = por %p316, %p317
    %p319 = scmp.ne.s32.totalorder %s310, %s311
    %p320 = scmp.eq.s32.totalorder %s27, 0
    %p321 = por %p319, %p320
    %p322 = scmp.ne.s32.totalorder %s310, %s311
    %p323 = scmp.eq.s32.totalorder %s28, 1
    %p324 = por %p322, %p323
    %p326 = scmp.ne.s32.totalorder %s311, %s325
    %p327 = scmp.eq.s32.totalorder %s28, 0
    %p328 = por %p326, %p327
    %s330 = sadd.s32 %s329, 1
    %p333 = scmp.eq.s32.totalorder %s22, 1
    %p334 = scmp.ne.s32.totalorder %s329, %s331
    %p335 = scmp.eq.s32.totalorder %s22, 0
    %p336 = por %p334, %p335
    %p337 = scmp.ne.s32.totalorder %s329, %s331
    %p338 = scmp.eq.s32.totalorder %s27, 1
    %p339 = por %p337, %p338
    %p340 = scmp.ne.s32.totalorder %s331, %s332
    %p341 = scmp.eq.s32.totalorder %s27, 0
    %p342 = por %p340, %p341
    %p343 = scmp.ne.s32.totalorder %s331, %s332
    %p344 = scmp.eq.s32.totalorder %s28, 1
    %p345 = por %p343, %p344
    %p347 = scmp.ne.s32.totalorder %s332, %s346
    %p348 = scmp.eq.s32.totalorder %s28, 0
    %p349 = por %p347, %p348
    %s351 = sadd.s32 %s350, 1
    %p354 = scmp.eq.s32.totalorder %s22, 1
    %p355 = scmp.ne.s32.totalorder %s350, %s352
    %p356 = scmp.eq.s32.totalorder %s22, 0
    %p357 = por %p355, %p356
    %p358 = scmp.ne.s32.totalorder %s350, %s352
    %p359 = scmp.eq.s32.totalorder %s27, 1
    %p360 = por %p358, %p359
    %p361 = scmp.ne.s32.totalorder %s352, %s353
    %p362 = scmp.eq.s32.totalorder %s27, 0
    %p363 = por %p361, %p362
    %p364 = scmp.ne.s32.totalorder %s352, %s353
    %p365 = scmp.eq.s32.totalorder %s28, 1
    %p366 = por %p364, %p365
    %p368 = scmp.ne.s32.totalorder %s353, %s367
    %p369 = scmp.eq.s32.totalorder %s28, 0
    %p370 = por %p368, %p369
    %s371 = ssub.s32 %s22, %s29
    %p372 = scmp.eq.s32.totalorder %s371, 0
    %s374 = sadd.s32 %s373, 1
    %s375 = scalar_select %p372, %s373, %s374
    %p378 = pneg %p372
    %p379 = scmp.eq.s32.totalorder %s22, 1
    %p380 = por %p378, %p379
    %p381 = scmp.ne.s32.totalorder %s373, %s376
    %p382 = scmp.eq.s32.totalorder %s22, 0
    %p383 = por %p381, %p382
    %p384 = scmp.ne.s32.totalorder %s373, %s376
    %p385 = scmp.eq.s32.totalorder %s27, 1
    %p386 = por %p384, %p385
    %p387 = scmp.ne.s32.totalorder %s376, %s377
    %p388 = scmp.eq.s32.totalorder %s27, 0
    %p389 = por %p387, %p388
    %p390 = scmp.ne.s32.totalorder %s376, %s377
    %p391 = scmp.eq.s32.totalorder %s28, 1
    %p392 = por %p390, %p391
    %p394 = scmp.ne.s32.totalorder %s377, %s393
    %p395 = scmp.eq.s32.totalorder %s28, 0
    %p396 = por %p394, %p395
    %p397 = scmp.le.s32.totalorder 1, %s22
    %p398 = scmp.lt.s32.totalorder %s22, 3
    %p399 = pnand %p397, %p398
    %p400 = pneg %p399
    // Predicated region
    $region9: #{gwnet_forward.1} parent=5 // pred_check
      _
    $region10: #{gwnet_forward.1} parent=5 // pred_check_branch
      %402 = sbr.rel (%p399) target = $region12
    $region11: #{gwnet_forward.1} parent=5 // pred_region
      %s403 = ssub.s32 %s22, 1
      // Predicated region
      $region13: #{gwnet_forward.1} parent=11 // pred_check
        %p404 = pneg %p69
      $region14: #{gwnet_forward.1} parent=11 // pred_check_branch
        %406 = sbr.rel (%p404) target = $region16
      $region15: #{gwnet_forward.1} parent=11 // pred_region
        _
      $region16: #{gwnet_forward.1} parent=11 // pred_fallthru
        _
      // Predicated region
      $region17: #{gwnet_forward.1} parent=11 // pred_check
        %p407 = pneg %p90
      $region18: #{gwnet_forward.1} parent=11 // pred_check_branch
        %409 = sbr.rel (%p407) target = $region20
      $region19: #{gwnet_forward.1} parent=11 // pred_region
        _
      $region20: #{gwnet_forward.1} parent=11 // pred_fallthru
        _
      // Predicated region
      $region21: #{gwnet_forward.1} parent=11 // pred_check
        %p410 = pneg %p111
      $region22: #{gwnet_forward.1} parent=11 // pred_check_branch
        %412 = sbr.rel (%p410) target = $region24
      $region23: #{gwnet_forward.1} parent=11 // pred_region
        _
      $region24: #{gwnet_forward.1} parent=11 // pred_fallthru
        _
      // Predicated region
      $region25: #{gwnet_forward.1} parent=11 // pred_check
        %p413 = pneg %p132
      $region26: #{gwnet_forward.1} parent=11 // pred_check_branch
        %415 = sbr.rel (%p413) target = $region28
      $region27: #{gwnet_forward.1} parent=11 // pred_region
        _
      $region28: #{gwnet_forward.1} parent=11 // pred_fallthru
        _
      // Predicated region
      $region29: #{gwnet_forward.1} parent=11 // pred_check
        %p416 = pneg %p153
      $region30: #{gwnet_forward.1} parent=11 // pred_check_branch
        %418 = sbr.rel (%p416) target = $region32
      $region31: #{gwnet_forward.1} parent=11 // pred_region
        _
      $region32: #{gwnet_forward.1} parent=11 // pred_fallthru
        _
      // Predicated region
      $region33: #{gwnet_forward.1} parent=11 // pred_check
        %p419 = pneg %p174
      $region34: #{gwnet_forward.1} parent=11 // pred_check_branch
        %421 = sbr.rel (%p419) target = $region36
      $region35: #{gwnet_forward.1} parent=11 // pred_region
        _
      $region36: #{gwnet_forward.1} parent=11 // pred_fallthru
        _
      // Predicated region
      $region37: #{gwnet_forward.1} parent=11 // pred_check
        %p422 = pneg %p195
      $region38: #{gwnet_forward.1} parent=11 // pred_check_branch
        %424 = sbr.rel (%p422) target = $region40
      $region39: #{gwnet_forward.1} parent=11 // pred_region
        _
      $region40: #{gwnet_forward.1} parent=11 // pred_fallthru
        _
      // Predicated region
      $region41: #{gwnet_forward.1} parent=11 // pred_check
        %p425 = pneg %p216
      $region42: #{gwnet_forward.1} parent=11 // pred_check_branch
        %427 = sbr.rel (%p425) target = $region44
      $region43: #{gwnet_forward.1} parent=11 // pred_region
        _
      $region44: #{gwnet_forward.1} parent=11 // pred_fallthru
        _
      // Predicated region
      $region45: #{gwnet_forward.1} parent=11 // pred_check
        %p428 = pneg %p237
      $region46: #{gwnet_forward.1} parent=11 // pred_check_branch
        %430 = sbr.rel (%p428) target = $region48
      $region47: #{gwnet_forward.1} parent=11 // pred_region
        _
      $region48: #{gwnet_forward.1} parent=11 // pred_fallthru
        _
      // Predicated region
      $region49: #{gwnet_forward.1} parent=11 // pred_check
        %p431 = pneg %p258
      $region50: #{gwnet_forward.1} parent=11 // pred_check_branch
        %433 = sbr.rel (%p431) target = $region52
      $region51: #{gwnet_forward.1} parent=11 // pred_region
        _
      $region52: #{gwnet_forward.1} parent=11 // pred_fallthru
        _
      // Predicated region
      $region53: #{gwnet_forward.1} parent=11 // pred_check
        %p434 = pneg %p279
      $region54: #{gwnet_forward.1} parent=11 // pred_check_branch
        %436 = sbr.rel (%p434) target = $region56
      $region55: #{gwnet_forward.1} parent=11 // pred_region
        _
      $region56: #{gwnet_forward.1} parent=11 // pred_fallthru
        _
      // Predicated region
      $region57: #{gwnet_forward.1} parent=11 // pred_check
        %p437 = pneg %p300
      $region58: #{gwnet_forward.1} parent=11 // pred_check_branch
        %439 = sbr.rel (%p437) target = $region60
      $region59: #{gwnet_forward.1} parent=11 // pred_region
        _
      $region60: #{gwnet_forward.1} parent=11 // pred_fallthru
        _
      // Predicated region
      $region61: #{gwnet_forward.1} parent=11 // pred_check
        %p440 = pneg %p321
      $region62: #{gwnet_forward.1} parent=11 // pred_check_branch
        %442 = sbr.rel (%p440) target = $region64
      $region63: #{gwnet_forward.1} parent=11 // pred_region
        _
      $region64: #{gwnet_forward.1} parent=11 // pred_fallthru
        _
      // Predicated region
      $region65: #{gwnet_forward.1} parent=11 // pred_check
        %p443 = pneg %p342
      $region66: #{gwnet_forward.1} parent=11 // pred_check_branch
        %445 = sbr.rel (%p443) target = $region68
      $region67: #{gwnet_forward.1} parent=11 // pred_region
        _
      $region68: #{gwnet_forward.1} parent=11 // pred_fallthru
        _
      // Predicated region
      $region69: #{gwnet_forward.1} parent=11 // pred_check
        %p446 = pneg %p363
      $region70: #{gwnet_forward.1} parent=11 // pred_check_branch
        %448 = sbr.rel (%p446) target = $region72
      $region71: #{gwnet_forward.1} parent=11 // pred_region
        _
      $region72: #{gwnet_forward.1} parent=11 // pred_fallthru
        _
    $region12: #{gwnet_forward.1} parent=5 // pred_fallthru
      _
    %p449 = scmp.lt.s32.totalorder %s22, 2
    // Predicated region
    $region73: #{gwnet_forward.1} parent=5 // pred_check
      %p450 = pneg %p449
    $region74: #{gwnet_forward.1} parent=5 // pred_check_branch
      %452 = sbr.rel (%p450) target = $region76
    $region75: #{gwnet_forward.1} parent=5 // pred_region
      // Predicated region
      $region77: #{gwnet_forward.1} parent=75 // pred_check
        %p453 = pneg %p42
      $region78: #{gwnet_forward.1} parent=75 // pred_check_branch
        %455 = sbr.rel (%p453) target = $region80
      $region79: #{gwnet_forward.1} parent=75 // pred_region
        %p456 = scmp.lt.s32.totalorder %s22, 1
        %s457 = scalar_select %p456, %s22, 1
        %s458 = smul.addr %s457, 14
        %s459 = smul.addr %s458, 4
        %s460 = scalar_lea.vmem %s0, %s459
      $region80: #{gwnet_forward.1} parent=75 // pred_fallthru
        _
    $region76: #{gwnet_forward.1} parent=5 // pred_fallthru
      _
    %p461 = scmp.le.s32.totalorder 1, %s22
    %p462 = scmp.lt.s32.totalorder %s22, 3
    %p463 = pnand %p461, %p462
    %p464 = pneg %p463
    // Predicated region
    $region81: #{gwnet_forward.1} parent=5 // pred_check
      _
    $region82: #{gwnet_forward.1} parent=5 // pred_check_branch
      %466 = sbr.rel (%p463) target = $region84
    $region83: #{gwnet_forward.1} parent=5 // pred_region
      %s467 = ssub.s32 %s22, 1
      %p468 = scmp.lt.s32.totalorder %s27, 1
      %s469 = scalar_select %p468, %s27, 1
      %s470 = smul.addr %s469, 14
      %s471 = smul.addr %s470, 4
      %s472 = scalar_lea.vmem %s0, %s471
      %p473 = pneg %p48
      %p474 = pneg %p45
      %p475 = pneg %p69
      %p476 = pneg %p66
      %p477 = pneg %p90
      %p478 = pneg %p87
      %p479 = pneg %p111
      %p480 = pneg %p108
      %p481 = pneg %p132
      %p482 = pneg %p129
      %p483 = pneg %p153
      %p484 = pneg %p150
      %p485 = pneg %p174
      %p486 = pneg %p171
      %p487 = pneg %p195
      %p488 = pneg %p192
      %p489 = pneg %p216
      %p490 = pneg %p213
      %p491 = pneg %p237
      %p492 = pneg %p234
      %p493 = pneg %p258
      %p494 = pneg %p255
      %p495 = pneg %p279
      %p496 = pneg %p276
      %p497 = pneg %p300
      %p498 = pneg %p297
      %p499 = pneg %p321
      %p500 = pneg %p318
      %p501 = pneg %p342
      %p502 = pneg %p339
      %p503 = pneg %p363
      %p504 = pneg %p360
      %p505 = pneg %p389
      %p506 = pneg %p386
      %p507 = scmp.lt.s32.totalorder %s27, 1
      %s508 = scalar_select %p507, %s27, 1
      %s509 = smul.addr %s508, 2
      %s510 = smul.addr %s509, 8
      %s511 = scalar_lea.vmem %s16, %s510
      %p512 = scmp.lt.s32.totalorder %s27, 1
      %s513 = scalar_select %p512, %s27, 1
      %s514 = smul.addr %s513, 14
      %s515 = smul.addr %s514, 4
      %s516 = scalar_lea.vmem %s0, %s515
      %p517 = scmp.lt.s32.totalorder %s27, 1
      %s518 = scalar_select %p517, %s27, 1
      %s519 = smul.addr %s518, 2
      %s520 = smul.addr %s519, 8
      %s521 = scalar_lea.vmem %s16, %s520
      %v523 = vld [vmem:[%s516] sm:$0xf]
      %v524 = vld [vmem:[%s516 + $0x4] sm:$0xf]
      %v525 = vld [vmem:[%s516 + $0x8] sm:$0xf]
      %v526 = vld [vmem:[%s516 + $0xc] sm:$0xf]
      %v527 = vld [vmem:[%s516 + $0x10] sm:$0xf]
      %v528 = vld [vmem:[%s516 + $0x14] sm:$0xf]
      %v529 = vld [vmem:[%s516 + $0x18] sm:$0xf]
      %v530 = vld [vmem:[%s516 + $0x1c] sm:$0xf]
      %v531 = vld [vmem:[%s516 + $0x20] sm:$0xf]
      %v532 = vld [vmem:[%s516 + $0x24] sm:$0xf]
      %v533 = vld [vmem:[%s516 + $0x28] sm:$0xf]
      %v534 = vld [vmem:[%s516 + $0x2c] sm:$0xf]
      %v535 = vld [vmem:[%s516 + $0x30] sm:$0xf]
      %v536 = vld [vmem:[%s516 + $0x34] sm:$0xf]
      %v537 = vld [vmem:[%s2] sm:$0xf]
      %v538 = vld [vmem:[%s3] sm:$0x1]
      %v540 = vperm.slane %v538, 0
      %v556 = vunpack.c.l.b16 %v523
      %v557 = vunpack.c.l.b16 %v524
      %v558 = vunpack.c.l.b16 %v525
      %v559 = vunpack.c.l.b16 %v526
      %v560 = vunpack.c.l.b16 %v527
      %v561 = vunpack.c.l.b16 %v528
      %v562 = vunpack.c.l.b16 %v529
      %v563 = vunpack.c.l.b16 %v530
      %v564 = vunpack.c.l.b16 %v531
      %v565 = vunpack.c.l.b16 %v532
      %v566 = vunpack.c.l.b16 %v533
      %v567 = vunpack.c.l.b16 %v534
      %v568 = vunpack.c.l.b16 %v535
      %v569 = vunpack.c.l.b16 %v536
      %v570 = vpack.c.b16 %v557, %v556
      %v571 = vpack.c.b16 %v559, %v558
      %v572 = vpack.c.b16 %v561, %v560
      %v573 = vpack.c.b16 %v563, %v562
      %v574 = vpack.c.b16 %v565, %v564
      %v575 = vpack.c.b16 %v567, %v566
      %v576 = vpack.c.b16 %v569, %v568
      %vm577 = vcmask 64512
      %v579 = vsel %vm577, %v570, 0
      %v582 = vsel %vm577, %v571, 0
      %v585 = vsel %vm577, %v572, 0
      %v588 = vsel %vm577, %v573, 0
      %v591 = vsel %vm577, %v574, 0
      %v594 = vsel %vm577, %v575, 0
      %v597 = vsel %vm577, %v576, 0
      %vm599 = vcmask 1043456
      %v601 = vsel %vm599, %v537, 0
      %603 = vmatpush.bf16.msra.mxu0 0
      %604 = vmatpush.bf16.msra.mxu0 0
      %605 = vmatpush.bf16.msra.mxu0 0
      %606 = vmatpush.bf16.msra.mxu0 0
      %607 = vmatpush.bf16.msra.mxu0 0
      %608 = vmatpush.bf16.msra.mxu0 0
      %609 = vmatpush.bf16.msra.mxu0 0
      %610 = vmatpush.bf16.msra.mxu0 %v601
      %611 = vmatmul.bf16.gmra.mxu0 %v579
      %v612 = vpop.f32.mrf.mxu0
      %v613 = vadd.f32 %v540, %v612
      %v614 = vpop.f32.mrf.mxu0
      %v615 = vadd.f32 %v540, %v614
      %616 = vmatmul.bf16.gmra.mxu0 %v582
      %v617 = vpop.f32.mrf.mxu0
      %v618 = vadd.f32 %v540, %v617
      %v619 = vpop.f32.mrf.mxu0
      %v620 = vadd.f32 %v540, %v619
      %621 = vmatmul.bf16.gmra.mxu0 %v585
      %v622 = vpop.f32.mrf.mxu0
      %v623 = vadd.f32 %v540, %v622
      %v624 = vpop.f32.mrf.mxu0
      %v625 = vadd.f32 %v540, %v624
      %626 = vmatmul.bf16.gmra.mxu0 %v588
      %v627 = vpop.f32.mrf.mxu0
      %v628 = vadd.f32 %v540, %v627
      %v629 = vpop.f32.mrf.mxu0
      %v630 = vadd.f32 %v540, %v629
      %631 = vmatmul.bf16.gmra.mxu0 %v591
      %v632 = vpop.f32.mrf.mxu0
      %v633 = vadd.f32 %v540, %v632
      %v634 = vpop.f32.mrf.mxu0
      %v635 = vadd.f32 %v540, %v634
      %636 = vmatmul.bf16.gmra.mxu0 %v594
      %v637 = vpop.f32.mrf.mxu0
      %v638 = vadd.f32 %v540, %v637
      %v639 = vpop.f32.mrf.mxu0
      %v640 = vadd.f32 %v540, %v639
      %641 = vmatmul.bf16.gmra.mxu0 %v597
      %v642 = vpop.f32.mrf.mxu0
      %v643 = vadd.f32 %v540, %v642
      %v644 = vpop.f32.mrf.mxu0
      %v645 = vadd.f32 %v540, %v644
      %646 = vdwg.mxu0
      %v647 = vld [vmem:[%s1] sm:$0xf]
      %v648 = vld [vmem:[%s1 + $0x4] sm:$0xf]
      %v649 = vld [vmem:[%s1 + $0x8] sm:$0xf]
      %v650 = vld [vmem:[%s1 + $0xc] sm:$0xf]
      %v651 = vld [vmem:[%s1 + $0x10] sm:$0xf]
      %v652 = vld [vmem:[%s1 + $0x14] sm:$0xf]
      %v653 = vld [vmem:[%s1 + $0x18] sm:$0xf]
      %v654 = vld [vmem:[%s1 + $0x1c] sm:$0xf]
      %v655 = vld [vmem:[%s1 + $0x20] sm:$0xf]
      %v656 = vld [vmem:[%s1 + $0x24] sm:$0xf]
      %v657 = vld [vmem:[%s1 + $0x28] sm:$0xf]
      %v658 = vld [vmem:[%s1 + $0x2c] sm:$0xf]
      %v659 = vld [vmem:[%s1 + $0x30] sm:$0xf]
      %v660 = vld [vmem:[%s1 + $0x34] sm:$0xf]
      %v661 = vpack.c.bf16 %v615, %v613
      %v662 = vpack.c.bf16 %v620, %v618
      %v663 = vpack.c.bf16 %v625, %v623
      %v664 = vpack.c.bf16 %v630, %v628
      %v665 = vpack.c.bf16 %v635, %v633
      %v666 = vpack.c.bf16 %v640, %v638
      %v667 = vpack.c.bf16 %v645, %v643
      %v668 = vld [vmem:[%s4] sm:$0xf]
      %v669 = vld [vmem:[%s4 + $0x4] sm:$0xf]
      %v670 = vld [vmem:[%s4 + $0x8] sm:$0xf]
      %v671 = vld [vmem:[%s4 + $0xc] sm:$0xf]
      %v676 = vunpack.c.l.b16 %v668
      %v677 = vunpack.c.l.b16 %v669
      %v678 = vunpack.c.l.b16 %v670
      %v679 = vunpack.c.l.b16 %v671
      %v680 = vpack.c.b16 %v677, %v676
      %v681 = vpack.c.b16 %v679, %v678
      %vm684 = vcmask 261120
      %v686 = vsel %vm684, %v661, 0
      %v689 = vsel %vm684, %v662, 0
      %v692 = vsel %vm684, %v663, 0
      %v695 = vsel %vm684, %v664, 0
      %v698 = vsel %vm684, %v665, 0
      %v701 = vsel %vm684, %v666, 0
      %v704 = vsel %vm684, %v667, 0
      %706 = vmatpush.bf16.msra.mxu0 0
      %707 = vmatpush.bf16.msra.mxu0 0
      %708 = vmatpush.bf16.msra.mxu0 0
      %709 = vmatpush.bf16.msra.mxu0 0
      %710 = vmatpush.bf16.msra.mxu0 0
      %711 = vmatpush.bf16.msra.mxu0 0
      %712 = vmatpush.bf16.msra.mxu0 %v681
      %713 = vmatpush.bf16.msra.mxu0 %v680
      %714 = vmatmul.bf16.gmra.mxu0 %v686
      %v715 = vpop.f32.mrf.mxu0
      %v716 = vadd.f32 0.0, %v715
      %v717 = vpop.f32.mrf.mxu0
      %v718 = vadd.f32 0.0, %v717
      %719 = vmatmul.bf16.gmra.mxu0 %v689
      %v720 = vpop.f32.mrf.mxu0
      %v721 = vadd.f32 0.0, %v720
      %v722 = vpop.f32.mrf.mxu0
      %v723 = vadd.f32 0.0, %v722
      %724 = vmatmul.bf16.gmra.mxu0 %v692
      %v725 = vpop.f32.mrf.mxu0
      %v726 = vadd.f32 0.0, %v725
      %v727 = vpop.f32.mrf.mxu0
      %v728 = vadd.f32 0.0, %v727
      %729 = vmatmul.bf16.gmra.mxu0 %v695
      %v730 = vpop.f32.mrf.mxu0
      %v731 = vadd.f32 0.0, %v730
      %v732 = vpop.f32.mrf.mxu0
      %v733 = vadd.f32 0.0, %v732
      %734 = vmatmul.bf16.gmra.mxu0 %v698
      %v735 = vpop.f32.mrf.mxu0
      %v736 = vadd.f32 0.0, %v735
      %v737 = vpop.f32.mrf.mxu0
      %v738 = vadd.f32 0.0, %v737
      %739 = vmatmul.bf16.gmra.mxu0 %v701
      %v740 = vpop.f32.mrf.mxu0
      %v741 = vadd.f32 0.0, %v740
      %v742 = vpop.f32.mrf.mxu0
      %v743 = vadd.f32 0.0, %v742
      %744 = vmatmul.bf16.gmra.mxu0 %v704
      %v745 = vpop.f32.mrf.mxu0
      %v746 = vadd.f32 0.0, %v745
      %v747 = vpop.f32.mrf.mxu0
      %v748 = vadd.f32 0.0, %v747
      %749 = vdwg.mxu0
      %764 = vrot.lane.b32.xlu0 %v716, 64
      %v765 = vpop.permute.xlu0 %764
      %766 = vrot.lane.b32.xlu0 %v718, 64
      %v767 = vpop.permute.xlu0 %766
      %768 = vrot.lane.b32.xlu0 %v721, 64
      %v769 = vpop.permute.xlu0 %768
      %770 = vrot.lane.b32.xlu0 %v723, 64
      %v771 = vpop.permute.xlu0 %770
      %772 = vrot.lane.b32.xlu0 %v726, 64
      %v773 = vpop.permute.xlu0 %772
      %774 = vrot.lane.b32.xlu0 %v728, 64
      %v775 = vpop.permute.xlu0 %774
      %776 = vrot.lane.b32.xlu0 %v731, 64
      %v777 = vpop.permute.xlu0 %776
      %778 = vrot.lane.b32.xlu0 %v733, 64
      %v779 = vpop.permute.xlu0 %778
      %780 = vrot.lane.b32.xlu0 %v736, 64
      %v781 = vpop.permute.xlu0 %780
      %782 = vrot.lane.b32.xlu0 %v738, 64
      %v783 = vpop.permute.xlu0 %782
      %784 = vrot.lane.b32.xlu0 %v741, 64
      %v785 = vpop.permute.xlu0 %784
      %786 = vrot.lane.b32.xlu0 %v743, 64
      %v787 = vpop.permute.xlu0 %786
      %788 = vrot.lane.b32.xlu0 %v746, 64
      %v789 = vpop.permute.xlu0 %788
      %790 = vrot.lane.b32.xlu0 %v748, 64
      %v791 = vpop.permute.xlu0 %790
      %v806 = vadd.f32 %v746, %v765
      %v807 = vadd.f32 %v748, %v767
      %v808 = vadd.f32 %v716, %v769
      %v809 = vadd.f32 %v718, %v771
      %v810 = vadd.f32 %v721, %v773
      %v811 = vadd.f32 %v723, %v775
      %v812 = vadd.f32 %v726, %v777
      %v813 = vadd.f32 %v728, %v779
      %v814 = vadd.f32 %v731, %v781
      %v815 = vadd.f32 %v733, %v783
      %v816 = vadd.f32 %v736, %v785
      %v817 = vadd.f32 %v738, %v787
      %v818 = vadd.f32 %v741, %v789
      %v819 = vadd.f32 %v743, %v791
      %v820 = vld [vmem:[%s5] sm:$0x1]
      %v822 = vperm.slane %v820, 0
      %v824 = vadd.f32 %v806, %v822
      %v825 = vadd.f32 %v807, %v822
      %v826 = vadd.f32 %v808, %v822
      %v827 = vadd.f32 %v809, %v822
      %v828 = vadd.f32 %v810, %v822
      %v829 = vadd.f32 %v811, %v822
      %v830 = vadd.f32 %v812, %v822
      %v831 = vadd.f32 %v813, %v822
      %v832 = vadd.f32 %v814, %v822
      %v833 = vadd.f32 %v815, %v822
      %v834 = vadd.f32 %v816, %v822
      %v835 = vadd.f32 %v817, %v822
      %v836 = vadd.f32 %v818, %v822
      %v837 = vadd.f32 %v819, %v822
      %v838 = vtanh.pop %v824
      %v839 = vtanh.pop %v825
      %v840 = vtanh.pop %v826
      %v841 = vtanh.pop %v827
      %v842 = vtanh.pop %v828
      %v843 = vtanh.pop %v829
      %v844 = vtanh.pop %v830
      %v845 = vtanh.pop %v831
      %v846 = vtanh.pop %v832
      %v847 = vtanh.pop %v833
      %v848 = vtanh.pop %v834
      %v849 = vtanh.pop %v835
      %v850 = vtanh.pop %v836
      %v851 = vtanh.pop %v837
      %v852 = vxor.u32 %v824, 2147483648
      %v853 = vxor.u32 %v825, 2147483648
      %v854 = vxor.u32 %v826, 2147483648
      %v855 = vxor.u32 %v827, 2147483648
      %v856 = vxor.u32 %v828, 2147483648
      %v857 = vxor.u32 %v829, 2147483648
      %v858 = vxor.u32 %v830, 2147483648
      %v859 = vxor.u32 %v831, 2147483648
      %v860 = vxor.u32 %v832, 2147483648
      %v861 = vxor.u32 %v833, 2147483648
      %v862 = vxor.u32 %v834, 2147483648
      %v863 = vxor.u32 %v835, 2147483648
      %v864 = vxor.u32 %v836, 2147483648
      %v865 = vxor.u32 %v837, 2147483648
      %v866 = vmul.f32 %v852, 1.442695
      %v867 = vpow.pop %v866
      %v868 = vmul.f32 %v853, 1.442695
      %v869 = vpow.pop %v868
      %v870 = vmul.f32 %v854, 1.442695
      %v871 = vpow.pop %v870
      %v872 = vmul.f32 %v855, 1.442695
      %v873 = vpow.pop %v872
      %v874 = vmul.f32 %v856, 1.442695
      %v875 = vpow.pop %v874
      %v876 = vmul.f32 %v857, 1.442695
      %v877 = vpow.pop %v876
      %v878 = vmul.f32 %v858, 1.442695
      %v879 = vpow.pop %v878
      %v880 = vmul.f32 %v859, 1.442695
      %v881 = vpow.pop %v880
      %v882 = vmul.f32 %v860, 1.442695
      %v883 = vpow.pop %v882
      %v884 = vmul.f32 %v861, 1.442695
      %v885 = vpow.pop %v884
      %v886 = vmul.f32 %v862, 1.442695
      %v887 = vpow.pop %v886
      %v888 = vmul.f32 %v863, 1.442695
      %v889 = vpow.pop %v888
      %v890 = vmul.f32 %v864, 1.442695
      %v891 = vpow.pop %v890
      %v892 = vmul.f32 %v865, 1.442695
      %v893 = vpow.pop %v892
      %v894 = vadd.f32 %v867, 1.0
      %v895 = vadd.f32 %v869, 1.0
      %v896 = vadd.f32 %v871, 1.0
      %v897 = vadd.f32 %v873, 1.0
      %v898 = vadd.f32 %v875, 1.0
      %v899 = vadd.f32 %v877, 1.0
      %v900 = vadd.f32 %v879, 1.0
      %v901 = vadd.f32 %v881, 1.0
      %v902 = vadd.f32 %v883, 1.0
      %v903 = vadd.f32 %v885, 1.0
      %v904 = vadd.f32 %v887, 1.0
      %v905 = vadd.f32 %v889, 1.0
      %v906 = vadd.f32 %v891, 1.0
      %v907 = vadd.f32 %v893, 1.0
      %v908 = vrcp.pop %v894
      %v909 = vmul.f32 %v894, %v908
      %v910 = vsub.f32 1.0, %v909
      %v911 = vmul.f32 %v908, %v910
      %v912 = vadd.f32 %v908, %v911
      %vm913 = vweird.f32 %v894
      %vm914 = vweird.f32 %v908
      %vm915 = vmor %vm913, %vm914
      %v916 = vsel %vm915, %v908, %v912
      %v917 = vand.u32 2147483647, %v894
      %vm918 = vcmp.eq.f32.partialorder %v917, 8.507059e+37
      %v919 = vand.u32 %v894, 2147483648
      %v920 = vor.u32 1.1754944e-38, %v919
      %v921 = vsel %vm918, %v920, %v916
      %v922 = vmul.f32 1.0, %v921
      %v923 = vrcp.pop %v895
      %v924 = vmul.f32 %v895, %v923
      %v925 = vsub.f32 1.0, %v924
      %v926 = vmul.f32 %v923, %v925
      %v927 = vadd.f32 %v923, %v926
      %vm928 = vweird.f32 %v895
      %vm929 = vweird.f32 %v923
      %vm930 = vmor %vm928, %vm929
      %v931 = vsel %vm930, %v923, %v927
      %v932 = vand.u32 2147483647, %v895
      %vm933 = vcmp.eq.f32.partialorder %v932, 8.507059e+37
      %v934 = vand.u32 %v895, 2147483648
      %v935 = vor.u32 1.1754944e-38, %v934
      %v936 = vsel %vm933, %v935, %v931
      %v937 = vmul.f32 1.0, %v936
      %v938 = vrcp.pop %v896
      %v939 = vmul.f32 %v896, %v938
      %v940 = vsub.f32 1.0, %v939
      %v941 = vmul.f32 %v938, %v940
      %v942 = vadd.f32 %v938, %v941
      %vm943 = vweird.f32 %v896
      %vm944 = vweird.f32 %v938
      %vm945 = vmor %vm943, %vm944
      %v946 = vsel %vm945, %v938, %v942
      %v947 = vand.u32 2147483647, %v896
      %vm948 = vcmp.eq.f32.partialorder %v947, 8.507059e+37
      %v949 = vand.u32 %v896, 2147483648
      %v950 = vor.u32 1.1754944e-38, %v949
      %v951 = vsel %vm948, %v950, %v946
      %v952 = vmul.f32 1.0, %v951
      %v953 = vrcp.pop %v897
      %v954 = vmul.f32 %v897, %v953
      %v955 = vsub.f32 1.0, %v954
      %v956 = vmul.f32 %v953, %v955
      %v957 = vadd.f32 %v953, %v956
      %vm958 = vweird.f32 %v897
      %vm959 = vweird.f32 %v953
      %vm960 = vmor %vm958, %vm959
      %v961 = vsel %vm960, %v953, %v957
      %v962 = vand.u32 2147483647, %v897
      %vm963 = vcmp.eq.f32.partialorder %v962, 8.507059e+37
      %v964 = vand.u32 %v897, 2147483648
      %v965 = vor.u32 1.1754944e-38, %v964
      %v966 = vsel %vm963, %v965, %v961
      %v967 = vmul.f32 1.0, %v966
      %v968 = vrcp.pop %v898
      %v969 = vmul.f32 %v898, %v968
      %v970 = vsub.f32 1.0, %v969
      %v971 = vmul.f32 %v968, %v970
      %v972 = vadd.f32 %v968, %v971
      %vm973 = vweird.f32 %v898
      %vm974 = vweird.f32 %v968
      %vm975 = vmor %vm973, %vm974
      %v976 = vsel %vm975, %v968, %v972
      %v977 = vand.u32 2147483647, %v898
      %vm978 = vcmp.eq.f32.partialorder %v977, 8.507059e+37
      %v979 = vand.u32 %v898, 2147483648
      %v980 = vor.u32 1.1754944e-38, %v979
      %v981 = vsel %vm978, %v980, %v976
      %v982 = vmul.f32 1.0, %v981
      %v983 = vrcp.pop %v899
      %v984 = vmul.f32 %v899, %v983
      %v985 = vsub.f32 1.0, %v984
      %v986 = vmul.f32 %v983, %v985
      %v987 = vadd.f32 %v983, %v986
      %vm988 = vweird.f32 %v899
      %vm989 = vweird.f32 %v983
      %vm990 = vmor %vm988, %vm989
      %v991 = vsel %vm990, %v983, %v987
      %v992 = vand.u32 2147483647, %v899
      %vm993 = vcmp.eq.f32.partialorder %v992, 8.507059e+37
      %v994 = vand.u32 %v899, 2147483648
      %v995 = vor.u32 1.1754944e-38, %v994
      %v996 = vsel %vm993, %v995, %v991
      %v997 = vmul.f32 1.0, %v996
      %v998 = vrcp.pop %v900
      %v999 = vmul.f32 %v900, %v998
      %v1000 = vsub.f32 1.0, %v999
      %v1001 = vmul.f32 %v998, %v1000
      %v1002 = vadd.f32 %v998, %v1001
      %vm1003 = vweird.f32 %v900
      %vm1004 = vweird.f32 %v998
      %vm1005 = vmor %vm1003, %vm1004
      %v1006 = vsel %vm1005, %v998, %v1002
      %v1007 = vand.u32 2147483647, %v900
      %vm1008 = vcmp.eq.f32.partialorder %v1007, 8.507059e+37
      %v1009 = vand.u32 %v900, 2147483648
      %v1010 = vor.u32 1.1754944e-38, %v1009
      %v1011 = vsel %vm1008, %v1010, %v1006
      %v1012 = vmul.f32 1.0, %v1011
      %v1013 = vrcp.pop %v901
      %v1014 = vmul.f32 %v901, %v1013
      %v1015 = vsub.f32 1.0, %v1014
      %v1016 = vmul.f32 %v1013, %v1015
      %v1017 = vadd.f32 %v1013, %v1016
      %vm1018 = vweird.f32 %v901
      %vm1019 = vweird.f32 %v1013
      %vm1020 = vmor %vm1018, %vm1019
      %v1021 = vsel %vm1020, %v1013, %v1017
      %v1022 = vand.u32 2147483647, %v901
      %vm1023 = vcmp.eq.f32.partialorder %v1022, 8.507059e+37
      %v1024 = vand.u32 %v901, 2147483648
      %v1025 = vor.u32 1.1754944e-38, %v1024
      %v1026 = vsel %vm1023, %v1025, %v1021
      %v1027 = vmul.f32 1.0, %v1026
      %v1028 = vrcp.pop %v902
      %v1029 = vmul.f32 %v902, %v1028
      %v1030 = vsub.f32 1.0, %v1029
      %v1031 = vmul.f32 %v1028, %v1030
      %v1032 = vadd.f32 %v1028, %v1031
      %vm1033 = vweird.f32 %v902
      %vm1034 = vweird.f32 %v1028
      %vm1035 = vmor %vm1033, %vm1034
      %v1036 = vsel %vm1035, %v1028, %v1032
      %v1037 = vand.u32 2147483647, %v902
      %vm1038 = vcmp.eq.f32.partialorder %v1037, 8.507059e+37
      %v1039 = vand.u32 %v902, 2147483648
      %v1040 = vor.u32 1.1754944e-38, %v1039
      %v1041 = vsel %vm1038, %v1040, %v1036
      %v1042 = vmul.f32 1.0, %v1041
      %v1043 = vrcp.pop %v903
      %v1044 = vmul.f32 %v903, %v1043
      %v1045 = vsub.f32 1.0, %v1044
      %v1046 = vmul.f32 %v1043, %v1045
      %v1047 = vadd.f32 %v1043, %v1046
      %vm1048 = vweird.f32 %v903
      %vm1049 = vweird.f32 %v1043
      %vm1050 = vmor %vm1048, %vm1049
      %v1051 = vsel %vm1050, %v1043, %v1047
      %v1052 = vand.u32 2147483647, %v903
      %vm1053 = vcmp.eq.f32.partialorder %v1052, 8.507059e+37
      %v1054 = vand.u32 %v903, 2147483648
      %v1055 = vor.u32 1.1754944e-38, %v1054
      %v1056 = vsel %vm1053, %v1055, %v1051
      %v1057 = vmul.f32 1.0, %v1056
      %v1058 = vrcp.pop %v904
      %v1059 = vmul.f32 %v904, %v1058
      %v1060 = vsub.f32 1.0, %v1059
      %v1061 = vmul.f32 %v1058, %v1060
      %v1062 = vadd.f32 %v1058, %v1061
      %vm1063 = vweird.f32 %v904
      %vm1064 = vweird.f32 %v1058
      %vm1065 = vmor %vm1063, %vm1064
      %v1066 = vsel %vm1065, %v1058, %v1062
      %v1067 = vand.u32 2147483647, %v904
      %vm1068 = vcmp.eq.f32.partialorder %v1067, 8.507059e+37
      %v1069 = vand.u32 %v904, 2147483648
      %v1070 = vor.u32 1.1754944e-38, %v1069
      %v1071 = vsel %vm1068, %v1070, %v1066
      %v1072 = vmul.f32 1.0, %v1071
      %v1073 = vrcp.pop %v905
      %v1074 = vmul.f32 %v905, %v1073
      %v1075 = vsub.f32 1.0, %v1074
      %v1076 = vmul.f32 %v1073, %v1075
      %v1077 = vadd.f32 %v1073, %v1076
      %vm1078 = vweird.f32 %v905
      %vm1079 = vweird.f32 %v1073
      %vm1080 = vmor %vm1078, %vm1079
      %v1081 = vsel %vm1080, %v1073, %v1077
      %v1082 = vand.u32 2147483647, %v905
      %vm1083 = vcmp.eq.f32.partialorder %v1082, 8.507059e+37
      %v1084 = vand.u32 %v905, 2147483648
      %v1085 = vor.u32 1.1754944e-38, %v1084
      %v1086 = vsel %vm1083, %v1085, %v1081
      %v1087 = vmul.f32 1.0, %v1086
      %v1088 = vrcp.pop %v906
      %v1089 = vmul.f32 %v906, %v1088
      %v1090 = vsub.f32 1.0, %v1089
      %v1091 = vmul.f32 %v1088, %v1090
      %v1092 = vadd.f32 %v1088, %v1091
      %vm1093 = vweird.f32 %v906
      %vm1094 = vweird.f32 %v1088
      %vm1095 = vmor %vm1093, %vm1094
      %v1096 = vsel %vm1095, %v1088, %v1092
      %v1097 = vand.u32 2147483647, %v906
      %vm1098 = vcmp.eq.f32.partialorder %v1097, 8.507059e+37
      %v1099 = vand.u32 %v906, 2147483648
      %v1100 = vor.u32 1.1754944e-38, %v1099
      %v1101 = vsel %vm1098, %v1100, %v1096
      %v1102 = vmul.f32 1.0, %v1101
      %v1103 = vrcp.pop %v907
      %v1104 = vmul.f32 %v907, %v1103
      %v1105 = vsub.f32 1.0, %v1104
      %v1106 = vmul.f32 %v1103, %v1105
      %v1107 = vadd.f32 %v1103, %v1106
      %vm1108 = vweird.f32 %v907
      %vm1109 = vweird.f32 %v1103
      %vm1110 = vmor %vm1108, %vm1109
      %v1111 = vsel %vm1110, %v1103, %v1107
      %v1112 = vand.u32 2147483647, %v907
      %vm1113 = vcmp.eq.f32.partialorder %v1112, 8.507059e+37
      %v1114 = vand.u32 %v907, 2147483648
      %v1115 = vor.u32 1.1754944e-38, %v1114
      %v1116 = vsel %vm1113, %v1115, %v1111
      %v1117 = vmul.f32 1.0, %v1116
      %1132 = vrot.lane.b32.xlu0 %v922, 96
      %v1133 = vpop.permute.xlu0 %1132
      %1134 = vrot.lane.b32.xlu0 %v937, 96
      %v1135 = vpop.permute.xlu0 %1134
      %1136 = vrot.lane.b32.xlu0 %v952, 96
      %v1137 = vpop.permute.xlu0 %1136
      %1138 = vrot.lane.b32.xlu0 %v967, 96
      %v1139 = vpop.permute.xlu0 %1138
      %1140 = vrot.lane.b32.xlu0 %v982, 96
      %v1141 = vpop.permute.xlu0 %1140
      %1142 = vrot.lane.b32.xlu0 %v997, 96
      %v1143 = vpop.permute.xlu0 %1142
      %1144 = vrot.lane.b32.xlu0 %v1012, 96
      %v1145 = vpop.permute.xlu0 %1144
      %1146 = vrot.lane.b32.xlu0 %v1027, 96
      %v1147 = vpop.permute.xlu0 %1146
      %1148 = vrot.lane.b32.xlu0 %v1042, 96
      %v1149 = vpop.permute.xlu0 %1148
      %1150 = vrot.lane.b32.xlu0 %v1057, 96
      %v1151 = vpop.permute.xlu0 %1150
      %1152 = vrot.lane.b32.xlu0 %v1072, 96
      %v1153 = vpop.permute.xlu0 %1152
      %1154 = vrot.lane.b32.xlu0 %v1087, 96
      %v1155 = vpop.permute.xlu0 %1154
      %1156 = vrot.lane.b32.xlu0 %v1102, 96
      %v1157 = vpop.permute.xlu0 %1156
      %1158 = vrot.lane.b32.xlu0 %v1117, 96
      %v1159 = vpop.permute.xlu0 %1158
      %v1174 = vmul.f32 %v838, %v1133
      %v1175 = vmul.f32 %v839, %v1135
      %v1176 = vmul.f32 %v840, %v1137
      %v1177 = vmul.f32 %v841, %v1139
      %v1178 = vmul.f32 %v842, %v1141
      %v1179 = vmul.f32 %v843, %v1143
      %v1180 = vmul.f32 %v844, %v1145
      %v1181 = vmul.f32 %v845, %v1147
      %v1182 = vmul.f32 %v846, %v1149
      %v1183 = vmul.f32 %v847, %v1151
      %v1184 = vmul.f32 %v848, %v1153
      %v1185 = vmul.f32 %v849, %v1155
      %v1186 = vmul.f32 %v850, %v1157
      %v1187 = vmul.f32 %v851, %v1159
      %v1188 = vpack.c.bf16 %v1174, %v1174
      %v1189 = vpack.c.bf16 %v1175, %v1175
      %v1190 = vpack.c.bf16 %v1176, %v1176
      %v1191 = vpack.c.bf16 %v1177, %v1177
      %v1192 = vpack.c.bf16 %v1178, %v1178
      %v1193 = vpack.c.bf16 %v1179, %v1179
      %v1194 = vpack.c.bf16 %v1180, %v1180
      %v1195 = vpack.c.bf16 %v1181, %v1181
      %v1196 = vpack.c.bf16 %v1182, %v1182
      %v1197 = vpack.c.bf16 %v1183, %v1183
      %v1198 = vpack.c.bf16 %v1184, %v1184
      %v1199 = vpack.c.bf16 %v1185, %v1185
      %v1200 = vpack.c.bf16 %v1186, %v1186
      %v1201 = vpack.c.bf16 %v1187, %v1187
      %v1204 = vunpack.c.l.b16 %v647
      %v1205 = vunpack.c.l.b16 %v648
      %v1206 = vpack.c.b16 %v1205, %v1204
      %v1209 = vunpack.c.l.b16 %v1188
      %v1210 = vunpack.c.l.b16 %v1189
      %v1211 = vpack.c.b16 %v1210, %v1209
      %vm1213 = vcmask 130048
      %v1215 = vsel %vm1213, %v1206, 0
      %1217 = vmatpush.bf16.msra.mxu0 0
      %1218 = vmatpush.bf16.msra.mxu0 0
      %1219 = vmatpush.bf16.msra.mxu0 0
      %1220 = vmatpush.bf16.msra.mxu0 0
      %1221 = vmatpush.bf16.msra.mxu0 0
      %1222 = vmatpush.bf16.msra.mxu0 0
      %1223 = vmatpush.bf16.msra.mxu0 0
      %1224 = vmatpush.bf16.msra.mxu0 %v1211
      %1225 = vmatmul.bf16.gmra.mxu0 %v1215
      %v1226 = vpop.f32.mrf.mxu0
      %v1227 = vadd.f32 0.0, %v1226
      %v1228 = vpop.f32.mrf.mxu0
      %v1229 = vadd.f32 0.0, %v1228
      %1230 = vdwg.mxu0
      %v1233 = vunpack.c.l.b16 %v649
      %v1234 = vunpack.c.l.b16 %v650
      %v1235 = vpack.c.b16 %v1234, %v1233
      %v1238 = vunpack.c.l.b16 %v1190
      %v1239 = vunpack.c.l.b16 %v1191
      %v1240 = vpack.c.b16 %v1239, %v1238
      %v1243 = vsel %vm1213, %v1235, 0
      %1245 = vmatpush.bf16.msra.mxu0 0
      %1246 = vmatpush.bf16.msra.mxu0 0
      %1247 = vmatpush.bf16.msra.mxu0 0
      %1248 = vmatpush.bf16.msra.mxu0 0
      %1249 = vmatpush.bf16.msra.mxu0 0
      %1250 = vmatpush.bf16.msra.mxu0 0
      %1251 = vmatpush.bf16.msra.mxu0 0
      %1252 = vmatpush.bf16.msra.mxu0 %v1240
      %1253 = vmatmul.bf16.gmra.mxu0 %v1243
      %v1254 = vpop.f32.mrf.mxu0
      %v1255 = vadd.f32 0.0, %v1254
      %v1256 = vpop.f32.mrf.mxu0
      %v1257 = vadd.f32 0.0, %v1256
      %1258 = vdwg.mxu0
      %v1261 = vunpack.c.l.b16 %v651
      %v1262 = vunpack.c.l.b16 %v652
      %v1263 = vpack.c.b16 %v1262, %v1261
      %v1266 = vunpack.c.l.b16 %v1192
      %v1267 = vunpack.c.l.b16 %v1193
      %v1268 = vpack.c.b16 %v1267, %v1266
      %v1271 = vsel %vm1213, %v1263, 0
      %1273 = vmatpush.bf16.msra.mxu0 0
      %1274 = vmatpush.bf16.msra.mxu0 0
      %1275 = vmatpush.bf16.msra.mxu0 0
      %1276 = vmatpush.bf16.msra.mxu0 0
      %1277 = vmatpush.bf16.msra.mxu0 0
      %1278 = vmatpush.bf16.msra.mxu0 0
      %1279 = vmatpush.bf16.msra.mxu0 0
      %1280 = vmatpush.bf16.msra.mxu0 %v1268
      %1281 = vmatmul.bf16.gmra.mxu0 %v1271
      %v1282 = vpop.f32.mrf.mxu0
      %v1283 = vadd.f32 0.0, %v1282
      %v1284 = vpop.f32.mrf.mxu0
      %v1285 = vadd.f32 0.0, %v1284
      %1286 = vdwg.mxu0
      %v1289 = vunpack.c.l.b16 %v653
      %v1290 = vunpack.c.l.b16 %v654
      %v1291 = vpack.c.b16 %v1290, %v1289
      %v1294 = vunpack.c.l.b16 %v1194
      %v1295 = vunpack.c.l.b16 %v1195
      %v1296 = vpack.c.b16 %v1295, %v1294
      %v1299 = vsel %vm1213, %v1291, 0
      %1301 = vmatpush.bf16.msra.mxu0 0
      %1302 = vmatpush.bf16.msra.mxu0 0
      %1303 = vmatpush.bf16.msra.mxu0 0
      %1304 = vmatpush.bf16.msra.mxu0 0
      %1305 = vmatpush.bf16.msra.mxu0 0
      %1306 = vmatpush.bf16.msra.mxu0 0
      %1307 = vmatpush.bf16.msra.mxu0 0
      %1308 = vmatpush.bf16.msra.mxu0 %v1296
      %1309 = vmatmul.bf16.gmra.mxu0 %v1299
      %v1310 = vpop.f32.mrf.mxu0
      %v1311 = vadd.f32 0.0, %v1310
      %v1312 = vpop.f32.mrf.mxu0
      %v1313 = vadd.f32 0.0, %v1312
      %1314 = vdwg.mxu0
      %v1317 = vunpack.c.l.b16 %v655
      %v1318 = vunpack.c.l.b16 %v656
      %v1319 = vpack.c.b16 %v1318, %v1317
      %v1322 = vunpack.c.l.b16 %v1196
      %v1323 = vunpack.c.l.b16 %v1197
      %v1324 = vpack.c.b16 %v1323, %v1322
      %v1327 = vsel %vm1213, %v1319, 0
      %1329 = vmatpush.bf16.msra.mxu0 0
      %1330 = vmatpush.bf16.msra.mxu0 0
      %1331 = vmatpush.bf16.msra.mxu0 0
      %1332 = vmatpush.bf16.msra.mxu0 0
      %1333 = vmatpush.bf16.msra.mxu0 0
      %1334 = vmatpush.bf16.msra.mxu0 0
      %1335 = vmatpush.bf16.msra.mxu0 0
      %1336 = vmatpush.bf16.msra.mxu0 %v1324
      %1337 = vmatmul.bf16.gmra.mxu0 %v1327
      %v1338 = vpop.f32.mrf.mxu0
      %v1339 = vadd.f32 0.0, %v1338
      %v1340 = vpop.f32.mrf.mxu0
      %v1341 = vadd.f32 0.0, %v1340
      %1342 = vdwg.mxu0
      %v1345 = vunpack.c.l.b16 %v657
      %v1346 = vunpack.c.l.b16 %v658
      %v1347 = vpack.c.b16 %v1346, %v1345
      %v1350 = vunpack.c.l.b16 %v1198
      %v1351 = vunpack.c.l.b16 %v1199
      %v1352 = vpack.c.b16 %v1351, %v1350
      %v1355 = vsel %vm1213, %v1347, 0
      %1357 = vmatpush.bf16.msra.mxu0 0
      %1358 = vmatpush.bf16.msra.mxu0 0
      %1359 = vmatpush.bf16.msra.mxu0 0
      %1360 = vmatpush.bf16.msra.mxu0 0
      %1361 = vmatpush.bf16.msra.mxu0 0
      %1362 = vmatpush.bf16.msra.mxu0 0
      %1363 = vmatpush.bf16.msra.mxu0 0
      %1364 = vmatpush.bf16.msra.mxu0 %v1352
      %1365 = vmatmul.bf16.gmra.mxu0 %v1355
      %v1366 = vpop.f32.mrf.mxu0
      %v1367 = vadd.f32 0.0, %v1366
      %v1368 = vpop.f32.mrf.mxu0
      %v1369 = vadd.f32 0.0, %v1368
      %1370 = vdwg.mxu0
      %v1373 = vunpack.c.l.b16 %v659
      %v1374 = vunpack.c.l.b16 %v660
      %v1375 = vpack.c.b16 %v1374, %v1373
      %v1378 = vunpack.c.l.b16 %v1200
      %v1379 = vunpack.c.l.b16 %v1201
      %v1380 = vpack.c.b16 %v1379, %v1378
      %v1383 = vsel %vm1213, %v1375, 0
      %1385 = vmatpush.bf16.msra.mxu0 0
      %1386 = vmatpush.bf16.msra.mxu0 0
      %1387 = vmatpush.bf16.msra.mxu0 0
      %1388 = vmatpush.bf16.msra.mxu0 0
      %1389 = vmatpush.bf16.msra.mxu0 0
      %1390 = vmatpush.bf16.msra.mxu0 0
      %1391 = vmatpush.bf16.msra.mxu0 0
      %1392 = vmatpush.bf16.msra.mxu0 %v1380
      %1393 = vmatmul.bf16.gmra.mxu0 %v1383
      %v1394 = vpop.f32.mrf.mxu0
      %v1395 = vadd.f32 0.0, %v1394
      %v1396 = vpop.f32.mrf.mxu0
      %v1397 = vadd.f32 0.0, %v1396
      %1398 = vdwg.mxu0
      %v1399 = vpack.c.bf16 %v1227, %v1227
      %v1400 = vpack.c.bf16 %v1229, %v1229
      %v1401 = vpack.c.bf16 %v1255, %v1255
      %v1402 = vpack.c.bf16 %v1257, %v1257
      %v1403 = vpack.c.bf16 %v1283, %v1283
      %v1404 = vpack.c.bf16 %v1285, %v1285
      %v1405 = vpack.c.bf16 %v1311, %v1311
      %v1406 = vpack.c.bf16 %v1313, %v1313
      %v1407 = vpack.c.bf16 %v1339, %v1339
      %v1408 = vpack.c.bf16 %v1341, %v1341
      %v1409 = vpack.c.bf16 %v1367, %v1367
      %v1410 = vpack.c.bf16 %v1369, %v1369
      %v1411 = vpack.c.bf16 %v1395, %v1395
      %v1412 = vpack.c.bf16 %v1397, %v1397
      %v1415 = vunpack.c.l.b16 %v1399
      %v1416 = vunpack.c.l.b16 %v1400
      %v1417 = vpack.c.b16 %v1416, %v1415
      %1419 = vmatpush.bf16.msra.mxu0 0
      %1420 = vmatpush.bf16.msra.mxu0 0
      %1421 = vmatpush.bf16.msra.mxu0 0
      %1422 = vmatpush.bf16.msra.mxu0 0
      %1423 = vmatpush.bf16.msra.mxu0 0
      %1424 = vmatpush.bf16.msra.mxu0 0
      %1425 = vmatpush.bf16.msra.mxu0 0
      %1426 = vmatpush.bf16.msra.mxu0 %v1417
      %1427 = vmatmul.bf16.gmra.mxu0 %v1215
      %v1428 = vpop.f32.mrf.mxu0
      %v1429 = vadd.f32 0.0, %v1428
      %v1430 = vpop.f32.mrf.mxu0
      %v1431 = vadd.f32 0.0, %v1430
      %1432 = vdwg.mxu0
      %v1435 = vunpack.c.l.b16 %v1401
      %v1436 = vunpack.c.l.b16 %v1402
      %v1437 = vpack.c.b16 %v1436, %v1435
      %1439 = vmatpush.bf16.msra.mxu0 0
      %1440 = vmatpush.bf16.msra.mxu0 0
      %1441 = vmatpush.bf16.msra.mxu0 0
      %1442 = vmatpush.bf16.msra.mxu0 0
      %1443 = vmatpush.bf16.msra.mxu0 0
      %1444 = vmatpush.bf16.msra.mxu0 0
      %1445 = vmatpush.bf16.msra.mxu0 0
      %1446 = vmatpush.bf16.msra.mxu0 %v1437
      %1447 = vmatmul.bf16.gmra.mxu0 %v1243
      %v1448 = vpop.f32.mrf.mxu0
      %v1449 = vadd.f32 0.0, %v1448
      %v1450 = vpop.f32.mrf.mxu0
      %v1451 = vadd.f32 0.0, %v1450
      %1452 = vdwg.mxu0
      %v1455 = vunpack.c.l.b16 %v1403
      %v1456 = vunpack.c.l.b16 %v1404
      %v1457 = vpack.c.b16 %v1456, %v1455
      %1459 = vmatpush.bf16.msra.mxu0 0
      %1460 = vmatpush.bf16.msra.mxu0 0
      %1461 = vmatpush.bf16.msra.mxu0 0
      %1462 = vmatpush.bf16.msra.mxu0 0
      %1463 = vmatpush.bf16.msra.mxu0 0
      %1464 = vmatpush.bf16.msra.mxu0 0
      %1465 = vmatpush.bf16.msra.mxu0 0
      %1466 = vmatpush.bf16.msra.mxu0 %v1457
      %1467 = vmatmul.bf16.gmra.mxu0 %v1271
      %v1468 = vpop.f32.mrf.mxu0
      %v1469 = vadd.f32 0.0, %v1468
      %v1470 = vpop.f32.mrf.mxu0
      %v1471 = vadd.f32 0.0, %v1470
      %1472 = vdwg.mxu0
      %v1475 = vunpack.c.l.b16 %v1405
      %v1476 = vunpack.c.l.b16 %v1406
      %v1477 = vpack.c.b16 %v1476, %v1475
      %1479 = vmatpush.bf16.msra.mxu0 0
      %1480 = vmatpush.bf16.msra.mxu0 0
      %1481 = vmatpush.bf16.msra.mxu0 0
      %1482 = vmatpush.bf16.msra.mxu0 0
      %1483 = vmatpush.bf16.msra.mxu0 0
      %1484 = vmatpush.bf16.msra.mxu0 0
      %1485 = vmatpush.bf16.msra.mxu0 0
      %1486 = vmatpush.bf16.msra.mxu0 %v1477
      %1487 = vmatmul.bf16.gmra.mxu0 %v1299
      %v1488 = vpop.f32.mrf.mxu0
      %v1489 = vadd.f32 0.0, %v1488
      %v1490 = vpop.f32.mrf.mxu0
      %v1491 = vadd.f32 0.0, %v1490
      %1492 = vdwg.mxu0
      %v1495 = vunpack.c.l.b16 %v1407
      %v1496 = vunpack.c.l.b16 %v1408
      %v1497 = vpack.c.b16 %v1496, %v1495
      %1499 = vmatpush.bf16.msra.mxu0 0
      %1500 = vmatpush.bf16.msra.mxu0 0
      %1501 = vmatpush.bf16.msra.mxu0 0
      %1502 = vmatpush.bf16.msra.mxu0 0
      %1503 = vmatpush.bf16.msra.mxu0 0
      %1504 = vmatpush.bf16.msra.mxu0 0
      %1505 = vmatpush.bf16.msra.mxu0 0
      %1506 = vmatpush.bf16.msra.mxu0 %v1497
      %1507 = vmatmul.bf16.gmra.mxu0 %v1327
      %v1508 = vpop.f32.mrf.mxu0
      %v1509 = vadd.f32 0.0, %v1508
      %v1510 = vpop.f32.mrf.mxu0
      %v1511 = vadd.f32 0.0, %v1510
      %1512 = vdwg.mxu0
      %v1515 = vunpack.c.l.b16 %v1409
      %v1516 = vunpack.c.l.b16 %v1410
      %v1517 = vpack.c.b16 %v1516, %v1515
      %1519 = vmatpush.bf16.msra.mxu0 0
      %1520 = vmatpush.bf16.msra.mxu0 0
      %1521 = vmatpush.bf16.msra.mxu0 0
      %1522 = vmatpush.bf16.msra.mxu0 0
      %1523 = vmatpush.bf16.msra.mxu0 0
      %1524 = vmatpush.bf16.msra.mxu0 0
      %1525 = vmatpush.bf16.msra.mxu0 0
      %1526 = vmatpush.bf16.msra.mxu0 %v1517
      %1527 = vmatmul.bf16.gmra.mxu0 %v1355
      %v1528 = vpop.f32.mrf.mxu0
      %v1529 = vadd.f32 0.0, %v1528
      %v1530 = vpop.f32.mrf.mxu0
      %v1531 = vadd.f32 0.0, %v1530
      %1532 = vdwg.mxu0
      %v1535 = vunpack.c.l.b16 %v1411
      %v1536 = vunpack.c.l.b16 %v1412
      %v1537 = vpack.c.b16 %v1536, %v1535
      %1539 = vmatpush.bf16.msra.mxu0 0
      %1540 = vmatpush.bf16.msra.mxu0 0
      %1541 = vmatpush.bf16.msra.mxu0 0
      %1542 = vmatpush.bf16.msra.mxu0 0
      %1543 = vmatpush.bf16.msra.mxu0 0
      %1544 = vmatpush.bf16.msra.mxu0 0
      %1545 = vmatpush.bf16.msra.mxu0 0
      %1546 = vmatpush.bf16.msra.mxu0 %v1537
      %1547 = vmatmul.bf16.gmra.mxu0 %v1383
      %v1548 = vpop.f32.mrf.mxu0
      %v1549 = vadd.f32 0.0, %v1548
      %v1550 = vpop.f32.mrf.mxu0
      %v1551 = vadd.f32 0.0, %v1550
      %1552 = vdwg.mxu0
      %v1553 = vpack.c.bf16 %v1429, %v1429
      %v1554 = vpack.c.bf16 %v1431, %v1431
      %v1555 = vpack.c.bf16 %v1449, %v1449
      %v1556 = vpack.c.bf16 %v1451, %v1451
      %v1557 = vpack.c.bf16 %v1469, %v1469
      %v1558 = vpack.c.bf16 %v1471, %v1471
      %v1559 = vpack.c.bf16 %v1489, %v1489
      %v1560 = vpack.c.bf16 %v1491, %v1491
      %v1561 = vpack.c.bf16 %v1509, %v1509
      %v1562 = vpack.c.bf16 %v1511, %v1511
      %v1563 = vpack.c.bf16 %v1529, %v1529
      %v1564 = vpack.c.bf16 %v1531, %v1531
      %v1565 = vpack.c.bf16 %v1549, %v1549
      %v1566 = vpack.c.bf16 %v1551, %v1551
      %1567 = vrot.lane.b32.xlu0 %v1417, 32
      %v1568 = vpop.permute.xlu0 %1567
      %1569 = vrot.lane.b32.xlu0 %v1437, 32
      %v1570 = vpop.permute.xlu0 %1569
      %1571 = vrot.lane.b32.xlu0 %v1457, 32
      %v1572 = vpop.permute.xlu0 %1571
      %1573 = vrot.lane.b32.xlu0 %v1477, 32
      %v1574 = vpop.permute.xlu0 %1573
      %1575 = vrot.lane.b32.xlu0 %v1497, 32
      %v1576 = vpop.permute.xlu0 %1575
      %1577 = vrot.lane.b32.xlu0 %v1517, 32
      %v1578 = vpop.permute.xlu0 %1577
      %1579 = vrot.lane.b32.xlu0 %v1537, 32
      %v1580 = vpop.permute.xlu0 %1579
      %v1595 = vunpack.c.l.b16 %v1553
      %v1596 = vunpack.c.l.b16 %v1554
      %v1597 = vunpack.c.l.b16 %v1555
      %v1598 = vunpack.c.l.b16 %v1556
      %v1599 = vunpack.c.l.b16 %v1557
      %v1600 = vunpack.c.l.b16 %v1558
      %v1601 = vunpack.c.l.b16 %v1559
      %v1602 = vunpack.c.l.b16 %v1560
      %v1603 = vunpack.c.l.b16 %v1561
      %v1604 = vunpack.c.l.b16 %v1562
      %v1605 = vunpack.c.l.b16 %v1563
      %v1606 = vunpack.c.l.b16 %v1564
      %v1607 = vunpack.c.l.b16 %v1565
      %v1608 = vunpack.c.l.b16 %v1566
      %v1609 = vpack.c.b16 %v1596, %v1595
      %v1610 = vpack.c.b16 %v1598, %v1597
      %v1611 = vpack.c.b16 %v1600, %v1599
      %v1612 = vpack.c.b16 %v1602, %v1601
      %v1613 = vpack.c.b16 %v1604, %v1603
      %v1614 = vpack.c.b16 %v1606, %v1605
      %v1615 = vpack.c.b16 %v1608, %v1607
      %1616 = vrot.lane.b32.xlu0 %v1609, 64
      %v1617 = vpop.permute.xlu0 %1616
      %1618 = vrot.lane.b32.xlu0 %v1610, 64
      %v1619 = vpop.permute.xlu0 %1618
      %1620 = vrot.lane.b32.xlu0 %v1611, 64
      %v1621 = vpop.permute.xlu0 %1620
      %1622 = vrot.lane.b32.xlu0 %v1612, 64
      %v1623 = vpop.permute.xlu0 %1622
      %1624 = vrot.lane.b32.xlu0 %v1613, 64
      %v1625 = vpop.permute.xlu0 %1624
      %1626 = vrot.lane.b32.xlu0 %v1614, 64
      %v1627 = vpop.permute.xlu0 %1626
      %1628 = vrot.lane.b32.xlu0 %v1615, 64
      %v1629 = vpop.permute.xlu0 %1628
      %v1632 = vsel %vm684, %v1211, %v1568
      %v1635 = vsel %vm684, %v1240, %v1570
      %v1638 = vsel %vm684, %v1268, %v1572
      %v1641 = vsel %vm684, %v1296, %v1574
      %v1644 = vsel %vm684, %v1324, %v1576
      %v1647 = vsel %vm684, %v1352, %v1578
      %v1650 = vsel %vm684, %v1380, %v1580
      %vm1651 = vcmask 523264
      %v1653 = vsel %vm1651, %v1632, %v1617
      %v1655 = vsel %vm1651, %v1635, %v1619
      %v1657 = vsel %vm1651, %v1638, %v1621
      %v1659 = vsel %vm1651, %v1641, %v1623
      %v1661 = vsel %vm1651, %v1644, %v1625
      %v1663 = vsel %vm1651, %v1647, %v1627
      %v1665 = vsel %vm1651, %v1650, %v1629
      %v1666 = vld [vmem:[%s6] sm:$0xf]
      %v1667 = vld [vmem:[%s6 + $0x4] sm:$0xf]
      %v1668 = vld [vmem:[%s6 + $0x8] sm:$0xf]
      %v1669 = vld [vmem:[%s6 + $0xc] sm:$0xf]
      %v1670 = vld [vmem:[%s6 + $0x10] sm:$0xf]
      %v1671 = vld [vmem:[%s6 + $0x14] sm:$0xf]
      %v1672 = vld [vmem:[%s6 + $0x18] sm:$0xf]
      %v1673 = vld [vmem:[%s6 + $0x1c] sm:$0xf]
      %v1674 = vld [vmem:[%s6 + $0x20] sm:$0xf]
      %v1675 = vld [vmem:[%s6 + $0x24] sm:$0xf]
      %v1676 = vld [vmem:[%s6 + $0x28] sm:$0xf]
      %v1677 = vld [vmem:[%s6 + $0x2c] sm:$0xf]
      %v1678 = vld [vmem:[%s7] sm:$0x1]
      %v1680 = vperm.slane %v1678, 0
      %v1694 = vunpack.c.l.b16 %v1666
      %v1695 = vunpack.c.l.b16 %v1667
      %v1696 = vunpack.c.l.b16 %v1668
      %v1697 = vunpack.c.l.b16 %v1669
      %v1698 = vunpack.c.l.b16 %v1670
      %v1699 = vunpack.c.l.b16 %v1671
      %v1700 = vunpack.c.l.b16 %v1672
      %v1701 = vunpack.c.l.b16 %v1673
      %v1702 = vunpack.c.l.b16 %v1674
      %v1703 = vunpack.c.l.b16 %v1675
      %v1704 = vunpack.c.l.b16 %v1676
      %v1705 = vunpack.c.l.b16 %v1677
      %v1706 = vpack.c.b16 %v1695, %v1694
      %v1707 = vpack.c.b16 %v1697, %v1696
      %v1708 = vpack.c.b16 %v1699, %v1698
      %v1709 = vpack.c.b16 %v1701, %v1700
      %v1710 = vpack.c.b16 %v1703, %v1702
      %v1711 = vpack.c.b16 %v1705, %v1704
      %vm1718 = vcmask 785408
      %v1719 = vsel %vm1718, %v1653, 0
      %v1721 = vsel %vm1718, %v1655, 0
      %v1723 = vsel %vm1718, %v1657, 0
      %v1725 = vsel %vm1718, %v1659, 0
      %v1727 = vsel %vm1718, %v1661, 0
      %v1729 = vsel %vm1718, %v1663, 0
      %v1731 = vsel %vm1718, %v1665, 0
      %1733 = vmatpush.bf16.msra.mxu0 0
      %1734 = vmatpush.bf16.msra.mxu0 0
      %1735 = vmatpush.bf16.msra.mxu0 %v1711
      %1736 = vmatpush.bf16.msra.mxu0 %v1710
      %1737 = vmatpush.bf16.msra.mxu0 %v1709
      %1738 = vmatpush.bf16.msra.mxu0 %v1708
      %1739 = vmatpush.bf16.msra.mxu0 %v1707
      %1740 = vmatpush.bf16.msra.mxu0 %v1706
      %1741 = vmatmul.bf16.gmra.mxu0 %v1719
      %v1742 = vpop.f32.mrf.mxu0
      %v1743 = vadd.f32 %v1680, %v1742
      %v1744 = vpop.f32.mrf.mxu0
      %v1745 = vadd.f32 %v1680, %v1744
      %1746 = vmatmul.bf16.gmra.mxu0 %v1721
      %v1747 = vpop.f32.mrf.mxu0
      %v1748 = vadd.f32 %v1680, %v1747
      %v1749 = vpop.f32.mrf.mxu0
      %v1750 = vadd.f32 %v1680, %v1749
      %1751 = vmatmul.bf16.gmra.mxu0 %v1723
      %v1752 = vpop.f32.mrf.mxu0
      %v1753 = vadd.f32 %v1680, %v1752
      %v1754 = vpop.f32.mrf.mxu0
      %v1755 = vadd.f32 %v1680, %v1754
      %1756 = vmatmul.bf16.gmra.mxu0 %v1725
      %v1757 = vpop.f32.mrf.mxu0
      %v1758 = vadd.f32 %v1680, %v1757
      %v1759 = vpop.f32.mrf.mxu0
      %v1760 = vadd.f32 %v1680, %v1759
      %1761 = vmatmul.bf16.gmra.mxu0 %v1727
      %v1762 = vpop.f32.mrf.mxu0
      %v1763 = vadd.f32 %v1680, %v1762
      %v1764 = vpop.f32.mrf.mxu0
      %v1765 = vadd.f32 %v1680, %v1764
      %1766 = vmatmul.bf16.gmra.mxu0 %v1729
      %v1767 = vpop.f32.mrf.mxu0
      %v1768 = vadd.f32 %v1680, %v1767
      %v1769 = vpop.f32.mrf.mxu0
      %v1770 = vadd.f32 %v1680, %v1769
      %1771 = vmatmul.bf16.gmra.mxu0 %v1731
      %v1772 = vpop.f32.mrf.mxu0
      %v1773 = vadd.f32 %v1680, %v1772
      %v1774 = vpop.f32.mrf.mxu0
      %v1775 = vadd.f32 %v1680, %v1774
      %1776 = vdwg.mxu0
      %v1777 = vadd.f32 %v1743, %v613
      %v1778 = vadd.f32 %v1745, %v615
      %v1779 = vadd.f32 %v1748, %v618
      %v1780 = vadd.f32 %v1750, %v620
      %v1781 = vadd.f32 %v1753, %v623
      %v1782 = vadd.f32 %v1755, %v625
      %v1783 = vadd.f32 %v1758, %v628
      %v1784 = vadd.f32 %v1760, %v630
      %v1785 = vadd.f32 %v1763, %v633
      %v1786 = vadd.f32 %v1765, %v635
      %v1787 = vadd.f32 %v1768, %v638
      %v1788 = vadd.f32 %v1770, %v640
      %v1789 = vadd.f32 %v1773, %v643
      %v1790 = vadd.f32 %v1775, %v645
      %v1791 = vld [vmem:[%s10] sm:$0x1]
      %v1793 = vperm.slane %v1791, 0
      %v1795 = vmul.f32 %v1777, %v1793
      %v1796 = vmul.f32 %v1778, %v1793
      %v1797 = vmul.f32 %v1779, %v1793
      %v1798 = vmul.f32 %v1780, %v1793
      %v1799 = vmul.f32 %v1781, %v1793
      %v1800 = vmul.f32 %v1782, %v1793
      %v1801 = vmul.f32 %v1783, %v1793
      %v1802 = vmul.f32 %v1784, %v1793
      %v1803 = vmul.f32 %v1785, %v1793
      %v1804 = vmul.f32 %v1786, %v1793
      %v1805 = vmul.f32 %v1787, %v1793
      %v1806 = vmul.f32 %v1788, %v1793
      %v1807 = vmul.f32 %v1789, %v1793
      %v1808 = vmul.f32 %v1790, %v1793
      %v1809 = vld [vmem:[%s11] sm:$0x1]
      %v1811 = vperm.slane %v1809, 0
      %v1813 = vadd.f32 %v1795, %v1811
      %v1814 = vadd.f32 %v1796, %v1811
      %v1815 = vadd.f32 %v1797, %v1811
      %v1816 = vadd.f32 %v1798, %v1811
      %v1817 = vadd.f32 %v1799, %v1811
      %v1818 = vadd.f32 %v1800, %v1811
      %v1819 = vadd.f32 %v1801, %v1811
      %v1820 = vadd.f32 %v1802, %v1811
      %v1821 = vadd.f32 %v1803, %v1811
      %v1822 = vadd.f32 %v1804, %v1811
      %v1823 = vadd.f32 %v1805, %v1811
      %v1824 = vadd.f32 %v1806, %v1811
      %v1825 = vadd.f32 %v1807, %v1811
      %v1826 = vadd.f32 %v1808, %v1811
      %v1827 = vpack.c.bf16 %v1814, %v1813
      %v1828 = vpack.c.bf16 %v1816, %v1815
      %v1829 = vpack.c.bf16 %v1818, %v1817
      %v1830 = vpack.c.bf16 %v1820, %v1819
      %v1831 = vpack.c.bf16 %v1822, %v1821
      %v1832 = vpack.c.bf16 %v1824, %v1823
      %v1833 = vpack.c.bf16 %v1826, %v1825
      %s1834 = scalar_lea.vmem %s4, 16
      %v1835 = vld [vmem:[%s1834] sm:$0xf]
      %v1836 = vld [vmem:[%s1834 + $0x4] sm:$0xf]
      %v1837 = vld [vmem:[%s1834 + $0x8] sm:$0xf]
      %v1838 = vld [vmem:[%s1834 + $0xc] sm:$0xf]
      %v1843 = vunpack.c.l.b16 %v1835
      %v1844 = vunpack.c.l.b16 %v1836
      %v1845 = vunpack.c.l.b16 %v1837
      %v1846 = vunpack.c.l.b16 %v1838
      %v1847 = vpack.c.b16 %v1844, %v1843
      %v1848 = vpack.c.b16 %v1846, %v1845
      %v1852 = vsel %vm684, %v1827, 0
      %v1855 = vsel %vm684, %v1828, 0
      %v1858 = vsel %vm684, %v1829, 0
      %v1861 = vsel %vm684, %v1830, 0
      %v1864 = vsel %vm684, %v1831, 0
      %v1867 = vsel %vm684, %v1832, 0
      %v1870 = vsel %vm684, %v1833, 0
      %1872 = vmatpush.bf16.msra.mxu0 0
      %1873 = vmatpush.bf16.msra.mxu0 0
      %1874 = vmatpush.bf16.msra.mxu0 0
      %1875 = vmatpush.bf16.msra.mxu0 0
      %1876 = vmatpush.bf16.msra.mxu0 0
      %1877 = vmatpush.bf16.msra.mxu0 0
      %1878 = vmatpush.bf16.msra.mxu0 %v1848
      %1879 = vmatpush.bf16.msra.mxu0 %v1847
      %1880 = vmatmul.bf16.gmra.mxu0 %v1852
      %v1881 = vpop.f32.mrf.mxu0
      %v1882 = vadd.f32 0.0, %v1881
      %v1883 = vpop.f32.mrf.mxu0
      %v1884 = vadd.f32 0.0, %v1883
      %1885 = vmatmul.bf16.gmra.mxu0 %v1855
      %v1886 = vpop.f32.mrf.mxu0
      %v1887 = vadd.f32 0.0, %v1886
      %v1888 = vpop.f32.mrf.mxu0
      %v1889 = vadd.f32 0.0, %v1888
      %1890 = vmatmul.bf16.gmra.mxu0 %v1858
      %v1891 = vpop.f32.mrf.mxu0
      %v1892 = vadd.f32 0.0, %v1891
      %v1893 = vpop.f32.mrf.mxu0
      %v1894 = vadd.f32 0.0, %v1893
      %1895 = vmatmul.bf16.gmra.mxu0 %v1861
      %v1896 = vpop.f32.mrf.mxu0
      %v1897 = vadd.f32 0.0, %v1896
      %v1898 = vpop.f32.mrf.mxu0
      %v1899 = vadd.f32 0.0, %v1898
      %1900 = vmatmul.bf16.gmra.mxu0 %v1864
      %v1901 = vpop.f32.mrf.mxu0
      %v1902 = vadd.f32 0.0, %v1901
      %v1903 = vpop.f32.mrf.mxu0
      %v1904 = vadd.f32 0.0, %v1903
      %1905 = vmatmul.bf16.gmra.mxu0 %v1867
      %v1906 = vpop.f32.mrf.mxu0
      %v1907 = vadd.f32 0.0, %v1906
      %v1908 = vpop.f32.mrf.mxu0
      %v1909 = vadd.f32 0.0, %v1908
      %1910 = vmatmul.bf16.gmra.mxu0 %v1870
      %v1911 = vpop.f32.mrf.mxu0
      %v1912 = vadd.f32 0.0, %v1911
      %v1913 = vpop.f32.mrf.mxu0
      %v1914 = vadd.f32 0.0, %v1913
      %1915 = vdwg.mxu0
      %1930 = vrot.lane.b32.xlu0 %v1882, 64
      %v1931 = vpop.permute.xlu0 %1930
      %1932 = vrot.lane.b32.xlu0 %v1884, 64
      %v1933 = vpop.permute.xlu0 %1932
      %1934 = vrot.lane.b32.xlu0 %v1887, 64
      %v1935 = vpop.permute.xlu0 %1934
      %1936 = vrot.lane.b32.xlu0 %v1889, 64
      %v1937 = vpop.permute.xlu0 %1936
      %1938 = vrot.lane.b32.xlu0 %v1892, 64
      %v1939 = vpop.permute.xlu0 %1938
      %1940 = vrot.lane.b32.xlu0 %v1894, 64
      %v1941 = vpop.permute.xlu0 %1940
      %1942 = vrot.lane.b32.xlu0 %v1897, 64
      %v1943 = vpop.permute.xlu0 %1942
      %1944 = vrot.lane.b32.xlu0 %v1899, 64
      %v1945 = vpop.permute.xlu0 %1944
      %1946 = vrot.lane.b32.xlu0 %v1902, 64
      %v1947 = vpop.permute.xlu0 %1946
      %1948 = vrot.lane.b32.xlu0 %v1904, 64
      %v1949 = vpop.permute.xlu0 %1948
      %1950 = vrot.lane.b32.xlu0 %v1907, 64
      %v1951 = vpop.permute.xlu0 %1950
      %1952 = vrot.lane.b32.xlu0 %v1909, 64
      %v1953 = vpop.permute.xlu0 %1952
      %1954 = vrot.lane.b32.xlu0 %v1912, 64
      %v1955 = vpop.permute.xlu0 %1954
      %1956 = vrot.lane.b32.xlu0 %v1914, 64
      %v1957 = vpop.permute.xlu0 %1956
      %v1972 = vadd.f32 %v1907, %v1931
      %v1973 = vadd.f32 %v1909, %v1933
      %v1974 = vadd.f32 %v1912, %v1935
      %v1975 = vadd.f32 %v1914, %v1937
      %v1976 = vadd.f32 %v1882, %v1939
      %v1977 = vadd.f32 %v1884, %v1941
      %v1978 = vadd.f32 %v1887, %v1943
      %v1979 = vadd.f32 %v1889, %v1945
      %v1980 = vadd.f32 %v1892, %v1947
      %v1981 = vadd.f32 %v1894, %v1949
      %v1982 = vadd.f32 %v1897, %v1951
      %v1983 = vadd.f32 %v1899, %v1953
      %v1984 = vadd.f32 %v1902, %v1955
      %v1985 = vadd.f32 %v1904, %v1957
      %s1986 = scalar_lea.vmem %s5, 1
      %v1987 = vld [vmem:[%s1986] sm:$0x1]
      %v1989 = vperm.slane %v1987, 0
      %v1991 = vadd.f32 %v1972, %v1989
      %v1992 = vadd.f32 %v1973, %v1989
      %v1993 = vadd.f32 %v1974, %v1989
      %v1994 = vadd.f32 %v1975, %v1989
      %v1995 = vadd.f32 %v1976, %v1989
      %v1996 = vadd.f32 %v1977, %v1989
      %v1997 = vadd.f32 %v1978, %v1989
      %v1998 = vadd.f32 %v1979, %v1989
      %v1999 = vadd.f32 %v1980, %v1989
      %v2000 = vadd.f32 %v1981, %v1989
      %v2001 = vadd.f32 %v1982, %v1989
      %v2002 = vadd.f32 %v1983, %v1989
      %v2003 = vadd.f32 %v1984, %v1989
      %v2004 = vadd.f32 %v1985, %v1989
      %v2005 = vtanh.pop %v1991
      %v2006 = vtanh.pop %v1992
      %v2007 = vtanh.pop %v1993
      %v2008 = vtanh.pop %v1994
      %v2009 = vtanh.pop %v1995
      %v2010 = vtanh.pop %v1996
      %v2011 = vtanh.pop %v1997
      %v2012 = vtanh.pop %v1998
      %v2013 = vtanh.pop %v1999
      %v2014 = vtanh.pop %v2000
      %v2015 = vtanh.pop %v2001
      %v2016 = vtanh.pop %v2002
      %v2017 = vtanh.pop %v2003
      %v2018 = vtanh.pop %v2004
      %v2019 = vxor.u32 %v1991, 2147483648
      %v2020 = vxor.u32 %v1992, 2147483648
      %v2021 = vxor.u32 %v1993, 2147483648
      %v2022 = vxor.u32 %v1994, 2147483648
      %v2023 = vxor.u32 %v1995, 2147483648
      %v2024 = vxor.u32 %v1996, 2147483648
      %v2025 = vxor.u32 %v1997, 2147483648
      %v2026 = vxor.u32 %v1998, 2147483648
      %v2027 = vxor.u32 %v1999, 2147483648
      %v2028 = vxor.u32 %v2000, 2147483648
      %v2029 = vxor.u32 %v2001, 2147483648
      %v2030 = vxor.u32 %v2002, 2147483648
      %v2031 = vxor.u32 %v2003, 2147483648
      %v2032 = vxor.u32 %v2004, 2147483648
      %v2033 = vmul.f32 %v2019, 1.442695
      %v2034 = vpow.pop %v2033
      %v2035 = vmul.f32 %v2020, 1.442695
      %v2036 = vpow.pop %v2035
      %v2037 = vmul.f32 %v2021, 1.442695
      %v2038 = vpow.pop %v2037
      %v2039 = vmul.f32 %v2022, 1.442695
      %v2040 = vpow.pop %v2039
      %v2041 = vmul.f32 %v2023, 1.442695
      %v2042 = vpow.pop %v2041
      %v2043 = vmul.f32 %v2024, 1.442695
      %v2044 = vpow.pop %v2043
      %v2045 = vmul.f32 %v2025, 1.442695
      %v2046 = vpow.pop %v2045
      %v2047 = vmul.f32 %v2026, 1.442695
      %v2048 = vpow.pop %v2047
      %v2049 = vmul.f32 %v2027, 1.442695
      %v2050 = vpow.pop %v2049
      %v2051 = vmul.f32 %v2028, 1.442695
      %v2052 = vpow.pop %v2051
      %v2053 = vmul.f32 %v2029, 1.442695
      %v2054 = vpow.pop %v2053
      %v2055 = vmul.f32 %v2030, 1.442695
      %v2056 = vpow.pop %v2055
      %v2057 = vmul.f32 %v2031, 1.442695
      %v2058 = vpow.pop %v2057
      %v2059 = vmul.f32 %v2032, 1.442695
      %v2060 = vpow.pop %v2059
      %v2061 = vadd.f32 %v2034, 1.0
      %v2062 = vadd.f32 %v2036, 1.0
      %v2063 = vadd.f32 %v2038, 1.0
      %v2064 = vadd.f32 %v2040, 1.0
      %v2065 = vadd.f32 %v2042, 1.0
      %v2066 = vadd.f32 %v2044, 1.0
      %v2067 = vadd.f32 %v2046, 1.0
      %v2068 = vadd.f32 %v2048, 1.0
      %v2069 = vadd.f32 %v2050, 1.0
      %v2070 = vadd.f32 %v2052, 1.0
      %v2071 = vadd.f32 %v2054, 1.0
      %v2072 = vadd.f32 %v2056, 1.0
      %v2073 = vadd.f32 %v2058, 1.0
      %v2074 = vadd.f32 %v2060, 1.0
      %v2075 = vrcp.pop %v2061
      %v2076 = vmul.f32 %v2061, %v2075
      %v2077 = vsub.f32 1.0, %v2076
      %v2078 = vmul.f32 %v2075, %v2077
      %v2079 = vadd.f32 %v2075, %v2078
      %vm2080 = vweird.f32 %v2061
      %vm2081 = vweird.f32 %v2075
      %vm2082 = vmor %vm2080, %vm2081
      %v2083 = vsel %vm2082, %v2075, %v2079
      %v2084 = vand.u32 2147483647, %v2061
      %vm2085 = vcmp.eq.f32.partialorder %v2084, 8.507059e+37
      %v2086 = vand.u32 %v2061, 2147483648
      %v2087 = vor.u32 1.1754944e-38, %v2086
      %v2088 = vsel %vm2085, %v2087, %v2083
      %v2089 = vmul.f32 1.0, %v2088
      %v2090 = vrcp.pop %v2062
      %v2091 = vmul.f32 %v2062, %v2090
      %v2092 = vsub.f32 1.0, %v2091
      %v2093 = vmul.f32 %v2090, %v2092
      %v2094 = vadd.f32 %v2090, %v2093
      %vm2095 = vweird.f32 %v2062
      %vm2096 = vweird.f32 %v2090
      %vm2097 = vmor %vm2095, %vm2096
      %v2098 = vsel %vm2097, %v2090, %v2094
      %v2099 = vand.u32 2147483647, %v2062
      %vm2100 = vcmp.eq.f32.partialorder %v2099, 8.507059e+37
      %v2101 = vand.u32 %v2062, 2147483648
      %v2102 = vor.u32 1.1754944e-38, %v2101
      %v2103 = vsel %vm2100, %v2102, %v2098
      %v2104 = vmul.f32 1.0, %v2103
      %v2105 = vrcp.pop %v2063
      %v2106 = vmul.f32 %v2063, %v2105
      %v2107 = vsub.f32 1.0, %v2106
      %v2108 = vmul.f32 %v2105, %v2107
      %v2109 = vadd.f32 %v2105, %v2108
      %vm2110 = vweird.f32 %v2063
      %vm2111 = vweird.f32 %v2105
      %vm2112 = vmor %vm2110, %vm2111
      %v2113 = vsel %vm2112, %v2105, %v2109
      %v2114 = vand.u32 2147483647, %v2063
      %vm2115 = vcmp.eq.f32.partialorder %v2114, 8.507059e+37
      %v2116 = vand.u32 %v2063, 2147483648
      %v2117 = vor.u32 1.1754944e-38, %v2116
      %v2118 = vsel %vm2115, %v2117, %v2113
      %v2119 = vmul.f32 1.0, %v2118
      %v2120 = vrcp.pop %v2064
      %v2121 = vmul.f32 %v2064, %v2120
      %v2122 = vsub.f32 1.0, %v2121
      %v2123 = vmul.f32 %v2120, %v2122
      %v2124 = vadd.f32 %v2120, %v2123
      %vm2125 = vweird.f32 %v2064
      %vm2126 = vweird.f32 %v2120
      %vm2127 = vmor %vm2125, %vm2126
      %v2128 = vsel %vm2127, %v2120, %v2124
      %v2129 = vand.u32 2147483647, %v2064
      %vm2130 = vcmp.eq.f32.partialorder %v2129, 8.507059e+37
      %v2131 = vand.u32 %v2064, 2147483648
      %v2132 = vor.u32 1.1754944e-38, %v2131
      %v2133 = vsel %vm2130, %v2132, %v2128
      %v2134 = vmul.f32 1.0, %v2133
      %v2135 = vrcp.pop %v2065
      %v2136 = vmul.f32 %v2065, %v2135
      %v2137 = vsub.f32 1.0, %v2136
      %v2138 = vmul.f32 %v2135, %v2137
      %v2139 = vadd.f32 %v2135, %v2138
      %vm2140 = vweird.f32 %v2065
      %vm2141 = vweird.f32 %v2135
      %vm2142 = vmor %vm2140, %vm2141
      %v2143 = vsel %vm2142, %v2135, %v2139
      %v2144 = vand.u32 2147483647, %v2065
      %vm2145 = vcmp.eq.f32.partialorder %v2144, 8.507059e+37
      %v2146 = vand.u32 %v2065, 2147483648
      %v2147 = vor.u32 1.1754944e-38, %v2146
      %v2148 = vsel %vm2145, %v2147, %v2143
      %v2149 = vmul.f32 1.0, %v2148
      %v2150 = vrcp.pop %v2066
      %v2151 = vmul.f32 %v2066, %v2150
      %v2152 = vsub.f32 1.0, %v2151
      %v2153 = vmul.f32 %v2150, %v2152
      %v2154 = vadd.f32 %v2150, %v2153
      %vm2155 = vweird.f32 %v2066
      %vm2156 = vweird.f32 %v2150
      %vm2157 = vmor %vm2155, %vm2156
      %v2158 = vsel %vm2157, %v2150, %v2154
      %v2159 = vand.u32 2147483647, %v2066
      %vm2160 = vcmp.eq.f32.partialorder %v2159, 8.507059e+37
      %v2161 = vand.u32 %v2066, 2147483648
      %v2162 = vor.u32 1.1754944e-38, %v2161
      %v2163 = vsel %vm2160, %v2162, %v2158
      %v2164 = vmul.f32 1.0, %v2163
      %v2165 = vrcp.pop %v2067
      %v2166 = vmul.f32 %v2067, %v2165
      %v2167 = vsub.f32 1.0, %v2166
      %v2168 = vmul.f32 %v2165, %v2167
      %v2169 = vadd.f32 %v2165, %v2168
      %vm2170 = vweird.f32 %v2067
      %vm2171 = vweird.f32 %v2165
      %vm2172 = vmor %vm2170, %vm2171
      %v2173 = vsel %vm2172, %v2165, %v2169
      %v2174 = vand.u32 2147483647, %v2067
      %vm2175 = vcmp.eq.f32.partialorder %v2174, 8.507059e+37
      %v2176 = vand.u32 %v2067, 2147483648
      %v2177 = vor.u32 1.1754944e-38, %v2176
      %v2178 = vsel %vm2175, %v2177, %v2173
      %v2179 = vmul.f32 1.0, %v2178
      %v2180 = vrcp.pop %v2068
      %v2181 = vmul.f32 %v2068, %v2180
      %v2182 = vsub.f32 1.0, %v2181
      %v2183 = vmul.f32 %v2180, %v2182
      %v2184 = vadd.f32 %v2180, %v2183
      %vm2185 = vweird.f32 %v2068
      %vm2186 = vweird.f32 %v2180
      %vm2187 = vmor %vm2185, %vm2186
      %v2188 = vsel %vm2187, %v2180, %v2184
      %v2189 = vand.u32 2147483647, %v2068
      %vm2190 = vcmp.eq.f32.partialorder %v2189, 8.507059e+37
      %v2191 = vand.u32 %v2068, 2147483648
      %v2192 = vor.u32 1.1754944e-38, %v2191
      %v2193 = vsel %vm2190, %v2192, %v2188
      %v2194 = vmul.f32 1.0, %v2193
      %v2195 = vrcp.pop %v2069
      %v2196 = vmul.f32 %v2069, %v2195
      %v2197 = vsub.f32 1.0, %v2196
      %v2198 = vmul.f32 %v2195, %v2197
      %v2199 = vadd.f32 %v2195, %v2198
      %vm2200 = vweird.f32 %v2069
      %vm2201 = vweird.f32 %v2195
      %vm2202 = vmor %vm2200, %vm2201
      %v2203 = vsel %vm2202, %v2195, %v2199
      %v2204 = vand.u32 2147483647, %v2069
      %vm2205 = vcmp.eq.f32.partialorder %v2204, 8.507059e+37
      %v2206 = vand.u32 %v2069, 2147483648
      %v2207 = vor.u32 1.1754944e-38, %v2206
      %v2208 = vsel %vm2205, %v2207, %v2203
      %v2209 = vmul.f32 1.0, %v2208
      %v2210 = vrcp.pop %v2070
      %v2211 = vmul.f32 %v2070, %v2210
      %v2212 = vsub.f32 1.0, %v2211
      %v2213 = vmul.f32 %v2210, %v2212
      %v2214 = vadd.f32 %v2210, %v2213
      %vm2215 = vweird.f32 %v2070
      %vm2216 = vweird.f32 %v2210
      %vm2217 = vmor %vm2215, %vm2216
      %v2218 = vsel %vm2217, %v2210, %v2214
      %v2219 = vand.u32 2147483647, %v2070
      %vm2220 = vcmp.eq.f32.partialorder %v2219, 8.507059e+37
      %v2221 = vand.u32 %v2070, 2147483648
      %v2222 = vor.u32 1.1754944e-38, %v2221
      %v2223 = vsel %vm2220, %v2222, %v2218
      %v2224 = vmul.f32 1.0, %v2223
      %v2225 = vrcp.pop %v2071
      %v2226 = vmul.f32 %v2071, %v2225
      %v2227 = vsub.f32 1.0, %v2226
      %v2228 = vmul.f32 %v2225, %v2227
      %v2229 = vadd.f32 %v2225, %v2228
      %vm2230 = vweird.f32 %v2071
      %vm2231 = vweird.f32 %v2225
      %vm2232 = vmor %vm2230, %vm2231
      %v2233 = vsel %vm2232, %v2225, %v2229
      %v2234 = vand.u32 2147483647, %v2071
      %vm2235 = vcmp.eq.f32.partialorder %v2234, 8.507059e+37
      %v2236 = vand.u32 %v2071, 2147483648
      %v2237 = vor.u32 1.1754944e-38, %v2236
      %v2238 = vsel %vm2235, %v2237, %v2233
      %v2239 = vmul.f32 1.0, %v2238
      %v2240 = vrcp.pop %v2072
      %v2241 = vmul.f32 %v2072, %v2240
      %v2242 = vsub.f32 1.0, %v2241
      %v2243 = vmul.f32 %v2240, %v2242
      %v2244 = vadd.f32 %v2240, %v2243
      %vm2245 = vweird.f32 %v2072
      %vm2246 = vweird.f32 %v2240
      %vm2247 = vmor %vm2245, %vm2246
      %v2248 = vsel %vm2247, %v2240, %v2244
      %v2249 = vand.u32 2147483647, %v2072
      %vm2250 = vcmp.eq.f32.partialorder %v2249, 8.507059e+37
      %v2251 = vand.u32 %v2072, 2147483648
      %v2252 = vor.u32 1.1754944e-38, %v2251
      %v2253 = vsel %vm2250, %v2252, %v2248
      %v2254 = vmul.f32 1.0, %v2253
      %v2255 = vrcp.pop %v2073
      %v2256 = vmul.f32 %v2073, %v2255
      %v2257 = vsub.f32 1.0, %v2256
      %v2258 = vmul.f32 %v2255, %v2257
      %v2259 = vadd.f32 %v2255, %v2258
      %vm2260 = vweird.f32 %v2073
      %vm2261 = vweird.f32 %v2255
      %vm2262 = vmor %vm2260, %vm2261
      %v2263 = vsel %vm2262, %v2255, %v2259
      %v2264 = vand.u32 2147483647, %v2073
      %vm2265 = vcmp.eq.f32.partialorder %v2264, 8.507059e+37
      %v2266 = vand.u32 %v2073, 2147483648
      %v2267 = vor.u32 1.1754944e-38, %v2266
      %v2268 = vsel %vm2265, %v2267, %v2263
      %v2269 = vmul.f32 1.0, %v2268
      %v2270 = vrcp.pop %v2074
      %v2271 = vmul.f32 %v2074, %v2270
      %v2272 = vsub.f32 1.0, %v2271
      %v2273 = vmul.f32 %v2270, %v2272
      %v2274 = vadd.f32 %v2270, %v2273
      %vm2275 = vweird.f32 %v2074
      %vm2276 = vweird.f32 %v2270
      %vm2277 = vmor %vm2275, %vm2276
      %v2278 = vsel %vm2277, %v2270, %v2274
      %v2279 = vand.u32 2147483647, %v2074
      %vm2280 = vcmp.eq.f32.partialorder %v2279, 8.507059e+37
      %v2281 = vand.u32 %v2074, 2147483648
      %v2282 = vor.u32 1.1754944e-38, %v2281
      %v2283 = vsel %vm2280, %v2282, %v2278
      %v2284 = vmul.f32 1.0, %v2283
      %2299 = vrot.lane.b32.xlu0 %v2089, 96
      %v2300 = vpop.permute.xlu0 %2299
      %2301 = vrot.lane.b32.xlu0 %v2104, 96
      %v2302 = vpop.permute.xlu0 %2301
      %2303 = vrot.lane.b32.xlu0 %v2119, 96
      %v2304 = vpop.permute.xlu0 %2303
      %2305 = vrot.lane.b32.xlu0 %v2134, 96
      %v2306 = vpop.permute.xlu0 %2305
      %2307 = vrot.lane.b32.xlu0 %v2149, 96
      %v2308 = vpop.permute.xlu0 %2307
      %2309 = vrot.lane.b32.xlu0 %v2164, 96
      %v2310 = vpop.permute.xlu0 %2309
      %2311 = vrot.lane.b32.xlu0 %v2179, 96
      %v2312 = vpop.permute.xlu0 %2311
      %2313 = vrot.lane.b32.xlu0 %v2194, 96
      %v2314 = vpop.permute.xlu0 %2313
      %2315 = vrot.lane.b32.xlu0 %v2209, 96
      %v2316 = vpop.permute.xlu0 %2315
      %2317 = vrot.lane.b32.xlu0 %v2224, 96
      %v2318 = vpop.permute.xlu0 %2317
      %2319 = vrot.lane.b32.xlu0 %v2239, 96
      %v2320 = vpop.permute.xlu0 %2319
      %2321 = vrot.lane.b32.xlu0 %v2254, 96
      %v2322 = vpop.permute.xlu0 %2321
      %2323 = vrot.lane.b32.xlu0 %v2269, 96
      %v2324 = vpop.permute.xlu0 %2323
      %2325 = vrot.lane.b32.xlu0 %v2284, 96
      %v2326 = vpop.permute.xlu0 %2325
      %v2341 = vmul.f32 %v2005, %v2300
      %v2342 = vmul.f32 %v2006, %v2302
      %v2343 = vmul.f32 %v2007, %v2304
      %v2344 = vmul.f32 %v2008, %v2306
      %v2345 = vmul.f32 %v2009, %v2308
      %v2346 = vmul.f32 %v2010, %v2310
      %v2347 = vmul.f32 %v2011, %v2312
      %v2348 = vmul.f32 %v2012, %v2314
      %v2349 = vmul.f32 %v2013, %v2316
      %v2350 = vmul.f32 %v2014, %v2318
      %v2351 = vmul.f32 %v2015, %v2320
      %v2352 = vmul.f32 %v2016, %v2322
      %v2353 = vmul.f32 %v2017, %v2324
      %v2354 = vmul.f32 %v2018, %v2326
      %v2355 = vpack.c.bf16 %v2341, %v2341
      %v2356 = vpack.c.bf16 %v2342, %v2342
      %v2357 = vpack.c.bf16 %v2343, %v2343
      %v2358 = vpack.c.bf16 %v2344, %v2344
      %v2359 = vpack.c.bf16 %v2345, %v2345
      %v2360 = vpack.c.bf16 %v2346, %v2346
      %v2361 = vpack.c.bf16 %v2347, %v2347
      %v2362 = vpack.c.bf16 %v2348, %v2348
      %v2363 = vpack.c.bf16 %v2349, %v2349
      %v2364 = vpack.c.bf16 %v2350, %v2350
      %v2365 = vpack.c.bf16 %v2351, %v2351
      %v2366 = vpack.c.bf16 %v2352, %v2352
      %v2367 = vpack.c.bf16 %v2353, %v2353
      %v2368 = vpack.c.bf16 %v2354, %v2354
      %v2371 = vunpack.c.l.b16 %v2355
      %v2372 = vunpack.c.l.b16 %v2356
      %v2373 = vpack.c.b16 %v2372, %v2371
      %2375 = vmatpush.bf16.msra.mxu0 0
      %2376 = vmatpush.bf16.msra.mxu0 0
      %2377 = vmatpush.bf16.msra.mxu0 0
      %2378 = vmatpush.bf16.msra.mxu0 0
      %2379 = vmatpush.bf16.msra.mxu0 0
      %2380 = vmatpush.bf16.msra.mxu0 0
      %2381 = vmatpush.bf16.msra.mxu0 0
      %2382 = vmatpush.bf16.msra.mxu0 %v2373
      %2383 = vmatmul.bf16.gmra.mxu0 %v1215
      %v2384 = vpop.f32.mrf.mxu0
      %v2385 = vadd.f32 0.0, %v2384
      %v2386 = vpop.f32.mrf.mxu0
      %v2387 = vadd.f32 0.0, %v2386
      %2388 = vdwg.mxu0
      %v2391 = vunpack.c.l.b16 %v2357
      %v2392 = vunpack.c.l.b16 %v2358
      %v2393 = vpack.c.b16 %v2392, %v2391
      %2395 = vmatpush.bf16.msra.mxu0 0
      %2396 = vmatpush.bf16.msra.mxu0 0
      %2397 = vmatpush.bf16.msra.mxu0 0
      %2398 = vmatpush.bf16.msra.mxu0 0
      %2399 = vmatpush.bf16.msra.mxu0 0
      %2400 = vmatpush.bf16.msra.mxu0 0
      %2401 = vmatpush.bf16.msra.mxu0 0
      %2402 = vmatpush.bf16.msra.mxu0 %v2393
      %2403 = vmatmul.bf16.gmra.mxu0 %v1243
      %v2404 = vpop.f32.mrf.mxu0
      %v2405 = vadd.f32 0.0, %v2404
      %v2406 = vpop.f32.mrf.mxu0
      %v2407 = vadd.f32 0.0, %v2406
      %2408 = vdwg.mxu0
      %v2411 = vunpack.c.l.b16 %v2359
      %v2412 = vunpack.c.l.b16 %v2360
      %v2413 = vpack.c.b16 %v2412, %v2411
      %2415 = vmatpush.bf16.msra.mxu0 0
      %2416 = vmatpush.bf16.msra.mxu0 0
      %2417 = vmatpush.bf16.msra.mxu0 0
      %2418 = vmatpush.bf16.msra.mxu0 0
      %2419 = vmatpush.bf16.msra.mxu0 0
      %2420 = vmatpush.bf16.msra.mxu0 0
      %2421 = vmatpush.bf16.msra.mxu0 0
      %2422 = vmatpush.bf16.msra.mxu0 %v2413
      %2423 = vmatmul.bf16.gmra.mxu0 %v1271
      %v2424 = vpop.f32.mrf.mxu0
      %v2425 = vadd.f32 0.0, %v2424
      %v2426 = vpop.f32.mrf.mxu0
      %v2427 = vadd.f32 0.0, %v2426
      %2428 = vdwg.mxu0
      %v2431 = vunpack.c.l.b16 %v2361
      %v2432 = vunpack.c.l.b16 %v2362
      %v2433 = vpack.c.b16 %v2432, %v2431
      %2435 = vmatpush.bf16.msra.mxu0 0
      %2436 = vmatpush.bf16.msra.mxu0 0
      %2437 = vmatpush.bf16.msra.mxu0 0
      %2438 = vmatpush.bf16.msra.mxu0 0
      %2439 = vmatpush.bf16.msra.mxu0 0
      %2440 = vmatpush.bf16.msra.mxu0 0
      %2441 = vmatpush.bf16.msra.mxu0 0
      %2442 = vmatpush.bf16.msra.mxu0 %v2433
      %2443 = vmatmul.bf16.gmra.mxu0 %v1299
      %v2444 = vpop.f32.mrf.mxu0
      %v2445 = vadd.f32 0.0, %v2444
      %v2446 = vpop.f32.mrf.mxu0
      %v2447 = vadd.f32 0.0, %v2446
      %2448 = vdwg.mxu0
      %v2451 = vunpack.c.l.b16 %v2363
      %v2452 = vunpack.c.l.b16 %v2364
      %v2453 = vpack.c.b16 %v2452, %v2451
      %2455 = vmatpush.bf16.msra.mxu0 0
      %2456 = vmatpush.bf16.msra.mxu0 0
      %2457 = vmatpush.bf16.msra.mxu0 0
      %2458 = vmatpush.bf16.msra.mxu0 0
      %2459 = vmatpush.bf16.msra.mxu0 0
      %2460 = vmatpush.bf16.msra.mxu0 0
      %2461 = vmatpush.bf16.msra.mxu0 0
      %2462 = vmatpush.bf16.msra.mxu0 %v2453
      %2463 = vmatmul.bf16.gmra.mxu0 %v1327
      %v2464 = vpop.f32.mrf.mxu0
      %v2465 = vadd.f32 0.0, %v2464
      %v2466 = vpop.f32.mrf.mxu0
      %v2467 = vadd.f32 0.0, %v2466
      %2468 = vdwg.mxu0
      %v2471 = vunpack.c.l.b16 %v2365
      %v2472 = vunpack.c.l.b16 %v2366
      %v2473 = vpack.c.b16 %v2472, %v2471
      %2475 = vmatpush.bf16.msra.mxu0 0
      %2476 = vmatpush.bf16.msra.mxu0 0
      %2477 = vmatpush.bf16.msra.mxu0 0
      %2478 = vmatpush.bf16.msra.mxu0 0
      %2479 = vmatpush.bf16.msra.mxu0 0
      %2480 = vmatpush.bf16.msra.mxu0 0
      %2481 = vmatpush.bf16.msra.mxu0 0
      %2482 = vmatpush.bf16.msra.mxu0 %v2473
      %2483 = vmatmul.bf16.gmra.mxu0 %v1355
      %v2484 = vpop.f32.mrf.mxu0
      %v2485 = vadd.f32 0.0, %v2484
      %v2486 = vpop.f32.mrf.mxu0
      %v2487 = vadd.f32 0.0, %v2486
      %2488 = vdwg.mxu0
      %v2491 = vunpack.c.l.b16 %v2367
      %v2492 = vunpack.c.l.b16 %v2368
      %v2493 = vpack.c.b16 %v2492, %v2491
      %2495 = vmatpush.bf16.msra.mxu0 0
      %2496 = vmatpush.bf16.msra.mxu0 0
      %2497 = vmatpush.bf16.msra.mxu0 0
      %2498 = vmatpush.bf16.msra.mxu0 0
      %2499 = vmatpush.bf16.msra.mxu0 0
      %2500 = vmatpush.bf16.msra.mxu0 0
      %2501 = vmatpush.bf16.msra.mxu0 0
      %2502 = vmatpush.bf16.msra.mxu0 %v2493
      %2503 = vmatmul.bf16.gmra.mxu0 %v1383
      %v2504 = vpop.f32.mrf.mxu0
      %v2505 = vadd.f32 0.0, %v2504
      %v2506 = vpop.f32.mrf.mxu0
      %v2507 = vadd.f32 0.0, %v2506
      %2508 = vdwg.mxu0
      %v2509 = vpack.c.bf16 %v2385, %v2385
      %v2510 = vpack.c.bf16 %v2387, %v2387
      %v2511 = vpack.c.bf16 %v2405, %v2405
      %v2512 = vpack.c.bf16 %v2407, %v2407
      %v2513 = vpack.c.bf16 %v2425, %v2425
      %v2514 = vpack.c.bf16 %v2427, %v2427
      %v2515 = vpack.c.bf16 %v2445, %v2445
      %v2516 = vpack.c.bf16 %v2447, %v2447
      %v2517 = vpack.c.bf16 %v2465, %v2465
      %v2518 = vpack.c.bf16 %v2467, %v2467
      %v2519 = vpack.c.bf16 %v2485, %v2485
      %v2520 = vpack.c.bf16 %v2487, %v2487
      %v2521 = vpack.c.bf16 %v2505, %v2505
      %v2522 = vpack.c.bf16 %v2507, %v2507
      %v2525 = vunpack.c.l.b16 %v2509
      %v2526 = vunpack.c.l.b16 %v2510
      %v2527 = vpack.c.b16 %v2526, %v2525
      %2529 = vmatpush.bf16.msra.mxu0 0
      %2530 = vmatpush.bf16.msra.mxu0 0
      %2531 = vmatpush.bf16.msra.mxu0 0
      %2532 = vmatpush.bf16.msra.mxu0 0
      %2533 = vmatpush.bf16.msra.mxu0 0
      %2534 = vmatpush.bf16.msra.mxu0 0
      %2535 = vmatpush.bf16.msra.mxu0 0
      %2536 = vmatpush.bf16.msra.mxu0 %v2527
      %2537 = vmatmul.bf16.gmra.mxu0 %v1215
      %v2538 = vpop.f32.mrf.mxu0
      %v2539 = vadd.f32 0.0, %v2538
      %v2540 = vpop.f32.mrf.mxu0
      %v2541 = vadd.f32 0.0, %v2540
      %2542 = vdwg.mxu0
      %v2545 = vunpack.c.l.b16 %v2511
      %v2546 = vunpack.c.l.b16 %v2512
      %v2547 = vpack.c.b16 %v2546, %v2545
      %2549 = vmatpush.bf16.msra.mxu0 0
      %2550 = vmatpush.bf16.msra.mxu0 0
      %2551 = vmatpush.bf16.msra.mxu0 0
      %2552 = vmatpush.bf16.msra.mxu0 0
      %2553 = vmatpush.bf16.msra.mxu0 0
      %2554 = vmatpush.bf16.msra.mxu0 0
      %2555 = vmatpush.bf16.msra.mxu0 0
      %2556 = vmatpush.bf16.msra.mxu0 %v2547
      %2557 = vmatmul.bf16.gmra.mxu0 %v1243
      %v2558 = vpop.f32.mrf.mxu0
      %v2559 = vadd.f32 0.0, %v2558
      %v2560 = vpop.f32.mrf.mxu0
      %v2561 = vadd.f32 0.0, %v2560
      %2562 = vdwg.mxu0
      %v2565 = vunpack.c.l.b16 %v2513
      %v2566 = vunpack.c.l.b16 %v2514
      %v2567 = vpack.c.b16 %v2566, %v2565
      %2569 = vmatpush.bf16.msra.mxu0 0
      %2570 = vmatpush.bf16.msra.mxu0 0
      %2571 = vmatpush.bf16.msra.mxu0 0
      %2572 = vmatpush.bf16.msra.mxu0 0
      %2573 = vmatpush.bf16.msra.mxu0 0
      %2574 = vmatpush.bf16.msra.mxu0 0
      %2575 = vmatpush.bf16.msra.mxu0 0
      %2576 = vmatpush.bf16.msra.mxu0 %v2567
      %2577 = vmatmul.bf16.gmra.mxu0 %v1271
      %v2578 = vpop.f32.mrf.mxu0
      %v2579 = vadd.f32 0.0, %v2578
      %v2580 = vpop.f32.mrf.mxu0
      %v2581 = vadd.f32 0.0, %v2580
      %2582 = vdwg.mxu0
      %v2585 = vunpack.c.l.b16 %v2515
      %v2586 = vunpack.c.l.b16 %v2516
      %v2587 = vpack.c.b16 %v2586, %v2585
      %2589 = vmatpush.bf16.msra.mxu0 0
      %2590 = vmatpush.bf16.msra.mxu0 0
      %2591 = vmatpush.bf16.msra.mxu0 0
      %2592 = vmatpush.bf16.msra.mxu0 0
      %2593 = vmatpush.bf16.msra.mxu0 0
      %2594 = vmatpush.bf16.msra.mxu0 0
      %2595 = vmatpush.bf16.msra.mxu0 0
      %2596 = vmatpush.bf16.msra.mxu0 %v2587
      %2597 = vmatmul.bf16.gmra.mxu0 %v1299
      %v2598 = vpop.f32.mrf.mxu0
      %v2599 = vadd.f32 0.0, %v2598
      %v2600 = vpop.f32.mrf.mxu0
      %v2601 = vadd.f32 0.0, %v2600
      %2602 = vdwg.mxu0
      %v2605 = vunpack.c.l.b16 %v2517
      %v2606 = vunpack.c.l.b16 %v2518
      %v2607 = vpack.c.b16 %v2606, %v2605
      %2609 = vmatpush.bf16.msra.mxu0 0
      %2610 = vmatpush.bf16.msra.mxu0 0
      %2611 = vmatpush.bf16.msra.mxu0 0
      %2612 = vmatpush.bf16.msra.mxu0 0
      %2613 = vmatpush.bf16.msra.mxu0 0
      %2614 = vmatpush.bf16.msra.mxu0 0
      %2615 = vmatpush.bf16.msra.mxu0 0
      %2616 = vmatpush.bf16.msra.mxu0 %v2607
      %2617 = vmatmul.bf16.gmra.mxu0 %v1327
      %v2618 = vpop.f32.mrf.mxu0
      %v2619 = vadd.f32 0.0, %v2618
      %v2620 = vpop.f32.mrf.mxu0
      %v2621 = vadd.f32 0.0, %v2620
      %2622 = vdwg.mxu0
      %v2625 = vunpack.c.l.b16 %v2519
      %v2626 = vunpack.c.l.b16 %v2520
      %v2627 = vpack.c.b16 %v2626, %v2625
      %2629 = vmatpush.bf16.msra.mxu0 0
      %2630 = vmatpush.bf16.msra.mxu0 0
      %2631 = vmatpush.bf16.msra.mxu0 0
      %2632 = vmatpush.bf16.msra.mxu0 0
      %2633 = vmatpush.bf16.msra.mxu0 0
      %2634 = vmatpush.bf16.msra.mxu0 0
      %2635 = vmatpush.bf16.msra.mxu0 0
      %2636 = vmatpush.bf16.msra.mxu0 %v2627
      %2637 = vmatmul.bf16.gmra.mxu0 %v1355
      %v2638 = vpop.f32.mrf.mxu0
      %v2639 = vadd.f32 0.0, %v2638
      %v2640 = vpop.f32.mrf.mxu0
      %v2641 = vadd.f32 0.0, %v2640
      %2642 = vdwg.mxu0
      %v2645 = vunpack.c.l.b16 %v2521
      %v2646 = vunpack.c.l.b16 %v2522
      %v2647 = vpack.c.b16 %v2646, %v2645
      %2649 = vmatpush.bf16.msra.mxu0 0
      %2650 = vmatpush.bf16.msra.mxu0 0
      %2651 = vmatpush.bf16.msra.mxu0 0
      %2652 = vmatpush.bf16.msra.mxu0 0
      %2653 = vmatpush.bf16.msra.mxu0 0
      %2654 = vmatpush.bf16.msra.mxu0 0
      %2655 = vmatpush.bf16.msra.mxu0 0
      %2656 = vmatpush.bf16.msra.mxu0 %v2647
      %2657 = vmatmul.bf16.gmra.mxu0 %v1383
      %v2658 = vpop.f32.mrf.mxu0
      %v2659 = vadd.f32 0.0, %v2658
      %v2660 = vpop.f32.mrf.mxu0
      %v2661 = vadd.f32 0.0, %v2660
      %2662 = vdwg.mxu0
      %v2663 = vpack.c.bf16 %v2539, %v2539
      %v2664 = vpack.c.bf16 %v2541, %v2541
      %v2665 = vpack.c.bf16 %v2559, %v2559
      %v2666 = vpack.c.bf16 %v2561, %v2561
      %v2667 = vpack.c.bf16 %v2579, %v2579
      %v2668 = vpack.c.bf16 %v2581, %v2581
      %v2669 = vpack.c.bf16 %v2599, %v2599
      %v2670 = vpack.c.bf16 %v2601, %v2601
      %v2671 = vpack.c.bf16 %v2619, %v2619
      %v2672 = vpack.c.bf16 %v2621, %v2621
      %v2673 = vpack.c.bf16 %v2639, %v2639
      %v2674 = vpack.c.bf16 %v2641, %v2641
      %v2675 = vpack.c.bf16 %v2659, %v2659
      %v2676 = vpack.c.bf16 %v2661, %v2661
      %2677 = vrot.lane.b32.xlu0 %v2527, 32
      %v2678 = vpop.permute.xlu0 %2677
      %2679 = vrot.lane.b32.xlu0 %v2547, 32
      %v2680 = vpop.permute.xlu0 %2679
      %2681 = vrot.lane.b32.xlu0 %v2567, 32
      %v2682 = vpop.permute.xlu0 %2681
      %2683 = vrot.lane.b32.xlu0 %v2587, 32
      %v2684 = vpop.permute.xlu0 %2683
      %2685 = vrot.lane.b32.xlu0 %v2607, 32
      %v2686 = vpop.permute.xlu0 %2685
      %2687 = vrot.lane.b32.xlu0 %v2627, 32
      %v2688 = vpop.permute.xlu0 %2687
      %2689 = vrot.lane.b32.xlu0 %v2647, 32
      %v2690 = vpop.permute.xlu0 %2689
      %v2705 = vunpack.c.l.b16 %v2663
      %v2706 = vunpack.c.l.b16 %v2664
      %v2707 = vunpack.c.l.b16 %v2665
      %v2708 = vunpack.c.l.b16 %v2666
      %v2709 = vunpack.c.l.b16 %v2667
      %v2710 = vunpack.c.l.b16 %v2668
      %v2711 = vunpack.c.l.b16 %v2669
      %v2712 = vunpack.c.l.b16 %v2670
      %v2713 = vunpack.c.l.b16 %v2671
      %v2714 = vunpack.c.l.b16 %v2672
      %v2715 = vunpack.c.l.b16 %v2673
      %v2716 = vunpack.c.l.b16 %v2674
      %v2717 = vunpack.c.l.b16 %v2675
      %v2718 = vunpack.c.l.b16 %v2676
      %v2719 = vpack.c.b16 %v2706, %v2705
      %v2720 = vpack.c.b16 %v2708, %v2707
      %v2721 = vpack.c.b16 %v2710, %v2709
      %v2722 = vpack.c.b16 %v2712, %v2711
      %v2723 = vpack.c.b16 %v2714, %v2713
      %v2724 = vpack.c.b16 %v2716, %v2715
      %v2725 = vpack.c.b16 %v2718, %v2717
      %2726 = vrot.lane.b32.xlu0 %v2719, 64
      %v2727 = vpop.permute.xlu0 %2726
      %2728 = vrot.lane.b32.xlu0 %v2720, 64
      %v2729 = vpop.permute.xlu0 %2728
      %2730 = vrot.lane.b32.xlu0 %v2721, 64
      %v2731 = vpop.permute.xlu0 %2730
      %2732 = vrot.lane.b32.xlu0 %v2722, 64
      %v2733 = vpop.permute.xlu0 %2732
      %2734 = vrot.lane.b32.xlu0 %v2723, 64
      %v2735 = vpop.permute.xlu0 %2734
      %2736 = vrot.lane.b32.xlu0 %v2724, 64
      %v2737 = vpop.permute.xlu0 %2736
      %2738 = vrot.lane.b32.xlu0 %v2725, 64
      %v2739 = vpop.permute.xlu0 %2738
      %v2742 = vsel %vm684, %v2373, %v2678
      %v2745 = vsel %vm684, %v2393, %v2680
      %v2748 = vsel %vm684, %v2413, %v2682
      %v2751 = vsel %vm684, %v2433, %v2684
      %v2754 = vsel %vm684, %v2453, %v2686
      %v2757 = vsel %vm684, %v2473, %v2688
      %v2760 = vsel %vm684, %v2493, %v2690
      %v2762 = vsel %vm1651, %v2742, %v2727
      %v2764 = vsel %vm1651, %v2745, %v2729
      %v2766 = vsel %vm1651, %v2748, %v2731
      %v2768 = vsel %vm1651, %v2751, %v2733
      %v2770 = vsel %vm1651, %v2754, %v2735
      %v2772 = vsel %vm1651, %v2757, %v2737
      %v2774 = vsel %vm1651, %v2760, %v2739
      %s2775 = scalar_lea.vmem %s6, 48
      %v2776 = vld [vmem:[%s2775] sm:$0xf]
      %v2777 = vld [vmem:[%s2775 + $0x4] sm:$0xf]
      %v2778 = vld [vmem:[%s2775 + $0x8] sm:$0xf]
      %v2779 = vld [vmem:[%s2775 + $0xc] sm:$0xf]
      %v2780 = vld [vmem:[%s2775 + $0x10] sm:$0xf]
      %v2781 = vld [vmem:[%s2775 + $0x14] sm:$0xf]
      %v2782 = vld [vmem:[%s2775 + $0x18] sm:$0xf]
      %v2783 = vld [vmem:[%s2775 + $0x1c] sm:$0xf]
      %v2784 = vld [vmem:[%s2775 + $0x20] sm:$0xf]
      %v2785 = vld [vmem:[%s2775 + $0x24] sm:$0xf]
      %v2786 = vld [vmem:[%s2775 + $0x28] sm:$0xf]
      %v2787 = vld [vmem:[%s2775 + $0x2c] sm:$0xf]
      %s2788 = scalar_lea.vmem %s7, 1
      %v2789 = vld [vmem:[%s2788] sm:$0x1]
      %v2791 = vperm.slane %v2789, 0
      %v2805 = vunpack.c.l.b16 %v2776
      %v2806 = vunpack.c.l.b16 %v2777
      %v2807 = vunpack.c.l.b16 %v2778
      %v2808 = vunpack.c.l.b16 %v2779
      %v2809 = vunpack.c.l.b16 %v2780
      %v2810 = vunpack.c.l.b16 %v2781
      %v2811 = vunpack.c.l.b16 %v2782
      %v2812 = vunpack.c.l.b16 %v2783
      %v2813 = vunpack.c.l.b16 %v2784
      %v2814 = vunpack.c.l.b16 %v2785
      %v2815 = vunpack.c.l.b16 %v2786
      %v2816 = vunpack.c.l.b16 %v2787
      %v2817 = vpack.c.b16 %v2806, %v2805
      %v2818 = vpack.c.b16 %v2808, %v2807
      %v2819 = vpack.c.b16 %v2810, %v2809
      %v2820 = vpack.c.b16 %v2812, %v2811
      %v2821 = vpack.c.b16 %v2814, %v2813
      %v2822 = vpack.c.b16 %v2816, %v2815
      %v2829 = vsel %vm1718, %v2762, 0
      %v2831 = vsel %vm1718, %v2764, 0
      %v2833 = vsel %vm1718, %v2766, 0
      %v2835 = vsel %vm1718, %v2768, 0
      %v2837 = vsel %vm1718, %v2770, 0
      %v2839 = vsel %vm1718, %v2772, 0
      %v2841 = vsel %vm1718, %v2774, 0
      %2843 = vmatpush.bf16.msra.mxu0 0
      %2844 = vmatpush.bf16.msra.mxu0 0
      %2845 = vmatpush.bf16.msra.mxu0 %v2822
      %2846 = vmatpush.bf16.msra.mxu0 %v2821
      %2847 = vmatpush.bf16.msra.mxu0 %v2820
      %2848 = vmatpush.bf16.msra.mxu0 %v2819
      %2849 = vmatpush.bf16.msra.mxu0 %v2818
      %2850 = vmatpush.bf16.msra.mxu0 %v2817
      %2851 = vmatmul.bf16.gmra.mxu0 %v2829
      %v2852 = vpop.f32.mrf.mxu0
      %v2853 = vadd.f32 %v2791, %v2852
      %v2854 = vpop.f32.mrf.mxu0
      %v2855 = vadd.f32 %v2791, %v2854
      %2856 = vmatmul.bf16.gmra.mxu0 %v2831
      %v2857 = vpop.f32.mrf.mxu0
      %v2858 = vadd.f32 %v2791, %v2857
      %v2859 = vpop.f32.mrf.mxu0
      %v2860 = vadd.f32 %v2791, %v2859
      %2861 = vmatmul.bf16.gmra.mxu0 %v2833
      %v2862 = vpop.f32.mrf.mxu0
      %v2863 = vadd.f32 %v2791, %v2862
      %v2864 = vpop.f32.mrf.mxu0
      %v2865 = vadd.f32 %v2791, %v2864
      %2866 = vmatmul.bf16.gmra.mxu0 %v2835
      %v2867 = vpop.f32.mrf.mxu0
      %v2868 = vadd.f32 %v2791, %v2867
      %v2869 = vpop.f32.mrf.mxu0
      %v2870 = vadd.f32 %v2791, %v2869
      %2871 = vmatmul.bf16.gmra.mxu0 %v2837
      %v2872 = vpop.f32.mrf.mxu0
      %v2873 = vadd.f32 %v2791, %v2872
      %v2874 = vpop.f32.mrf.mxu0
      %v2875 = vadd.f32 %v2791, %v2874
      %2876 = vmatmul.bf16.gmra.mxu0 %v2839
      %v2877 = vpop.f32.mrf.mxu0
      %v2878 = vadd.f32 %v2791, %v2877
      %v2879 = vpop.f32.mrf.mxu0
      %v2880 = vadd.f32 %v2791, %v2879
      %2881 = vmatmul.bf16.gmra.mxu0 %v2841
      %v2882 = vpop.f32.mrf.mxu0
      %v2883 = vadd.f32 %v2791, %v2882
      %v2884 = vpop.f32.mrf.mxu0
      %v2885 = vadd.f32 %v2791, %v2884
      %2886 = vdwg.mxu0
      %v2887 = vadd.f32 %v1773, %v2883
      %v2888 = vadd.f32 %v1775, %v2885
      %v2889 = vadd.f32 %v2853, %v1813
      %v2890 = vadd.f32 %v2855, %v1814
      %v2891 = vadd.f32 %v2858, %v1815
      %v2892 = vadd.f32 %v2860, %v1816
      %v2893 = vadd.f32 %v2863, %v1817
      %v2894 = vadd.f32 %v2865, %v1818
      %v2895 = vadd.f32 %v2868, %v1819
      %v2896 = vadd.f32 %v2870, %v1820
      %v2897 = vadd.f32 %v2873, %v1821
      %v2898 = vadd.f32 %v2875, %v1822
      %v2899 = vadd.f32 %v2878, %v1823
      %v2900 = vadd.f32 %v2880, %v1824
      %v2901 = vadd.f32 %v2883, %v1825
      %v2902 = vadd.f32 %v2885, %v1826
      %s2903 = scalar_lea.vmem %s10, 1
      %v2904 = vld [vmem:[%s2903] sm:$0x1]
      %v2906 = vperm.slane %v2904, 0
      %v2908 = vmul.f32 %v2889, %v2906
      %v2909 = vmul.f32 %v2890, %v2906
      %v2910 = vmul.f32 %v2891, %v2906
      %v2911 = vmul.f32 %v2892, %v2906
      %v2912 = vmul.f32 %v2893, %v2906
      %v2913 = vmul.f32 %v2894, %v2906
      %v2914 = vmul.f32 %v2895, %v2906
      %v2915 = vmul.f32 %v2896, %v2906
      %v2916 = vmul.f32 %v2897, %v2906
      %v2917 = vmul.f32 %v2898, %v2906
      %v2918 = vmul.f32 %v2899, %v2906
      %v2919 = vmul.f32 %v2900, %v2906
      %v2920 = vmul.f32 %v2901, %v2906
      %v2921 = vmul.f32 %v2902, %v2906
      %s2922 = scalar_lea.vmem %s11, 1
      %v2923 = vld [vmem:[%s2922] sm:$0x1]
      %v2925 = vperm.slane %v2923, 0
      %v2927 = vadd.f32 %v2908, %v2925
      %v2928 = vadd.f32 %v2909, %v2925
      %v2929 = vadd.f32 %v2910, %v2925
      %v2930 = vadd.f32 %v2911, %v2925
      %v2931 = vadd.f32 %v2912, %v2925
      %v2932 = vadd.f32 %v2913, %v2925
      %v2933 = vadd.f32 %v2914, %v2925
      %v2934 = vadd.f32 %v2915, %v2925
      %v2935 = vadd.f32 %v2916, %v2925
      %v2936 = vadd.f32 %v2917, %v2925
      %v2937 = vadd.f32 %v2918, %v2925
      %v2938 = vadd.f32 %v2919, %v2925
      %v2939 = vadd.f32 %v2920, %v2925
      %v2940 = vadd.f32 %v2921, %v2925
      %v2941 = vpack.c.bf16 %v2928, %v2927
      %v2942 = vpack.c.bf16 %v2930, %v2929
      %v2943 = vpack.c.bf16 %v2932, %v2931
      %v2944 = vpack.c.bf16 %v2934, %v2933
      %v2945 = vpack.c.bf16 %v2936, %v2935
      %v2946 = vpack.c.bf16 %v2938, %v2937
      %v2947 = vpack.c.bf16 %v2940, %v2939
      %s2948 = scalar_lea.vmem %s4, 32
      %v2949 = vld [vmem:[%s2948] sm:$0xf]
      %v2950 = vld [vmem:[%s2948 + $0x4] sm:$0xf]
      %v2951 = vld [vmem:[%s2948 + $0x8] sm:$0xf]
      %v2952 = vld [vmem:[%s2948 + $0xc] sm:$0xf]
      %v2957 = vunpack.c.l.b16 %v2949
      %v2958 = vunpack.c.l.b16 %v2950
      %v2959 = vunpack.c.l.b16 %v2951
      %v2960 = vunpack.c.l.b16 %v2952
      %v2961 = vpack.c.b16 %v2958, %v2957
      %v2962 = vpack.c.b16 %v2960, %v2959
      %v2966 = vsel %vm684, %v2941, 0
      %v2969 = vsel %vm684, %v2942, 0
      %v2972 = vsel %vm684, %v2943, 0
      %v2975 = vsel %vm684, %v2944, 0
      %v2978 = vsel %vm684, %v2945, 0
      %v2981 = vsel %vm684, %v2946, 0
      %v2984 = vsel %vm684, %v2947, 0
      %2986 = vmatpush.bf16.msra.mxu0 0
      %2987 = vmatpush.bf16.msra.mxu0 0
      %2988 = vmatpush.bf16.msra.mxu0 0
      %2989 = vmatpush.bf16.msra.mxu0 0
      %2990 = vmatpush.bf16.msra.mxu0 0
      %2991 = vmatpush.bf16.msra.mxu0 0
      %2992 = vmatpush.bf16.msra.mxu0 %v2962
      %2993 = vmatpush.bf16.msra.mxu0 %v2961
      %2994 = vmatmul.bf16.gmra.mxu0 %v2966
      %v2995 = vpop.f32.mrf.mxu0
      %v2996 = vadd.f32 0.0, %v2995
      %v2997 = vpop.f32.mrf.mxu0
      %v2998 = vadd.f32 0.0, %v2997
      %2999 = vmatmul.bf16.gmra.mxu0 %v2969
      %v3000 = vpop.f32.mrf.mxu0
      %v3001 = vadd.f32 0.0, %v3000
      %v3002 = vpop.f32.mrf.mxu0
      %v3003 = vadd.f32 0.0, %v3002
      %3004 = vmatmul.bf16.gmra.mxu0 %v2972
      %v3005 = vpop.f32.mrf.mxu0
      %v3006 = vadd.f32 0.0, %v3005
      %v3007 = vpop.f32.mrf.mxu0
      %v3008 = vadd.f32 0.0, %v3007
      %3009 = vmatmul.bf16.gmra.mxu0 %v2975
      %v3010 = vpop.f32.mrf.mxu0
      %v3011 = vadd.f32 0.0, %v3010
      %v3012 = vpop.f32.mrf.mxu0
      %v3013 = vadd.f32 0.0, %v3012
      %3014 = vmatmul.bf16.gmra.mxu0 %v2978
      %v3015 = vpop.f32.mrf.mxu0
      %v3016 = vadd.f32 0.0, %v3015
      %v3017 = vpop.f32.mrf.mxu0
      %v3018 = vadd.f32 0.0, %v3017
      %3019 = vmatmul.bf16.gmra.mxu0 %v2981
      %v3020 = vpop.f32.mrf.mxu0
      %v3021 = vadd.f32 0.0, %v3020
      %v3022 = vpop.f32.mrf.mxu0
      %v3023 = vadd.f32 0.0, %v3022
      %3024 = vmatmul.bf16.gmra.mxu0 %v2984
      %v3025 = vpop.f32.mrf.mxu0
      %v3026 = vadd.f32 0.0, %v3025
      %v3027 = vpop.f32.mrf.mxu0
      %v3028 = vadd.f32 0.0, %v3027
      %3029 = vdwg.mxu0
      %3044 = vrot.lane.b32.xlu0 %v2996, 64
      %v3045 = vpop.permute.xlu0 %3044
      %3046 = vrot.lane.b32.xlu0 %v2998, 64
      %v3047 = vpop.permute.xlu0 %3046
      %3048 = vrot.lane.b32.xlu0 %v3001, 64
      %v3049 = vpop.permute.xlu0 %3048
      %3050 = vrot.lane.b32.xlu0 %v3003, 64
      %v3051 = vpop.permute.xlu0 %3050
      %3052 = vrot.lane.b32.xlu0 %v3006, 64
      %v3053 = vpop.permute.xlu0 %3052
      %3054 = vrot.lane.b32.xlu0 %v3008, 64
      %v3055 = vpop.permute.xlu0 %3054
      %3056 = vrot.lane.b32.xlu0 %v3011, 64
      %v3057 = vpop.permute.xlu0 %3056
      %3058 = vrot.lane.b32.xlu0 %v3013, 64
      %v3059 = vpop.permute.xlu0 %3058
      %3060 = vrot.lane.b32.xlu0 %v3016, 64
      %v3061 = vpop.permute.xlu0 %3060
      %3062 = vrot.lane.b32.xlu0 %v3018, 64
      %v3063 = vpop.permute.xlu0 %3062
      %3064 = vrot.lane.b32.xlu0 %v3021, 64
      %v3065 = vpop.permute.xlu0 %3064
      %3066 = vrot.lane.b32.xlu0 %v3023, 64
      %v3067 = vpop.permute.xlu0 %3066
      %3068 = vrot.lane.b32.xlu0 %v3026, 64
      %v3069 = vpop.permute.xlu0 %3068
      %3070 = vrot.lane.b32.xlu0 %v3028, 64
      %v3071 = vpop.permute.xlu0 %3070
      %v3086 = vadd.f32 %v3026, %v3045
      %v3087 = vadd.f32 %v3028, %v3047
      %v3088 = vadd.f32 %v2996, %v3049
      %v3089 = vadd.f32 %v2998, %v3051
      %v3090 = vadd.f32 %v3001, %v3053
      %v3091 = vadd.f32 %v3003, %v3055
      %v3092 = vadd.f32 %v3006, %v3057
      %v3093 = vadd.f32 %v3008, %v3059
      %v3094 = vadd.f32 %v3011, %v3061
      %v3095 = vadd.f32 %v3013, %v3063
      %v3096 = vadd.f32 %v3016, %v3065
      %v3097 = vadd.f32 %v3018, %v3067
      %v3098 = vadd.f32 %v3021, %v3069
      %v3099 = vadd.f32 %v3023, %v3071
      %s3100 = scalar_lea.vmem %s5, 2
      %v3101 = vld [vmem:[%s3100] sm:$0x1]
      %v3103 = vperm.slane %v3101, 0
      %v3105 = vadd.f32 %v3086, %v3103
      %v3106 = vadd.f32 %v3087, %v3103
      %v3107 = vadd.f32 %v3088, %v3103
      %v3108 = vadd.f32 %v3089, %v3103
      %v3109 = vadd.f32 %v3090, %v3103
      %v3110 = vadd.f32 %v3091, %v3103
      %v3111 = vadd.f32 %v3092, %v3103
      %v3112 = vadd.f32 %v3093, %v3103
      %v3113 = vadd.f32 %v3094, %v3103
      %v3114 = vadd.f32 %v3095, %v3103
      %v3115 = vadd.f32 %v3096, %v3103
      %v3116 = vadd.f32 %v3097, %v3103
      %v3117 = vadd.f32 %v3098, %v3103
      %v3118 = vadd.f32 %v3099, %v3103
      %v3119 = vtanh.pop %v3105
      %v3120 = vtanh.pop %v3106
      %v3121 = vtanh.pop %v3107
      %v3122 = vtanh.pop %v3108
      %v3123 = vtanh.pop %v3109
      %v3124 = vtanh.pop %v3110
      %v3125 = vtanh.pop %v3111
      %v3126 = vtanh.pop %v3112
      %v3127 = vtanh.pop %v3113
      %v3128 = vtanh.pop %v3114
      %v3129 = vtanh.pop %v3115
      %v3130 = vtanh.pop %v3116
      %v3131 = vtanh.pop %v3117
      %v3132 = vtanh.pop %v3118
      %v3133 = vxor.u32 %v3105, 2147483648
      %v3134 = vxor.u32 %v3106, 2147483648
      %v3135 = vxor.u32 %v3107, 2147483648
      %v3136 = vxor.u32 %v3108, 2147483648
      %v3137 = vxor.u32 %v3109, 2147483648
      %v3138 = vxor.u32 %v3110, 2147483648
      %v3139 = vxor.u32 %v3111, 2147483648
      %v3140 = vxor.u32 %v3112, 2147483648
      %v3141 = vxor.u32 %v3113, 2147483648
      %v3142 = vxor.u32 %v3114, 2147483648
      %v3143 = vxor.u32 %v3115, 2147483648
      %v3144 = vxor.u32 %v3116, 2147483648
      %v3145 = vxor.u32 %v3117, 2147483648
      %v3146 = vxor.u32 %v3118, 2147483648
      %v3147 = vmul.f32 %v3133, 1.442695
      %v3148 = vpow.pop %v3147
      %v3149 = vmul.f32 %v3134, 1.442695
      %v3150 = vpow.pop %v3149
      %v3151 = vmul.f32 %v3135, 1.442695
      %v3152 = vpow.pop %v3151
      %v3153 = vmul.f32 %v3136, 1.442695
      %v3154 = vpow.pop %v3153
      %v3155 = vmul.f32 %v3137, 1.442695
      %v3156 = vpow.pop %v3155
      %v3157 = vmul.f32 %v3138, 1.442695
      %v3158 = vpow.pop %v3157
      %v3159 = vmul.f32 %v3139, 1.442695
      %v3160 = vpow.pop %v3159
      %v3161 = vmul.f32 %v3140, 1.442695
      %v3162 = vpow.pop %v3161
      %v3163 = vmul.f32 %v3141, 1.442695
      %v3164 = vpow.pop %v3163
      %v3165 = vmul.f32 %v3142, 1.442695
      %v3166 = vpow.pop %v3165
      %v3167 = vmul.f32 %v3143, 1.442695
      %v3168 = vpow.pop %v3167
      %v3169 = vmul.f32 %v3144, 1.442695
      %v3170 = vpow.pop %v3169
      %v3171 = vmul.f32 %v3145, 1.442695
      %v3172 = vpow.pop %v3171
      %v3173 = vmul.f32 %v3146, 1.442695
      %v3174 = vpow.pop %v3173
      %v3175 = vadd.f32 %v3148, 1.0
      %v3176 = vadd.f32 %v3150, 1.0
      %v3177 = vadd.f32 %v3152, 1.0
      %v3178 = vadd.f32 %v3154, 1.0
      %v3179 = vadd.f32 %v3156, 1.0
      %v3180 = vadd.f32 %v3158, 1.0
      %v3181 = vadd.f32 %v3160, 1.0
      %v3182 = vadd.f32 %v3162, 1.0
      %v3183 = vadd.f32 %v3164, 1.0
      %v3184 = vadd.f32 %v3166, 1.0
      %v3185 = vadd.f32 %v3168, 1.0
      %v3186 = vadd.f32 %v3170, 1.0
      %v3187 = vadd.f32 %v3172, 1.0
      %v3188 = vadd.f32 %v3174, 1.0
      %v3189 = vrcp.pop %v3175
      %v3190 = vmul.f32 %v3175, %v3189
      %v3191 = vsub.f32 1.0, %v3190
      %v3192 = vmul.f32 %v3189, %v3191
      %v3193 = vadd.f32 %v3189, %v3192
      %vm3194 = vweird.f32 %v3175
      %vm3195 = vweird.f32 %v3189
      %vm3196 = vmor %vm3194, %vm3195
      %v3197 = vsel %vm3196, %v3189, %v3193
      %v3198 = vand.u32 2147483647, %v3175
      %vm3199 = vcmp.eq.f32.partialorder %v3198, 8.507059e+37
      %v3200 = vand.u32 %v3175, 2147483648
      %v3201 = vor.u32 1.1754944e-38, %v3200
      %v3202 = vsel %vm3199, %v3201, %v3197
      %v3203 = vmul.f32 1.0, %v3202
      %v3204 = vrcp.pop %v3176
      %v3205 = vmul.f32 %v3176, %v3204
      %v3206 = vsub.f32 1.0, %v3205
      %v3207 = vmul.f32 %v3204, %v3206
      %v3208 = vadd.f32 %v3204, %v3207
      %vm3209 = vweird.f32 %v3176
      %vm3210 = vweird.f32 %v3204
      %vm3211 = vmor %vm3209, %vm3210
      %v3212 = vsel %vm3211, %v3204, %v3208
      %v3213 = vand.u32 2147483647, %v3176
      %vm3214 = vcmp.eq.f32.partialorder %v3213, 8.507059e+37
      %v3215 = vand.u32 %v3176, 2147483648
      %v3216 = vor.u32 1.1754944e-38, %v3215
      %v3217 = vsel %vm3214, %v3216, %v3212
      %v3218 = vmul.f32 1.0, %v3217
      %v3219 = vrcp.pop %v3177
      %v3220 = vmul.f32 %v3177, %v3219
      %v3221 = vsub.f32 1.0, %v3220
      %v3222 = vmul.f32 %v3219, %v3221
      %v3223 = vadd.f32 %v3219, %v3222
      %vm3224 = vweird.f32 %v3177
      %vm3225 = vweird.f32 %v3219
      %vm3226 = vmor %vm3224, %vm3225
      %v3227 = vsel %vm3226, %v3219, %v3223
      %v3228 = vand.u32 2147483647, %v3177
      %vm3229 = vcmp.eq.f32.partialorder %v3228, 8.507059e+37
      %v3230 = vand.u32 %v3177, 2147483648
      %v3231 = vor.u32 1.1754944e-38, %v3230
      %v3232 = vsel %vm3229, %v3231, %v3227
      %v3233 = vmul.f32 1.0, %v3232
      %v3234 = vrcp.pop %v3178
      %v3235 = vmul.f32 %v3178, %v3234
      %v3236 = vsub.f32 1.0, %v3235
      %v3237 = vmul.f32 %v3234, %v3236
      %v3238 = vadd.f32 %v3234, %v3237
      %vm3239 = vweird.f32 %v3178
      %vm3240 = vweird.f32 %v3234
      %vm3241 = vmor %vm3239, %vm3240
      %v3242 = vsel %vm3241, %v3234, %v3238
      %v3243 = vand.u32 2147483647, %v3178
      %vm3244 = vcmp.eq.f32.partialorder %v3243, 8.507059e+37
      %v3245 = vand.u32 %v3178, 2147483648
      %v3246 = vor.u32 1.1754944e-38, %v3245
      %v3247 = vsel %vm3244, %v3246, %v3242
      %v3248 = vmul.f32 1.0, %v3247
      %v3249 = vrcp.pop %v3179
      %v3250 = vmul.f32 %v3179, %v3249
      %v3251 = vsub.f32 1.0, %v3250
      %v3252 = vmul.f32 %v3249, %v3251
      %v3253 = vadd.f32 %v3249, %v3252
      %vm3254 = vweird.f32 %v3179
      %vm3255 = vweird.f32 %v3249
      %vm3256 = vmor %vm3254, %vm3255
      %v3257 = vsel %vm3256, %v3249, %v3253
      %v3258 = vand.u32 2147483647, %v3179
      %vm3259 = vcmp.eq.f32.partialorder %v3258, 8.507059e+37
      %v3260 = vand.u32 %v3179, 2147483648
      %v3261 = vor.u32 1.1754944e-38, %v3260
      %v3262 = vsel %vm3259, %v3261, %v3257
      %v3263 = vmul.f32 1.0, %v3262
      %v3264 = vrcp.pop %v3180
      %v3265 = vmul.f32 %v3180, %v3264
      %v3266 = vsub.f32 1.0, %v3265
      %v3267 = vmul.f32 %v3264, %v3266
      %v3268 = vadd.f32 %v3264, %v3267
      %vm3269 = vweird.f32 %v3180
      %vm3270 = vweird.f32 %v3264
      %vm3271 = vmor %vm3269, %vm3270
      %v3272 = vsel %vm3271, %v3264, %v3268
      %v3273 = vand.u32 2147483647, %v3180
      %vm3274 = vcmp.eq.f32.partialorder %v3273, 8.507059e+37
      %v3275 = vand.u32 %v3180, 2147483648
      %v3276 = vor.u32 1.1754944e-38, %v3275
      %v3277 = vsel %vm3274, %v3276, %v3272
      %v3278 = vmul.f32 1.0, %v3277
      %v3279 = vrcp.pop %v3181
      %v3280 = vmul.f32 %v3181, %v3279
      %v3281 = vsub.f32 1.0, %v3280
      %v3282 = vmul.f32 %v3279, %v3281
      %v3283 = vadd.f32 %v3279, %v3282
      %vm3284 = vweird.f32 %v3181
      %vm3285 = vweird.f32 %v3279
      %vm3286 = vmor %vm3284, %vm3285
      %v3287 = vsel %vm3286, %v3279, %v3283
      %v3288 = vand.u32 2147483647, %v3181
      %vm3289 = vcmp.eq.f32.partialorder %v3288, 8.507059e+37
      %v3290 = vand.u32 %v3181, 2147483648
      %v3291 = vor.u32 1.1754944e-38, %v3290
      %v3292 = vsel %vm3289, %v3291, %v3287
      %v3293 = vmul.f32 1.0, %v3292
      %v3294 = vrcp.pop %v3182
      %v3295 = vmul.f32 %v3182, %v3294
      %v3296 = vsub.f32 1.0, %v3295
      %v3297 = vmul.f32 %v3294, %v3296
      %v3298 = vadd.f32 %v3294, %v3297
      %vm3299 = vweird.f32 %v3182
      %vm3300 = vweird.f32 %v3294
      %vm3301 = vmor %vm3299, %vm3300
      %v3302 = vsel %vm3301, %v3294, %v3298
      %v3303 = vand.u32 2147483647, %v3182
      %vm3304 = vcmp.eq.f32.partialorder %v3303, 8.507059e+37
      %v3305 = vand.u32 %v3182, 2147483648
      %v3306 = vor.u32 1.1754944e-38, %v3305
      %v3307 = vsel %vm3304, %v3306, %v3302
      %v3308 = vmul.f32 1.0, %v3307
      %v3309 = vrcp.pop %v3183
      %v3310 = vmul.f32 %v3183, %v3309
      %v3311 = vsub.f32 1.0, %v3310
      %v3312 = vmul.f32 %v3309, %v3311
      %v3313 = vadd.f32 %v3309, %v3312
      %vm3314 = vweird.f32 %v3183
      %vm3315 = vweird.f32 %v3309
      %vm3316 = vmor %vm3314, %vm3315
      %v3317 = vsel %vm3316, %v3309, %v3313
      %v3318 = vand.u32 2147483647, %v3183
      %vm3319 = vcmp.eq.f32.partialorder %v3318, 8.507059e+37
      %v3320 = vand.u32 %v3183, 2147483648
      %v3321 = vor.u32 1.1754944e-38, %v3320
      %v3322 = vsel %vm3319, %v3321, %v3317
      %v3323 = vmul.f32 1.0, %v3322
      %v3324 = vrcp.pop %v3184
      %v3325 = vmul.f32 %v3184, %v3324
      %v3326 = vsub.f32 1.0, %v3325
      %v3327 = vmul.f32 %v3324, %v3326
      %v3328 = vadd.f32 %v3324, %v3327
      %vm3329 = vweird.f32 %v3184
      %vm3330 = vweird.f32 %v3324
      %vm3331 = vmor %vm3329, %vm3330
      %v3332 = vsel %vm3331, %v3324, %v3328
      %v3333 = vand.u32 2147483647, %v3184
      %vm3334 = vcmp.eq.f32.partialorder %v3333, 8.507059e+37
      %v3335 = vand.u32 %v3184, 2147483648
      %v3336 = vor.u32 1.1754944e-38, %v3335
      %v3337 = vsel %vm3334, %v3336, %v3332
      %v3338 = vmul.f32 1.0, %v3337
      %v3339 = vrcp.pop %v3185
      %v3340 = vmul.f32 %v3185, %v3339
      %v3341 = vsub.f32 1.0, %v3340
      %v3342 = vmul.f32 %v3339, %v3341
      %v3343 = vadd.f32 %v3339, %v3342
      %vm3344 = vweird.f32 %v3185
      %vm3345 = vweird.f32 %v3339
      %vm3346 = vmor %vm3344, %vm3345
      %v3347 = vsel %vm3346, %v3339, %v3343
      %v3348 = vand.u32 2147483647, %v3185
      %vm3349 = vcmp.eq.f32.partialorder %v3348, 8.507059e+37
      %v3350 = vand.u32 %v3185, 2147483648
      %v3351 = vor.u32 1.1754944e-38, %v3350
      %v3352 = vsel %vm3349, %v3351, %v3347
      %v3353 = vmul.f32 1.0, %v3352
      %v3354 = vrcp.pop %v3186
      %v3355 = vmul.f32 %v3186, %v3354
      %v3356 = vsub.f32 1.0, %v3355
      %v3357 = vmul.f32 %v3354, %v3356
      %v3358 = vadd.f32 %v3354, %v3357
      %vm3359 = vweird.f32 %v3186
      %vm3360 = vweird.f32 %v3354
      %vm3361 = vmor %vm3359, %vm3360
      %v3362 = vsel %vm3361, %v3354, %v3358
      %v3363 = vand.u32 2147483647, %v3186
      %vm3364 = vcmp.eq.f32.partialorder %v3363, 8.507059e+37
      %v3365 = vand.u32 %v3186, 2147483648
      %v3366 = vor.u32 1.1754944e-38, %v3365
      %v3367 = vsel %vm3364, %v3366, %v3362
      %v3368 = vmul.f32 1.0, %v3367
      %v3369 = vrcp.pop %v3187
      %v3370 = vmul.f32 %v3187, %v3369
      %v3371 = vsub.f32 1.0, %v3370
      %v3372 = vmul.f32 %v3369, %v3371
      %v3373 = vadd.f32 %v3369, %v3372
      %vm3374 = vweird.f32 %v3187
      %vm3375 = vweird.f32 %v3369
      %vm3376 = vmor %vm3374, %vm3375
      %v3377 = vsel %vm3376, %v3369, %v3373
      %v3378 = vand.u32 2147483647, %v3187
      %vm3379 = vcmp.eq.f32.partialorder %v3378, 8.507059e+37
      %v3380 = vand.u32 %v3187, 2147483648
      %v3381 = vor.u32 1.1754944e-38, %v3380
      %v3382 = vsel %vm3379, %v3381, %v3377
      %v3383 = vmul.f32 1.0, %v3382
      %v3384 = vrcp.pop %v3188
      %v3385 = vmul.f32 %v3188, %v3384
      %v3386 = vsub.f32 1.0, %v3385
      %v3387 = vmul.f32 %v3384, %v3386
      %v3388 = vadd.f32 %v3384, %v3387
      %vm3389 = vweird.f32 %v3188
      %vm3390 = vweird.f32 %v3384
      %vm3391 = vmor %vm3389, %vm3390
      %v3392 = vsel %vm3391, %v3384, %v3388
      %v3393 = vand.u32 2147483647, %v3188
      %vm3394 = vcmp.eq.f32.partialorder %v3393, 8.507059e+37
      %v3395 = vand.u32 %v3188, 2147483648
      %v3396 = vor.u32 1.1754944e-38, %v3395
      %v3397 = vsel %vm3394, %v3396, %v3392
      %v3398 = vmul.f32 1.0, %v3397
      %3413 = vrot.lane.b32.xlu0 %v3203, 96
      %v3414 = vpop.permute.xlu0 %3413
      %3415 = vrot.lane.b32.xlu0 %v3218, 96
      %v3416 = vpop.permute.xlu0 %3415
      %3417 = vrot.lane.b32.xlu0 %v3233, 96
      %v3418 = vpop.permute.xlu0 %3417
      %3419 = vrot.lane.b32.xlu0 %v3248, 96
      %v3420 = vpop.permute.xlu0 %3419
      %3421 = vrot.lane.b32.xlu0 %v3263, 96
      %v3422 = vpop.permute.xlu0 %3421
      %3423 = vrot.lane.b32.xlu0 %v3278, 96
      %v3424 = vpop.permute.xlu0 %3423
      %3425 = vrot.lane.b32.xlu0 %v3293, 96
      %v3426 = vpop.permute.xlu0 %3425
      %3427 = vrot.lane.b32.xlu0 %v3308, 96
      %v3428 = vpop.permute.xlu0 %3427
      %3429 = vrot.lane.b32.xlu0 %v3323, 96
      %v3430 = vpop.permute.xlu0 %3429
      %3431 = vrot.lane.b32.xlu0 %v3338, 96
      %v3432 = vpop.permute.xlu0 %3431
      %3433 = vrot.lane.b32.xlu0 %v3353, 96
      %v3434 = vpop.permute.xlu0 %3433
      %3435 = vrot.lane.b32.xlu0 %v3368, 96
      %v3436 = vpop.permute.xlu0 %3435
      %3437 = vrot.lane.b32.xlu0 %v3383, 96
      %v3438 = vpop.permute.xlu0 %3437
      %3439 = vrot.lane.b32.xlu0 %v3398, 96
      %v3440 = vpop.permute.xlu0 %3439
      %v3455 = vmul.f32 %v3119, %v3414
      %v3456 = vmul.f32 %v3120, %v3416
      %v3457 = vmul.f32 %v3121, %v3418
      %v3458 = vmul.f32 %v3122, %v3420
      %v3459 = vmul.f32 %v3123, %v3422
      %v3460 = vmul.f32 %v3124, %v3424
      %v3461 = vmul.f32 %v3125, %v3426
      %v3462 = vmul.f32 %v3126, %v3428
      %v3463 = vmul.f32 %v3127, %v3430
      %v3464 = vmul.f32 %v3128, %v3432
      %v3465 = vmul.f32 %v3129, %v3434
      %v3466 = vmul.f32 %v3130, %v3436
      %v3467 = vmul.f32 %v3131, %v3438
      %v3468 = vmul.f32 %v3132, %v3440
      %v3469 = vpack.c.bf16 %v3455, %v3455
      %v3470 = vpack.c.bf16 %v3456, %v3456
      %v3471 = vpack.c.bf16 %v3457, %v3457
      %v3472 = vpack.c.bf16 %v3458, %v3458
      %v3473 = vpack.c.bf16 %v3459, %v3459
      %v3474 = vpack.c.bf16 %v3460, %v3460
      %v3475 = vpack.c.bf16 %v3461, %v3461
      %v3476 = vpack.c.bf16 %v3462, %v3462
      %v3477 = vpack.c.bf16 %v3463, %v3463
      %v3478 = vpack.c.bf16 %v3464, %v3464
      %v3479 = vpack.c.bf16 %v3465, %v3465
      %v3480 = vpack.c.bf16 %v3466, %v3466
      %v3481 = vpack.c.bf16 %v3467, %v3467
      %v3482 = vpack.c.bf16 %v3468, %v3468
      %v3485 = vunpack.c.l.b16 %v3469
      %v3486 = vunpack.c.l.b16 %v3470
      %v3487 = vpack.c.b16 %v3486, %v3485
      %3489 = vmatpush.bf16.msra.mxu0 0
      %3490 = vmatpush.bf16.msra.mxu0 0
      %3491 = vmatpush.bf16.msra.mxu0 0
      %3492 = vmatpush.bf16.msra.mxu0 0
      %3493 = vmatpush.bf16.msra.mxu0 0
      %3494 = vmatpush.bf16.msra.mxu0 0
      %3495 = vmatpush.bf16.msra.mxu0 0
      %3496 = vmatpush.bf16.msra.mxu0 %v3487
      %3497 = vmatmul.bf16.gmra.mxu0 %v1215
      %v3498 = vpop.f32.mrf.mxu0
      %v3499 = vadd.f32 0.0, %v3498
      %v3500 = vpop.f32.mrf.mxu0
      %v3501 = vadd.f32 0.0, %v3500
      %3502 = vdwg.mxu0
      %v3505 = vunpack.c.l.b16 %v3471
      %v3506 = vunpack.c.l.b16 %v3472
      %v3507 = vpack.c.b16 %v3506, %v3505
      %3509 = vmatpush.bf16.msra.mxu0 0
      %3510 = vmatpush.bf16.msra.mxu0 0
      %3511 = vmatpush.bf16.msra.mxu0 0
      %3512 = vmatpush.bf16.msra.mxu0 0
      %3513 = vmatpush.bf16.msra.mxu0 0
      %3514 = vmatpush.bf16.msra.mxu0 0
      %3515 = vmatpush.bf16.msra.mxu0 0
      %3516 = vmatpush.bf16.msra.mxu0 %v3507
      %3517 = vmatmul.bf16.gmra.mxu0 %v1243
      %v3518 = vpop.f32.mrf.mxu0
      %v3519 = vadd.f32 0.0, %v3518
      %v3520 = vpop.f32.mrf.mxu0
      %v3521 = vadd.f32 0.0, %v3520
      %3522 = vdwg.mxu0
      %v3525 = vunpack.c.l.b16 %v3473
      %v3526 = vunpack.c.l.b16 %v3474
      %v3527 = vpack.c.b16 %v3526, %v3525
      %3529 = vmatpush.bf16.msra.mxu0 0
      %3530 = vmatpush.bf16.msra.mxu0 0
      %3531 = vmatpush.bf16.msra.mxu0 0
      %3532 = vmatpush.bf16.msra.mxu0 0
      %3533 = vmatpush.bf16.msra.mxu0 0
      %3534 = vmatpush.bf16.msra.mxu0 0
      %3535 = vmatpush.bf16.msra.mxu0 0
      %3536 = vmatpush.bf16.msra.mxu0 %v3527
      %3537 = vmatmul.bf16.gmra.mxu0 %v1271
      %v3538 = vpop.f32.mrf.mxu0
      %v3539 = vadd.f32 0.0, %v3538
      %v3540 = vpop.f32.mrf.mxu0
      %v3541 = vadd.f32 0.0, %v3540
      %3542 = vdwg.mxu0
      %v3545 = vunpack.c.l.b16 %v3475
      %v3546 = vunpack.c.l.b16 %v3476
      %v3547 = vpack.c.b16 %v3546, %v3545
      %3549 = vmatpush.bf16.msra.mxu0 0
      %3550 = vmatpush.bf16.msra.mxu0 0
      %3551 = vmatpush.bf16.msra.mxu0 0
      %3552 = vmatpush.bf16.msra.mxu0 0
      %3553 = vmatpush.bf16.msra.mxu0 0
      %3554 = vmatpush.bf16.msra.mxu0 0
      %3555 = vmatpush.bf16.msra.mxu0 0
      %3556 = vmatpush.bf16.msra.mxu0 %v3547
      %3557 = vmatmul.bf16.gmra.mxu0 %v1299
      %v3558 = vpop.f32.mrf.mxu0
      %v3559 = vadd.f32 0.0, %v3558
      %v3560 = vpop.f32.mrf.mxu0
      %v3561 = vadd.f32 0.0, %v3560
      %3562 = vdwg.mxu0
      %v3565 = vunpack.c.l.b16 %v3477
      %v3566 = vunpack.c.l.b16 %v3478
      %v3567 = vpack.c.b16 %v3566, %v3565
      %3569 = vmatpush.bf16.msra.mxu0 0
      %3570 = vmatpush.bf16.msra.mxu0 0
      %3571 = vmatpush.bf16.msra.mxu0 0
      %3572 = vmatpush.bf16.msra.mxu0 0
      %3573 = vmatpush.bf16.msra.mxu0 0
      %3574 = vmatpush.bf16.msra.mxu0 0
      %3575 = vmatpush.bf16.msra.mxu0 0
      %3576 = vmatpush.bf16.msra.mxu0 %v3567
      %3577 = vmatmul.bf16.gmra.mxu0 %v1327
      %v3578 = vpop.f32.mrf.mxu0
      %v3579 = vadd.f32 0.0, %v3578
      %v3580 = vpop.f32.mrf.mxu0
      %v3581 = vadd.f32 0.0, %v3580
      %3582 = vdwg.mxu0
      %v3585 = vunpack.c.l.b16 %v3479
      %v3586 = vunpack.c.l.b16 %v3480
      %v3587 = vpack.c.b16 %v3586, %v3585
      %3589 = vmatpush.bf16.msra.mxu0 0
      %3590 = vmatpush.bf16.msra.mxu0 0
      %3591 = vmatpush.bf16.msra.mxu0 0
      %3592 = vmatpush.bf16.msra.mxu0 0
      %3593 = vmatpush.bf16.msra.mxu0 0
      %3594 = vmatpush.bf16.msra.mxu0 0
      %3595 = vmatpush.bf16.msra.mxu0 0
      %3596 = vmatpush.bf16.msra.mxu0 %v3587
      %3597 = vmatmul.bf16.gmra.mxu0 %v1355
      %v3598 = vpop.f32.mrf.mxu0
      %v3599 = vadd.f32 0.0, %v3598
      %v3600 = vpop.f32.mrf.mxu0
      %v3601 = vadd.f32 0.0, %v3600
      %3602 = vdwg.mxu0
      %v3605 = vunpack.c.l.b16 %v3481
      %v3606 = vunpack.c.l.b16 %v3482
      %v3607 = vpack.c.b16 %v3606, %v3605
      %3609 = vmatpush.bf16.msra.mxu0 0
      %3610 = vmatpush.bf16.msra.mxu0 0
      %3611 = vmatpush.bf16.msra.mxu0 0
      %3612 = vmatpush.bf16.msra.mxu0 0
      %3613 = vmatpush.bf16.msra.mxu0 0
      %3614 = vmatpush.bf16.msra.mxu0 0
      %3615 = vmatpush.bf16.msra.mxu0 0
      %3616 = vmatpush.bf16.msra.mxu0 %v3607
      %3617 = vmatmul.bf16.gmra.mxu0 %v1383
      %v3618 = vpop.f32.mrf.mxu0
      %v3619 = vadd.f32 0.0, %v3618
      %v3620 = vpop.f32.mrf.mxu0
      %v3621 = vadd.f32 0.0, %v3620
      %3622 = vdwg.mxu0
      %v3623 = vpack.c.bf16 %v3499, %v3499
      %v3624 = vpack.c.bf16 %v3501, %v3501
      %v3625 = vpack.c.bf16 %v3519, %v3519
      %v3626 = vpack.c.bf16 %v3521, %v3521
      %v3627 = vpack.c.bf16 %v3539, %v3539
      %v3628 = vpack.c.bf16 %v3541, %v3541
      %v3629 = vpack.c.bf16 %v3559, %v3559
      %v3630 = vpack.c.bf16 %v3561, %v3561
      %v3631 = vpack.c.bf16 %v3579, %v3579
      %v3632 = vpack.c.bf16 %v3581, %v3581
      %v3633 = vpack.c.bf16 %v3599, %v3599
      %v3634 = vpack.c.bf16 %v3601, %v3601
      %v3635 = vpack.c.bf16 %v3619, %v3619
      %v3636 = vpack.c.bf16 %v3621, %v3621
      %v3639 = vunpack.c.l.b16 %v3623
      %v3640 = vunpack.c.l.b16 %v3624
      %v3641 = vpack.c.b16 %v3640, %v3639
      %3643 = vmatpush.bf16.msra.mxu0 0
      %3644 = vmatpush.bf16.msra.mxu0 0
      %3645 = vmatpush.bf16.msra.mxu0 0
      %3646 = vmatpush.bf16.msra.mxu0 0
      %3647 = vmatpush.bf16.msra.mxu0 0
      %3648 = vmatpush.bf16.msra.mxu0 0
      %3649 = vmatpush.bf16.msra.mxu0 0
      %3650 = vmatpush.bf16.msra.mxu0 %v3641
      %3651 = vmatmul.bf16.gmra.mxu0 %v1215
      %v3652 = vpop.f32.mrf.mxu0
      %v3653 = vadd.f32 0.0, %v3652
      %v3654 = vpop.f32.mrf.mxu0
      %v3655 = vadd.f32 0.0, %v3654
      %3656 = vdwg.mxu0
      %v3659 = vunpack.c.l.b16 %v3625
      %v3660 = vunpack.c.l.b16 %v3626
      %v3661 = vpack.c.b16 %v3660, %v3659
      %3663 = vmatpush.bf16.msra.mxu0 0
      %3664 = vmatpush.bf16.msra.mxu0 0
      %3665 = vmatpush.bf16.msra.mxu0 0
      %3666 = vmatpush.bf16.msra.mxu0 0
      %3667 = vmatpush.bf16.msra.mxu0 0
      %3668 = vmatpush.bf16.msra.mxu0 0
      %3669 = vmatpush.bf16.msra.mxu0 0
      %3670 = vmatpush.bf16.msra.mxu0 %v3661
      %3671 = vmatmul.bf16.gmra.mxu0 %v1243
      %v3672 = vpop.f32.mrf.mxu0
      %v3673 = vadd.f32 0.0, %v3672
      %v3674 = vpop.f32.mrf.mxu0
      %v3675 = vadd.f32 0.0, %v3674
      %3676 = vdwg.mxu0
      %v3679 = vunpack.c.l.b16 %v3627
      %v3680 = vunpack.c.l.b16 %v3628
      %v3681 = vpack.c.b16 %v3680, %v3679
      %3683 = vmatpush.bf16.msra.mxu0 0
      %3684 = vmatpush.bf16.msra.mxu0 0
      %3685 = vmatpush.bf16.msra.mxu0 0
      %3686 = vmatpush.bf16.msra.mxu0 0
      %3687 = vmatpush.bf16.msra.mxu0 0
      %3688 = vmatpush.bf16.msra.mxu0 0
      %3689 = vmatpush.bf16.msra.mxu0 0
      %3690 = vmatpush.bf16.msra.mxu0 %v3681
      %3691 = vmatmul.bf16.gmra.mxu0 %v1271
      %v3692 = vpop.f32.mrf.mxu0
      %v3693 = vadd.f32 0.0, %v3692
      %v3694 = vpop.f32.mrf.mxu0
      %v3695 = vadd.f32 0.0, %v3694
      %3696 = vdwg.mxu0
      %v3699 = vunpack.c.l.b16 %v3629
      %v3700 = vunpack.c.l.b16 %v3630
      %v3701 = vpack.c.b16 %v3700, %v3699
      %3703 = vmatpush.bf16.msra.mxu0 0
      %3704 = vmatpush.bf16.msra.mxu0 0
      %3705 = vmatpush.bf16.msra.mxu0 0
      %3706 = vmatpush.bf16.msra.mxu0 0
      %3707 = vmatpush.bf16.msra.mxu0 0
      %3708 = vmatpush.bf16.msra.mxu0 0
      %3709 = vmatpush.bf16.msra.mxu0 0
      %3710 = vmatpush.bf16.msra.mxu0 %v3701
      %3711 = vmatmul.bf16.gmra.mxu0 %v1299
      %v3712 = vpop.f32.mrf.mxu0
      %v3713 = vadd.f32 0.0, %v3712
      %v3714 = vpop.f32.mrf.mxu0
      %v3715 = vadd.f32 0.0, %v3714
      %3716 = vdwg.mxu0
      %v3719 = vunpack.c.l.b16 %v3631
      %v3720 = vunpack.c.l.b16 %v3632
      %v3721 = vpack.c.b16 %v3720, %v3719
      %3723 = vmatpush.bf16.msra.mxu0 0
      %3724 = vmatpush.bf16.msra.mxu0 0
      %3725 = vmatpush.bf16.msra.mxu0 0
      %3726 = vmatpush.bf16.msra.mxu0 0
      %3727 = vmatpush.bf16.msra.mxu0 0
      %3728 = vmatpush.bf16.msra.mxu0 0
      %3729 = vmatpush.bf16.msra.mxu0 0
      %3730 = vmatpush.bf16.msra.mxu0 %v3721
      %3731 = vmatmul.bf16.gmra.mxu0 %v1327
      %v3732 = vpop.f32.mrf.mxu0
      %v3733 = vadd.f32 0.0, %v3732
      %v3734 = vpop.f32.mrf.mxu0
      %v3735 = vadd.f32 0.0, %v3734
      %3736 = vdwg.mxu0
      %v3739 = vunpack.c.l.b16 %v3633
      %v3740 = vunpack.c.l.b16 %v3634
      %v3741 = vpack.c.b16 %v3740, %v3739
      %3743 = vmatpush.bf16.msra.mxu0 0
      %3744 = vmatpush.bf16.msra.mxu0 0
      %3745 = vmatpush.bf16.msra.mxu0 0
      %3746 = vmatpush.bf16.msra.mxu0 0
      %3747 = vmatpush.bf16.msra.mxu0 0
      %3748 = vmatpush.bf16.msra.mxu0 0
      %3749 = vmatpush.bf16.msra.mxu0 0
      %3750 = vmatpush.bf16.msra.mxu0 %v3741
      %3751 = vmatmul.bf16.gmra.mxu0 %v1355
      %v3752 = vpop.f32.mrf.mxu0
      %v3753 = vadd.f32 0.0, %v3752
      %v3754 = vpop.f32.mrf.mxu0
      %v3755 = vadd.f32 0.0, %v3754
      %3756 = vdwg.mxu0
      %v3759 = vunpack.c.l.b16 %v3635
      %v3760 = vunpack.c.l.b16 %v3636
      %v3761 = vpack.c.b16 %v3760, %v3759
      %3763 = vmatpush.bf16.msra.mxu0 0
      %3764 = vmatpush.bf16.msra.mxu0 0
      %3765 = vmatpush.bf16.msra.mxu0 0
      %3766 = vmatpush.bf16.msra.mxu0 0
      %3767 = vmatpush.bf16.msra.mxu0 0
      %3768 = vmatpush.bf16.msra.mxu0 0
      %3769 = vmatpush.bf16.msra.mxu0 0
      %3770 = vmatpush.bf16.msra.mxu0 %v3761
      %3771 = vmatmul.bf16.gmra.mxu0 %v1383
      %v3772 = vpop.f32.mrf.mxu0
      %v3773 = vadd.f32 0.0, %v3772
      %v3774 = vpop.f32.mrf.mxu0
      %v3775 = vadd.f32 0.0, %v3774
      %3776 = vdwg.mxu0
      %v3777 = vpack.c.bf16 %v3653, %v3653
      %v3778 = vpack.c.bf16 %v3655, %v3655
      %v3779 = vpack.c.bf16 %v3673, %v3673
      %v3780 = vpack.c.bf16 %v3675, %v3675
      %v3781 = vpack.c.bf16 %v3693, %v3693
      %v3782 = vpack.c.bf16 %v3695, %v3695
      %v3783 = vpack.c.bf16 %v3713, %v3713
      %v3784 = vpack.c.bf16 %v3715, %v3715
      %v3785 = vpack.c.bf16 %v3733, %v3733
      %v3786 = vpack.c.bf16 %v3735, %v3735
      %v3787 = vpack.c.bf16 %v3753, %v3753
      %v3788 = vpack.c.bf16 %v3755, %v3755
      %v3789 = vpack.c.bf16 %v3773, %v3773
      %v3790 = vpack.c.bf16 %v3775, %v3775
      %3791 = vrot.lane.b32.xlu0 %v3641, 32
      %v3792 = vpop.permute.xlu0 %3791
      %3793 = vrot.lane.b32.xlu0 %v3661, 32
      %v3794 = vpop.permute.xlu0 %3793
      %3795 = vrot.lane.b32.xlu0 %v3681, 32
      %v3796 = vpop.permute.xlu0 %3795
      %3797 = vrot.lane.b32.xlu0 %v3701, 32
      %v3798 = vpop.permute.xlu0 %3797
      %3799 = vrot.lane.b32.xlu0 %v3721, 32
      %v3800 = vpop.permute.xlu0 %3799
      %3801 = vrot.lane.b32.xlu0 %v3741, 32
      %v3802 = vpop.permute.xlu0 %3801
      %3803 = vrot.lane.b32.xlu0 %v3761, 32
      %v3804 = vpop.permute.xlu0 %3803
      %v3819 = vunpack.c.l.b16 %v3777
      %v3820 = vunpack.c.l.b16 %v3778
      %v3821 = vunpack.c.l.b16 %v3779
      %v3822 = vunpack.c.l.b16 %v3780
      %v3823 = vunpack.c.l.b16 %v3781
      %v3824 = vunpack.c.l.b16 %v3782
      %v3825 = vunpack.c.l.b16 %v3783
      %v3826 = vunpack.c.l.b16 %v3784
      %v3827 = vunpack.c.l.b16 %v3785
      %v3828 = vunpack.c.l.b16 %v3786
      %v3829 = vunpack.c.l.b16 %v3787
      %v3830 = vunpack.c.l.b16 %v3788
      %v3831 = vunpack.c.l.b16 %v3789
      %v3832 = vunpack.c.l.b16 %v3790
      %v3833 = vpack.c.b16 %v3820, %v3819
      %v3834 = vpack.c.b16 %v3822, %v3821
      %v3835 = vpack.c.b16 %v3824, %v3823
      %v3836 = vpack.c.b16 %v3826, %v3825
      %v3837 = vpack.c.b16 %v3828, %v3827
      %v3838 = vpack.c.b16 %v3830, %v3829
      %v3839 = vpack.c.b16 %v3832, %v3831
      %3840 = vrot.lane.b32.xlu0 %v3833, 64
      %v3841 = vpop.permute.xlu0 %3840
      %3842 = vrot.lane.b32.xlu0 %v3834, 64
      %v3843 = vpop.permute.xlu0 %3842
      %3844 = vrot.lane.b32.xlu0 %v3835, 64
      %v3845 = vpop.permute.xlu0 %3844
      %3846 = vrot.lane.b32.xlu0 %v3836, 64
      %v3847 = vpop.permute.xlu0 %3846
      %3848 = vrot.lane.b32.xlu0 %v3837, 64
      %v3849 = vpop.permute.xlu0 %3848
      %3850 = vrot.lane.b32.xlu0 %v3838, 64
      %v3851 = vpop.permute.xlu0 %3850
      %3852 = vrot.lane.b32.xlu0 %v3839, 64
      %v3853 = vpop.permute.xlu0 %3852
      %v3856 = vsel %vm684, %v3487, %v3792
      %v3859 = vsel %vm684, %v3507, %v3794
      %v3862 = vsel %vm684, %v3527, %v3796
      %v3865 = vsel %vm684, %v3547, %v3798
      %v3868 = vsel %vm684, %v3567, %v3800
      %v3871 = vsel %vm684, %v3587, %v3802
      %v3874 = vsel %vm684, %v3607, %v3804
      %v3876 = vsel %vm1651, %v3856, %v3841
      %v3878 = vsel %vm1651, %v3859, %v3843
      %v3880 = vsel %vm1651, %v3862, %v3845
      %v3882 = vsel %vm1651, %v3865, %v3847
      %v3884 = vsel %vm1651, %v3868, %v3849
      %v3886 = vsel %vm1651, %v3871, %v3851
      %v3888 = vsel %vm1651, %v3874, %v3853
      %s3889 = scalar_lea.vmem %s6, 96
      %v3890 = vld [vmem:[%s3889] sm:$0xf]
      %v3891 = vld [vmem:[%s3889 + $0x4] sm:$0xf]
      %v3892 = vld [vmem:[%s3889 + $0x8] sm:$0xf]
      %v3893 = vld [vmem:[%s3889 + $0xc] sm:$0xf]
      %v3894 = vld [vmem:[%s3889 + $0x10] sm:$0xf]
      %v3895 = vld [vmem:[%s3889 + $0x14] sm:$0xf]
      %v3896 = vld [vmem:[%s3889 + $0x18] sm:$0xf]
      %v3897 = vld [vmem:[%s3889 + $0x1c] sm:$0xf]
      %v3898 = vld [vmem:[%s3889 + $0x20] sm:$0xf]
      %v3899 = vld [vmem:[%s3889 + $0x24] sm:$0xf]
      %v3900 = vld [vmem:[%s3889 + $0x28] sm:$0xf]
      %v3901 = vld [vmem:[%s3889 + $0x2c] sm:$0xf]
      %s3902 = scalar_lea.vmem %s7, 2
      %v3903 = vld [vmem:[%s3902] sm:$0x1]
      %v3905 = vperm.slane %v3903, 0
      %v3919 = vunpack.c.l.b16 %v3890
      %v3920 = vunpack.c.l.b16 %v3891
      %v3921 = vunpack.c.l.b16 %v3892
      %v3922 = vunpack.c.l.b16 %v3893
      %v3923 = vunpack.c.l.b16 %v3894
      %v3924 = vunpack.c.l.b16 %v3895
      %v3925 = vunpack.c.l.b16 %v3896
      %v3926 = vunpack.c.l.b16 %v3897
      %v3927 = vunpack.c.l.b16 %v3898
      %v3928 = vunpack.c.l.b16 %v3899
      %v3929 = vunpack.c.l.b16 %v3900
      %v3930 = vunpack.c.l.b16 %v3901
      %v3931 = vpack.c.b16 %v3920, %v3919
      %v3932 = vpack.c.b16 %v3922, %v3921
      %v3933 = vpack.c.b16 %v3924, %v3923
      %v3934 = vpack.c.b16 %v3926, %v3925
      %v3935 = vpack.c.b16 %v3928, %v3927
      %v3936 = vpack.c.b16 %v3930, %v3929
      %v3943 = vsel %vm1718, %v3876, 0
      %v3945 = vsel %vm1718, %v3878, 0
      %v3947 = vsel %vm1718, %v3880, 0
      %v3949 = vsel %vm1718, %v3882, 0
      %v3951 = vsel %vm1718, %v3884, 0
      %v3953 = vsel %vm1718, %v3886, 0
      %v3955 = vsel %vm1718, %v3888, 0
      %3957 = vmatpush.bf16.msra.mxu0 0
      %3958 = vmatpush.bf16.msra.mxu0 0
      %3959 = vmatpush.bf16.msra.mxu0 %v3936
      %3960 = vmatpush.bf16.msra.mxu0 %v3935
      %3961 = vmatpush.bf16.msra.mxu0 %v3934
      %3962 = vmatpush.bf16.msra.mxu0 %v3933
      %3963 = vmatpush.bf16.msra.mxu0 %v3932
      %3964 = vmatpush.bf16.msra.mxu0 %v3931
      %3965 = vmatmul.bf16.gmra.mxu0 %v3943
      %v3966 = vpop.f32.mrf.mxu0
      %v3967 = vadd.f32 %v3905, %v3966
      %v3968 = vpop.f32.mrf.mxu0
      %v3969 = vadd.f32 %v3905, %v3968
      %3970 = vmatmul.bf16.gmra.mxu0 %v3945
      %v3971 = vpop.f32.mrf.mxu0
      %v3972 = vadd.f32 %v3905, %v3971
      %v3973 = vpop.f32.mrf.mxu0
      %v3974 = vadd.f32 %v3905, %v3973
      %3975 = vmatmul.bf16.gmra.mxu0 %v3947
      %v3976 = vpop.f32.mrf.mxu0
      %v3977 = vadd.f32 %v3905, %v3976
      %v3978 = vpop.f32.mrf.mxu0
      %v3979 = vadd.f32 %v3905, %v3978
      %3980 = vmatmul.bf16.gmra.mxu0 %v3949
      %v3981 = vpop.f32.mrf.mxu0
      %v3982 = vadd.f32 %v3905, %v3981
      %v3983 = vpop.f32.mrf.mxu0
      %v3984 = vadd.f32 %v3905, %v3983
      %3985 = vmatmul.bf16.gmra.mxu0 %v3951
      %v3986 = vpop.f32.mrf.mxu0
      %v3987 = vadd.f32 %v3905, %v3986
      %v3988 = vpop.f32.mrf.mxu0
      %v3989 = vadd.f32 %v3905, %v3988
      %3990 = vmatmul.bf16.gmra.mxu0 %v3953
      %v3991 = vpop.f32.mrf.mxu0
      %v3992 = vadd.f32 %v3905, %v3991
      %v3993 = vpop.f32.mrf.mxu0
      %v3994 = vadd.f32 %v3905, %v3993
      %3995 = vmatmul.bf16.gmra.mxu0 %v3955
      %v3996 = vpop.f32.mrf.mxu0
      %v3997 = vadd.f32 %v3905, %v3996
      %v3998 = vpop.f32.mrf.mxu0
      %v3999 = vadd.f32 %v3905, %v3998
      %4000 = vdwg.mxu0
      %v4001 = vadd.f32 %v2887, %v3997
      %v4002 = vadd.f32 %v2888, %v3999
      %v4003 = vadd.f32 %v3967, %v2927
      %v4004 = vadd.f32 %v3969, %v2928
      %v4005 = vadd.f32 %v3972, %v2929
      %v4006 = vadd.f32 %v3974, %v2930
      %v4007 = vadd.f32 %v3977, %v2931
      %v4008 = vadd.f32 %v3979, %v2932
      %v4009 = vadd.f32 %v3982, %v2933
      %v4010 = vadd.f32 %v3984, %v2934
      %v4011 = vadd.f32 %v3987, %v2935
      %v4012 = vadd.f32 %v3989, %v2936
      %v4013 = vadd.f32 %v3992, %v2937
      %v4014 = vadd.f32 %v3994, %v2938
      %v4015 = vadd.f32 %v3997, %v2939
      %v4016 = vadd.f32 %v3999, %v2940
      %s4017 = scalar_lea.vmem %s10, 2
      %v4018 = vld [vmem:[%s4017] sm:$0x1]
      %v4020 = vperm.slane %v4018, 0
      %v4022 = vmul.f32 %v4003, %v4020
      %v4023 = vmul.f32 %v4004, %v4020
      %v4024 = vmul.f32 %v4005, %v4020
      %v4025 = vmul.f32 %v4006, %v4020
      %v4026 = vmul.f32 %v4007, %v4020
      %v4027 = vmul.f32 %v4008, %v4020
      %v4028 = vmul.f32 %v4009, %v4020
      %v4029 = vmul.f32 %v4010, %v4020
      %v4030 = vmul.f32 %v4011, %v4020
      %v4031 = vmul.f32 %v4012, %v4020
      %v4032 = vmul.f32 %v4013, %v4020
      %v4033 = vmul.f32 %v4014, %v4020
      %v4034 = vmul.f32 %v4015, %v4020
      %v4035 = vmul.f32 %v4016, %v4020
      %s4036 = scalar_lea.vmem %s11, 2
      %v4037 = vld [vmem:[%s4036] sm:$0x1]
      %v4039 = vperm.slane %v4037, 0
      %v4041 = vadd.f32 %v4022, %v4039
      %v4042 = vadd.f32 %v4023, %v4039
      %v4043 = vadd.f32 %v4024, %v4039
      %v4044 = vadd.f32 %v4025, %v4039
      %v4045 = vadd.f32 %v4026, %v4039
      %v4046 = vadd.f32 %v4027, %v4039
      %v4047 = vadd.f32 %v4028, %v4039
      %v4048 = vadd.f32 %v4029, %v4039
      %v4049 = vadd.f32 %v4030, %v4039
      %v4050 = vadd.f32 %v4031, %v4039
      %v4051 = vadd.f32 %v4032, %v4039
      %v4052 = vadd.f32 %v4033, %v4039
      %v4053 = vadd.f32 %v4034, %v4039
      %v4054 = vadd.f32 %v4035, %v4039
      %v4055 = vpack.c.bf16 %v4042, %v4041
      %v4056 = vpack.c.bf16 %v4044, %v4043
      %v4057 = vpack.c.bf16 %v4046, %v4045
      %v4058 = vpack.c.bf16 %v4048, %v4047
      %v4059 = vpack.c.bf16 %v4050, %v4049
      %v4060 = vpack.c.bf16 %v4052, %v4051
      %v4061 = vpack.c.bf16 %v4054, %v4053
      %s4062 = scalar_lea.vmem %s4, 48
      %v4063 = vld [vmem:[%s4062] sm:$0xf]
      %v4064 = vld [vmem:[%s4062 + $0x4] sm:$0xf]
      %v4065 = vld [vmem:[%s4062 + $0x8] sm:$0xf]
      %v4066 = vld [vmem:[%s4062 + $0xc] sm:$0xf]
      %v4071 = vunpack.c.l.b16 %v4063
      %v4072 = vunpack.c.l.b16 %v4064
      %v4073 = vunpack.c.l.b16 %v4065
      %v4074 = vunpack.c.l.b16 %v4066
      %v4075 = vpack.c.b16 %v4072, %v4071
      %v4076 = vpack.c.b16 %v4074, %v4073
      %v4080 = vsel %vm684, %v4055, 0
      %v4083 = vsel %vm684, %v4056, 0
      %v4086 = vsel %vm684, %v4057, 0
      %v4089 = vsel %vm684, %v4058, 0
      %v4092 = vsel %vm684, %v4059, 0
      %v4095 = vsel %vm684, %v4060, 0
      %v4098 = vsel %vm684, %v4061, 0
      %4100 = vmatpush.bf16.msra.mxu0 0
      %4101 = vmatpush.bf16.msra.mxu0 0
      %4102 = vmatpush.bf16.msra.mxu0 0
      %4103 = vmatpush.bf16.msra.mxu0 0
      %4104 = vmatpush.bf16.msra.mxu0 0
      %4105 = vmatpush.bf16.msra.mxu0 0
      %4106 = vmatpush.bf16.msra.mxu0 %v4076
      %4107 = vmatpush.bf16.msra.mxu0 %v4075
      %4108 = vmatmul.bf16.gmra.mxu0 %v4080
      %v4109 = vpop.f32.mrf.mxu0
      %v4110 = vpop.f32.mrf.mxu0
      %4111 = vmatmul.bf16.gmra.mxu0 %v4083
      %v4112 = vpop.f32.mrf.mxu0
      %v4113 = vpop.f32.mrf.mxu0
      %4114 = vmatmul.bf16.gmra.mxu0 %v4086
      %v4115 = vpop.f32.mrf.mxu0
      %v4116 = vpop.f32.mrf.mxu0
      %4117 = vmatmul.bf16.gmra.mxu0 %v4089
      %v4118 = vpop.f32.mrf.mxu0
      %v4119 = vpop.f32.mrf.mxu0
      %4120 = vmatmul.bf16.gmra.mxu0 %v4092
      %v4121 = vpop.f32.mrf.mxu0
      %v4122 = vadd.f32 0.0, %v4121
      %v4123 = vpop.f32.mrf.mxu0
      %v4124 = vadd.f32 0.0, %v4123
      %4125 = vmatmul.bf16.gmra.mxu0 %v4095
      %v4126 = vpop.f32.mrf.mxu0
      %v4127 = vpop.f32.mrf.mxu0
      %4128 = vmatmul.bf16.gmra.mxu0 %v4098
      %v4129 = vpop.f32.mrf.mxu0
      %v4130 = vadd.f32 0.0, %v4129
      %v4131 = vpop.f32.mrf.mxu0
      %v4132 = vadd.f32 0.0, %v4131
      %4133 = vdwg.mxu0
      %4136 = vrot.lane.b32.xlu0 %v4130, 64
      %v4137 = vpop.permute.xlu0 %4136
      %4138 = vrot.lane.b32.xlu0 %v4132, 64
      %v4139 = vpop.permute.xlu0 %4138
      %v4142 = vadd.f32 %v4122, %v4137
      %v4143 = vadd.f32 %v4124, %v4139
      %s4144 = scalar_lea.vmem %s5, 3
      %v4145 = vld [vmem:[%s4144] sm:$0x1]
      %v4147 = vperm.slane %v4145, 0
      %v4149 = vadd.f32 %v4142, %v4147
      %v4150 = vadd.f32 %v4143, %v4147
      %v4151 = vtanh.pop %v4149
      %v4152 = vtanh.pop %v4150
      %v4153 = vxor.u32 %v4149, 2147483648
      %v4154 = vxor.u32 %v4150, 2147483648
      %v4155 = vmul.f32 %v4153, 1.442695
      %v4156 = vpow.pop %v4155
      %v4157 = vmul.f32 %v4154, 1.442695
      %v4158 = vpow.pop %v4157
      %v4159 = vadd.f32 %v4156, 1.0
      %v4160 = vadd.f32 %v4158, 1.0
      %v4161 = vrcp.pop %v4159
      %v4162 = vmul.f32 %v4159, %v4161
      %v4163 = vsub.f32 1.0, %v4162
      %v4164 = vmul.f32 %v4161, %v4163
      %v4165 = vadd.f32 %v4161, %v4164
      %vm4166 = vweird.f32 %v4159
      %vm4167 = vweird.f32 %v4161
      %vm4168 = vmor %vm4166, %vm4167
      %v4169 = vsel %vm4168, %v4161, %v4165
      %v4170 = vand.u32 2147483647, %v4159
      %vm4171 = vcmp.eq.f32.partialorder %v4170, 8.507059e+37
      %v4172 = vand.u32 %v4159, 2147483648
      %v4173 = vor.u32 1.1754944e-38, %v4172
      %v4174 = vsel %vm4171, %v4173, %v4169
      %v4175 = vmul.f32 1.0, %v4174
      %v4176 = vrcp.pop %v4160
      %v4177 = vmul.f32 %v4160, %v4176
      %v4178 = vsub.f32 1.0, %v4177
      %v4179 = vmul.f32 %v4176, %v4178
      %v4180 = vadd.f32 %v4176, %v4179
      %vm4181 = vweird.f32 %v4160
      %vm4182 = vweird.f32 %v4176
      %vm4183 = vmor %vm4181, %vm4182
      %v4184 = vsel %vm4183, %v4176, %v4180
      %v4185 = vand.u32 2147483647, %v4160
      %vm4186 = vcmp.eq.f32.partialorder %v4185, 8.507059e+37
      %v4187 = vand.u32 %v4160, 2147483648
      %v4188 = vor.u32 1.1754944e-38, %v4187
      %v4189 = vsel %vm4186, %v4188, %v4184
      %v4190 = vmul.f32 1.0, %v4189
      %4193 = vrot.lane.b32.xlu0 %v4175, 96
      %v4194 = vpop.permute.xlu0 %4193
      %4195 = vrot.lane.b32.xlu0 %v4190, 96
      %v4196 = vpop.permute.xlu0 %4195
      %v4199 = vmul.f32 %v4151, %v4194
      %v4200 = vmul.f32 %v4152, %v4196
      %v4201 = vpack.c.bf16 %v4199, %v4199
      %v4202 = vpack.c.bf16 %v4200, %v4200
      %v4203 = vld [vmem:[%s8] sm:$0xf]
      %v4204 = vld [vmem:[%s8 + $0x4] sm:$0xf]
      %v4205 = vld [vmem:[%s8 + $0x8] sm:$0xf]
      %v4206 = vld [vmem:[%s8 + $0xc] sm:$0xf]
      %v4207 = vld [vmem:[%s9] sm:$0x1]
      %v4209 = vperm.slane %v4207, 0
      %v4213 = vunpack.c.l.b16 %v4201
      %v4214 = vunpack.c.l.b16 %v4202
      %v4215 = vpack.c.b16 %v4214, %v4213
      %v4220 = vunpack.c.l.b16 %v4203
      %v4221 = vunpack.c.l.b16 %v4204
      %v4222 = vunpack.c.l.b16 %v4205
      %v4223 = vunpack.c.l.b16 %v4206
      %v4224 = vpack.c.b16 %v4221, %v4220
      %v4225 = vpack.c.b16 %v4223, %v4222
      %v4229 = vsel %vm684, %v4215, 0
      %4231 = vmatpush.bf16.msra.mxu0 0
      %4232 = vmatpush.bf16.msra.mxu0 0
      %4233 = vmatpush.bf16.msra.mxu0 0
      %4234 = vmatpush.bf16.msra.mxu0 0
      %4235 = vmatpush.bf16.msra.mxu0 0
      %4236 = vmatpush.bf16.msra.mxu0 0
      %4237 = vmatpush.bf16.msra.mxu0 %v4225
      %4238 = vmatpush.bf16.msra.mxu0 %v4224
      %4239 = vmatmul.bf16.gmra.mxu0 %v4229
      %v4240 = vpop.f32.mrf.mxu0
      %v4241 = vadd.f32 %v4209, %v4240
      %v4242 = vpop.f32.mrf.mxu0
      %v4243 = vadd.f32 %v4209, %v4242
      %4244 = vdwg.mxu0
      %4247 = vrot.lane.b32.xlu0 %v4241, 32
      %v4248 = vpop.permute.xlu0 %4247
      %4249 = vrot.lane.b32.xlu0 %v4243, 32
      %v4250 = vpop.permute.xlu0 %4249
      %v4253 = vadd.f32 %v4001, %v4248
      %v4254 = vadd.f32 %v4002, %v4250
      %v4255 = vmax.f32 %v4253, 0.0
      %v4256 = vmax.f32 %v4254, 0.0
      %v4257 = vpack.c.bf16 %v4256, %v4255
      %v4258 = vld [vmem:[%s12] sm:$0xf]
      %v4259 = vld [vmem:[%s12 + $0x4] sm:$0xf]
      %v4260 = vld [vmem:[%s12 + $0x8] sm:$0xf]
      %v4261 = vld [vmem:[%s12 + $0xc] sm:$0xf]
      %v4262 = vld [vmem:[%s12 + $0x10] sm:$0xf]
      %v4263 = vld [vmem:[%s12 + $0x14] sm:$0xf]
      %v4264 = vld [vmem:[%s12 + $0x18] sm:$0xf]
      %v4265 = vld [vmem:[%s12 + $0x1c] sm:$0xf]
      %v4266 = vld [vmem:[%s13] sm:$0x1]
      %v4268 = vperm.slane %v4266, 0
      %4271 = vrot.lane.b32.xlu0 %v4257, 96
      %v4272 = vpop.permute.xlu0 %4271
      %v4281 = vunpack.c.l.b16 %v4258
      %v4282 = vunpack.c.l.b16 %v4259
      %v4283 = vunpack.c.l.b16 %v4260
      %v4284 = vunpack.c.l.b16 %v4261
      %v4285 = vunpack.c.l.b16 %v4262
      %v4286 = vunpack.c.l.b16 %v4263
      %v4287 = vunpack.c.l.b16 %v4264
      %v4288 = vunpack.c.l.b16 %v4265
      %v4289 = vpack.c.b16 %v4282, %v4281
      %v4290 = vpack.c.b16 %v4284, %v4283
      %v4291 = vpack.c.b16 %v4286, %v4285
      %v4292 = vpack.c.b16 %v4288, %v4287
      %v4298 = vsel %vm1651, %v4272, 0
      %4300 = vmatpush.bf16.msra.mxu0 0
      %4301 = vmatpush.bf16.msra.mxu0 0
      %4302 = vmatpush.bf16.msra.mxu0 0
      %4303 = vmatpush.bf16.msra.mxu0 0
      %4304 = vmatpush.bf16.msra.mxu0 %v4292
      %4305 = vmatpush.bf16.msra.mxu0 %v4291
      %4306 = vmatpush.bf16.msra.mxu0 %v4290
      %4307 = vmatpush.bf16.msra.mxu0 %v4289
      %4308 = vmatmul.bf16.gmra.mxu0 %v4298
      %v4309 = vpop.f32.mrf.mxu0
      %v4310 = vadd.f32 %v4268, %v4309
      %v4311 = vpop.f32.mrf.mxu0
      %v4312 = vadd.f32 %v4268, %v4311
      %4313 = vdwg.mxu0
      %v4314 = vmax.f32 %v4310, 0.0
      %v4315 = vmax.f32 %v4312, 0.0
      %v4316 = vpack.c.bf16 %v4315, %v4314
      %v4317 = vld [vmem:[%s14] sm:$0xf]
      %v4318 = vld [vmem:[%s14 + $0x4] sm:$0xf]
      %v4319 = vld [vmem:[%s14 + $0x8] sm:$0xf]
      %v4320 = vld [vmem:[%s14 + $0xc] sm:$0xf]
      %v4321 = vld [vmem:[%s14 + $0x10] sm:$0xf]
      %v4322 = vld [vmem:[%s14 + $0x14] sm:$0xf]
      %v4323 = vld [vmem:[%s14 + $0x18] sm:$0xf]
      %v4324 = vld [vmem:[%s14 + $0x1c] sm:$0xf]
      %v4325 = vld [vmem:[%s14 + $0x20] sm:$0xf]
      %v4326 = vld [vmem:[%s14 + $0x24] sm:$0xf]
      %v4327 = vld [vmem:[%s14 + $0x28] sm:$0xf]
      %v4328 = vld [vmem:[%s14 + $0x2c] sm:$0xf]
      %v4329 = vld [vmem:[%s14 + $0x30] sm:$0xf]
      %v4330 = vld [vmem:[%s14 + $0x34] sm:$0xf]
      %v4331 = vld [vmem:[%s14 + $0x38] sm:$0xf]
      %v4332 = vld [vmem:[%s14 + $0x3c] sm:$0xf]
      %v4333 = vld [vmem:[%s15] sm:$0x1]
      %v4335 = vperm.slane %v4333, 0
      %v4353 = vunpack.c.l.b16 %v4317
      %v4354 = vunpack.c.l.b16 %v4318
      %v4355 = vunpack.c.l.b16 %v4319
      %v4356 = vunpack.c.l.b16 %v4320
      %v4357 = vunpack.c.l.b16 %v4321
      %v4358 = vunpack.c.l.b16 %v4322
      %v4359 = vunpack.c.l.b16 %v4323
      %v4360 = vunpack.c.l.b16 %v4324
      %v4361 = vunpack.c.l.b16 %v4325
      %v4362 = vunpack.c.l.b16 %v4326
      %v4363 = vunpack.c.l.b16 %v4327
      %v4364 = vunpack.c.l.b16 %v4328
      %v4365 = vunpack.c.l.b16 %v4329
      %v4366 = vunpack.c.l.b16 %v4330
      %v4367 = vunpack.c.l.b16 %v4331
      %v4368 = vunpack.c.l.b16 %v4332
      %v4369 = vpack.c.b16 %v4354, %v4353
      %v4370 = vpack.c.b16 %v4356, %v4355
      %v4371 = vpack.c.b16 %v4358, %v4357
      %v4372 = vpack.c.b16 %v4360, %v4359
      %v4373 = vpack.c.b16 %v4362, %v4361
      %v4374 = vpack.c.b16 %v4364, %v4363
      %v4375 = vpack.c.b16 %v4366, %v4365
      %v4376 = vpack.c.b16 %v4368, %v4367
      %4385 = vmatpush.bf16.msra.mxu0 %v4376
      %4386 = vmatpush.bf16.msra.mxu0 %v4375
      %4387 = vmatpush.bf16.msra.mxu0 %v4374
      %4388 = vmatpush.bf16.msra.mxu0 %v4373
      %4389 = vmatpush.bf16.msra.mxu0 %v4372
      %4390 = vmatpush.bf16.msra.mxu0 %v4371
      %4391 = vmatpush.bf16.msra.mxu0 %v4370
      %4392 = vmatpush.bf16.msra.mxu0 %v4369
      %4393 = vmatmul.bf16.gmra.mxu0 %v4316
      %v4394 = vpop.f32.mrf.mxu0
      %v4395 = vadd.f32 %v4335, %v4394
      %v4396 = vpop.f32.mrf.mxu0
      %v4397 = vadd.f32 %v4335, %v4396
      %4398 = vdwg.mxu0
      %4399 = vst [vmem:[%s521] sm:$0xff] %v4395
      %4400 = vst [vmem:[%s521 + $0x8] sm:$0xff] %v4397
      %p4401 = scmp.lt.s32.totalorder %s27, 1
      %s4402 = scalar_select %p4401, %s27, 1
      %s4403 = smul.addr %s4402, 2
      %s4404 = smul.addr %s4403, 8
      %s4405 = scalar_lea.vmem %s16, %s4404
      // Predicated region
      $region85: #{gwnet_forward.1} parent=83 // pred_check
        %p4406 = pneg %p386
      $region86: #{gwnet_forward.1} parent=83 // pred_check_branch
        %4408 = sbr.rel (%p4406) target = $region88
      $region87: #{gwnet_forward.1} parent=83 // pred_region
        _
      $region88: #{gwnet_forward.1} parent=83 // pred_fallthru
        _
    $region84: #{gwnet_forward.1} parent=5 // pred_fallthru
      _
    %p4409 = scmp.le.s32.totalorder 2, %s22
    // Predicated region
    $region89: #{gwnet_forward.1} parent=5 // pred_check
      %p4410 = pneg %p4409
    $region90: #{gwnet_forward.1} parent=5 // pred_check_branch
      %4412 = sbr.rel (%p4410) target = $region92
    $region91: #{gwnet_forward.1} parent=5 // pred_region
      %s4413 = ssub.s32 %s22, 2
      // Predicated region
      $region93: #{gwnet_forward.1} parent=91 // pred_check
        %p4414 = pneg %p392
      $region94: #{gwnet_forward.1} parent=91 // pred_check_branch
        %4416 = sbr.rel (%p4414) target = $region96
      $region95: #{gwnet_forward.1} parent=91 // pred_region
        %p4417 = scmp.lt.s32.totalorder %s28, 1
        %s4418 = scalar_select %p4417, %s28, 1
        %s4419 = smul.addr %s4418, 2
        %s4420 = smul.addr %s4419, 8
        %s4421 = scalar_lea.vmem %s16, %s4420
      $region96: #{gwnet_forward.1} parent=91 // pred_fallthru
        _
    $region92: #{gwnet_forward.1} parent=5 // pred_fallthru
      _
  $region6: #{gwnet_forward.1} parent=0 // loop_footer
    %s26 = sadd.s32 1, %s22
  $region7: #{gwnet_forward.1} parent=0 // loop_footer_branch
    %21 = sbr.rel target = $region3
  $region8: #{gwnet_forward.1} parent=0 // loop_exit
    _

</llo_original>
